<compile_context>
chip_gen: v6e
topology: v6e:2x2x1
jax: 0.10.0
libtpu: 0.0.40
codegen_flags: <defaults>
</compile_context>

<pallas_src>
import functools

import jax
import jax.numpy as jnp
from jax.experimental import pallas as pl
from jax.experimental.pallas import tpu as pltpu


def _round_up(v, m):
    return ((v + m - 1) // m) * m


def _pad2(a, rows, cols):
    a = a.reshape((-1, a.shape[-1])) if a.ndim == 1 else a
    pr, pc = rows - a.shape[0], cols - a.shape[1]
    if pr == 0 and pc == 0:
        return a
    return jnp.pad(a, ((0, pr), (0, pc)))


def _make_ae_kernel(num_hidden_layers):
    # Linear layers per encoder/decoder: input + num_hidden_layers + output.
    n_lin = 2 * (num_hidden_layers + 2)
    n_param_refs = 2 * n_lin  # (W, b) per linear

    def kernel(*refs):
        x_ref = refs[0]
        param_refs = refs[1:1 + n_param_refs]
        latent_ref = refs[1 + n_param_refs]
        recon_ref = refs[2 + n_param_refs]

        compute_dtype = x_ref.dtype
        idx = [0]

        def linear(h, relu):
            w_ref = param_refs[idx[0]]
            b_ref = param_refs[idx[0] + 1]
            idx[0] += 2
            # Native-dtype operands straight into the MXU, f32 accumulation.
            acc = jnp.dot(h, w_ref[...], preferred_element_type=jnp.float32)
            acc = acc + b_ref[...].astype(jnp.float32)
            if relu:
                acc = jnp.maximum(acc, 0.0)
            return acc.astype(compute_dtype)

        h = x_ref[...]

        # ----- encoder -----
        for _ in range(num_hidden_layers + 1):
            h = linear(h, relu=True)
        h = linear(h, relu=False)
        latent_ref[...] = h.astype(latent_ref.dtype)

        # ----- decoder -----
        for _ in range(num_hidden_layers + 1):
            h = linear(h, relu=True)
        h = linear(h, relu=False)
        recon_ref[...] = h.astype(recon_ref.dtype)

    return kernel


def ae_forward(x, params, *, in_dim, hidden_dim, num_hidden_layers, latent_dim,
               block_batch=None, vmem_limit_bytes=None):
    """params: flat list [W0, b0, W1, b1, ...] in application order
    (encoder linears then decoder), W as (fan_in, fan_out), b as (1, fan_out)."""
    B = x.shape[0]
    assert x.shape == (B, in_dim)

    compute_dtype = params[0].dtype
    itemsize = jnp.dtype(compute_dtype).itemsize

    # Lane-dense (multiple-of-128) padded feature dims.
    in_p = _round_up(in_dim, 128)
    hid_p = _round_up(hidden_dim, 128)
    lat_p = _round_up(latent_dim, 128)

    dims = ([(in_p, hid_p)] + [(hid_p, hid_p)] * num_hidden_layers + [(hid_p, lat_p)]
            + [(lat_p, hid_p)] + [(hid_p, hid_p)] * num_hidden_layers + [(hid_p, in_p)])
    assert len(params) == 2 * len(dims)

    padded_params = []
    for (fi, fo), (w, b) in zip(dims, zip(params[0::2], params[1::2])):
        padded_params.append(_pad2(w.astype(compute_dtype), fi, fo))
        padded_params.append(_pad2(b.astype(compute_dtype), 1, fo))

    param_bytes = sum(int(p.size) * itemsize for p in padded_params)

    # ---- pick block_batch (multiple of 8, fits VMEM budget, >=2 grid steps) ----
    row_bytes = (in_p + lat_p + in_p) * itemsize           # x + latent + recon rows
    act_bytes = 6 * max(in_p, hid_p, lat_p) * 4            # live f32 intermediates/row
    vmem_budget = 40 * 2**20                               # safe for v7x 64 MiB/TC
    if block_batch is None:
        cap = max(8, _round_up(pl.cdiv(B, 2), 8)) if B > 8 else 8
        block_batch = 8
        for cand in (1024, 512, 256, 128, 64, 32, 16, 8):
            if cand > cap:
                continue
            if 2 * param_bytes + cand * (2 * row_bytes + act_bytes) <= vmem_budget:
                block_batch = cand
                break
    block_batch = max(8, _round_up(block_batch, 8))

    Bp = _round_up(B, block_batch)
    xp = x.astype(compute_dtype)
    if Bp != B or in_p != in_dim:
        xp = jnp.pad(xp, ((0, Bp - B), (0, in_p - in_dim)))
    grid = (Bp // block_batch,)

    if vmem_limit_bytes is None:
        est = 2 * param_bytes + block_batch * (2 * row_bytes + act_bytes) + 8 * 2**20
        vmem_limit_bytes = int(min(max(est, 32 * 2**20), 64 * 2**20))

    kernel = _make_ae_kernel(num_hidden_layers)

    x_spec = pl.BlockSpec((block_batch, in_p), lambda i: (i, 0))
    latent_spec = pl.BlockSpec((block_batch, lat_p), lambda i: (i, 0))
    recon_spec = pl.BlockSpec((block_batch, in_p), lambda i: (i, 0))
    out_shape = (
        jax.ShapeDtypeStruct((Bp, lat_p), compute_dtype),
        jax.ShapeDtypeStruct((Bp, in_p), compute_dtype),
    )

    def build(single_buffer_params):
        if single_buffer_params:
            # Constant block index across the grid -> keep a single resident
            # copy of every weight/bias in VMEM (no double buffering).
            param_specs = [
                pl.BlockSpec(p.shape, lambda i: (0, 0),
                             pipeline_mode=pl.Buffered(1))
                for p in padded_params
            ]
        else:
            param_specs = [pl.BlockSpec(p.shape, lambda i: (0, 0))
                           for p in padded_params]
        return pl.pallas_call(
            kernel,
            out_shape=out_shape,
            grid=grid,
            in_specs=[x_spec] + param_specs,
            out_specs=(latent_spec, recon_spec),
            compiler_params=pltpu.CompilerParams(
                dimension_semantics=("parallel",),
                vmem_limit_bytes=vmem_limit_bytes,
            ),
        )

    try:
        latent_full, recon_full = jax.block_until_ready(
            build(single_buffer_params=True)(xp, *padded_params))
    except Exception:
        # pl.Buffered(1) not supported by this jax/libtpu -> default buffering.
        latent_full, recon_full = build(single_buffer_params=False)(
            xp, *padded_params)

    return latent_full[:B, :latent_dim], recon_full[:B, :in_dim]


def init_ae_params(key, in_dim, hidden_dim, num_hidden_layers, latent_dim,
                   dtype=jnp.float32):
    """Mimics torch.nn.Linear default init (U(-k, k), k = 1/sqrt(fan_in)).
    Returns flat [W, b, ...] in application order (encoder then decoder)."""
    dims = [(in_dim, hidden_dim)]
    dims += [(hidden_dim, hidden_dim)] * num_hidden_layers
    dims += [(hidden_dim, latent_dim), (latent_dim, hidden_dim)]
    dims += [(hidden_dim, hidden_dim)] * num_hidden_layers
    dims += [(hidden_dim, in_dim)]

    params = []
    for fan_in, fan_out in dims:
        key, kw, kb = jax.random.split(key, 3)
        bound = 1.0 / jnp.sqrt(fan_in)
        w = jax.random.uniform(kw, (fan_in, fan_out), dtype, -bound, bound)
        b = jax.random.uniform(kb, (1, fan_out), dtype, -bound, bound)
        params += [w, b]
    return params


def ae_forward_ref(x, params, num_hidden_layers):
    """Pure-JAX reference for correctness checking."""
    idx = 0

    def linear(h, relu):
        nonlocal idx
        w, b = params[idx], params[idx + 1]
        idx += 2
        out = h @ w + b
        return jnp.maximum(out, 0.0) if relu else out

    h = x
    for _ in range(num_hidden_layers + 1):
        h = linear(h, True)
    latent = linear(h, False)
    h = latent
    for _ in range(num_hidden_layers + 1):
        h = linear(h, True)
    recon = linear(h, False)
    return latent, recon


if __name__ == "__main__":
    # Small, lane-exercising shapes (in/latent get padded to 128 internally;
    # batch tiles into a 2-step pipelined grid).
    batch = 128
    in_dim = 64
    hidden_dim = 128
    num_hidden_layers = 2
    latent_dim = 32

    key = jax.random.PRNGKey(0)
    key, kx = jax.random.split(key)
    x = jax.random.normal(kx, (batch, in_dim), jnp.float32)

    params = init_ae_params(key, in_dim, hidden_dim, num_hidden_layers,
                            latent_dim, dtype=jnp.float32)

    fwd = functools.partial(
        ae_forward,
        in_dim=in_dim, hidden_dim=hidden_dim,
        num_hidden_layers=num_hidden_layers, latent_dim=latent_dim)

    # ---- f32 path ----
    latent, recon = jax.block_until_ready(fwd(x, params))
    latent_ref, recon_ref = ae_forward_ref(x, params, num_hidden_layers)
    assert latent.shape == (batch, latent_dim)
    assert recon.shape == (batch, in_dim)
    assert jnp.allclose(latent, latent_ref, atol=1e-4, rtol=1e-4)
    assert jnp.allclose(recon, recon_ref, atol=1e-4, rtol=1e-4)

    # ---- bf16 path: narrow operands into the MXU, f32 accumulation ----
    params16 = [p.astype(jnp.bfloat16) for p in params]
    latent16, recon16 = jax.block_until_ready(
        fwd(x.astype(jnp.bfloat16), params16))
    assert latent16.dtype == jnp.bfloat16 and recon16.dtype == jnp.bfloat16
    l16 = latent16.astype(jnp.float32)
    r16 = recon16.astype(jnp.float32)
    assert bool(jnp.all(jnp.isfinite(l16))) and bool(jnp.all(jnp.isfinite(r16)))
    assert jnp.allclose(l16, latent_ref, atol=0.25, rtol=0.25)
    assert jnp.allclose(r16, recon_ref, atol=0.25, rtol=0.25)

    print("KERNEL_OK")
</pallas_src>

<mosaic_0001>
module attributes {stable_mosaic.version = 11 : i64} {
  func.func @kernel(%arg0: i32, %arg1: memref<64x128xf32, #tpu.memory_space<vmem>>, %arg2: memref<128x128xf32, #tpu.memory_space<vmem>>, %arg3: memref<1x128xf32, #tpu.memory_space<vmem>>, %arg4: memref<128x128xf32, #tpu.memory_space<vmem>>, %arg5: memref<1x128xf32, #tpu.memory_space<vmem>>, %arg6: memref<128x128xf32, #tpu.memory_space<vmem>>, %arg7: memref<1x128xf32, #tpu.memory_space<vmem>>, %arg8: memref<128x128xf32, #tpu.memory_space<vmem>>, %arg9: memref<1x128xf32, #tpu.memory_space<vmem>>, %arg10: memref<128x128xf32, #tpu.memory_space<vmem>>, %arg11: memref<1x128xf32, #tpu.memory_space<vmem>>, %arg12: memref<128x128xf32, #tpu.memory_space<vmem>>, %arg13: memref<1x128xf32, #tpu.memory_space<vmem>>, %arg14: memref<128x128xf32, #tpu.memory_space<vmem>>, %arg15: memref<1x128xf32, #tpu.memory_space<vmem>>, %arg16: memref<128x128xf32, #tpu.memory_space<vmem>>, %arg17: memref<1x128xf32, #tpu.memory_space<vmem>>, %arg18: memref<64x128xf32, #tpu.memory_space<vmem>>, %arg19: memref<64x128xf32, #tpu.memory_space<vmem>>) attributes {dimension_semantics = [#tpu.dimension_semantics<parallel>], iteration_bounds = array<i64: 2>, scalar_prefetch = 0 : i64, scratch_operands = 0 : i64, tpu.core_type = #tpu.core_type<tc>, window_params = [{transform_indices = @transform_0, window_bounds = array<i64: 64, 128>}, {pipeline_mode = #tpu.pipeline_mode<synchronous>, transform_indices = @transform_1, window_bounds = array<i64: 128, 128>}, {pipeline_mode = #tpu.pipeline_mode<synchronous>, transform_indices = @transform_2, window_bounds = array<i64: 1, 128>}, {pipeline_mode = #tpu.pipeline_mode<synchronous>, transform_indices = @transform_3, window_bounds = array<i64: 128, 128>}, {pipeline_mode = #tpu.pipeline_mode<synchronous>, transform_indices = @transform_4, window_bounds = array<i64: 1, 128>}, {pipeline_mode = #tpu.pipeline_mode<synchronous>, transform_indices = @transform_5, window_bounds = array<i64: 128, 128>}, {pipeline_mode = #tpu.pipeline_mode<synchronous>, transform_indices = @transform_6, window_bounds = array<i64: 1, 128>}, {pipeline_mode = #tpu.pipeline_mode<synchronous>, transform_indices = @transform_7, window_bounds = array<i64: 128, 128>}, {pipeline_mode = #tpu.pipeline_mode<synchronous>, transform_indices = @transform_8, window_bounds = array<i64: 1, 128>}, {pipeline_mode = #tpu.pipeline_mode<synchronous>, transform_indices = @transform_9, window_bounds = array<i64: 128, 128>}, {pipeline_mode = #tpu.pipeline_mode<synchronous>, transform_indices = @transform_10, window_bounds = array<i64: 1, 128>}, {pipeline_mode = #tpu.pipeline_mode<synchronous>, transform_indices = @transform_11, window_bounds = array<i64: 128, 128>}, {pipeline_mode = #tpu.pipeline_mode<synchronous>, transform_indices = @transform_12, window_bounds = array<i64: 1, 128>}, {pipeline_mode = #tpu.pipeline_mode<synchronous>, transform_indices = @transform_13, window_bounds = array<i64: 128, 128>}, {pipeline_mode = #tpu.pipeline_mode<synchronous>, transform_indices = @transform_14, window_bounds = array<i64: 1, 128>}, {pipeline_mode = #tpu.pipeline_mode<synchronous>, transform_indices = @transform_15, window_bounds = array<i64: 128, 128>}, {pipeline_mode = #tpu.pipeline_mode<synchronous>, transform_indices = @transform_16, window_bounds = array<i64: 1, 128>}, {transform_indices = @transform_17, window_bounds = array<i64: 64, 128>}, {transform_indices = @transform_18, window_bounds = array<i64: 64, 128>}]} {
    %c0 = arith.constant 0 : index
    %c0_0 = arith.constant 0 : index
    %0 = vector.load %arg1[%c0, %c0_0] : memref<64x128xf32, #tpu.memory_space<vmem>>, vector<64x128xf32>
    %c0_1 = arith.constant 0 : index
    %c0_2 = arith.constant 0 : index
    %1 = vector.load %arg2[%c0_1, %c0_2] : memref<128x128xf32, #tpu.memory_space<vmem>>, vector<128x128xf32>
    %cst = arith.constant dense<0.000000e+00> : vector<64x128xf32>
    %2 = tpu.matmul %0, %1, %cst {dimension_numbers = #tpu.dot_dimension_numbers<[1], [0], [0], [1], [0, 0, 1, 1], [], []>} : vector<64x128xf32>, vector<128x128xf32>, vector<64x128xf32> -> vector<64x128xf32>
    %c0_3 = arith.constant 0 : index
    %c0_4 = arith.constant 0 : index
    %3 = vector.load %arg3[%c0_3, %c0_4] : memref<1x128xf32, #tpu.memory_space<vmem>>, vector<1x128xf32>
    %4 = vector.broadcast %3 : vector<1x128xf32> to vector<64x128xf32>
    %5 = arith.addf %2, %4 : vector<64x128xf32>
    %cst_5 = arith.constant 0.000000e+00 : f32
    %6 = vector.broadcast %cst_5 : f32 to vector<64x128xf32>
    %7 = arith.maximumf %5, %6 : vector<64x128xf32>
    %c0_6 = arith.constant 0 : index
    %c0_7 = arith.constant 0 : index
    %8 = vector.load %arg4[%c0_6, %c0_7] : memref<128x128xf32, #tpu.memory_space<vmem>>, vector<128x128xf32>
    %cst_8 = arith.constant dense<0.000000e+00> : vector<64x128xf32>
    %9 = tpu.matmul %7, %8, %cst_8 {dimension_numbers = #tpu.dot_dimension_numbers<[1], [0], [0], [1], [0, 0, 1, 1], [], []>} : vector<64x128xf32>, vector<128x128xf32>, vector<64x128xf32> -> vector<64x128xf32>
    %c0_9 = arith.constant 0 : index
    %c0_10 = arith.constant 0 : index
    %10 = vector.load %arg5[%c0_9, %c0_10] : memref<1x128xf32, #tpu.memory_space<vmem>>, vector<1x128xf32>
    %11 = vector.broadcast %10 : vector<1x128xf32> to vector<64x128xf32>
    %12 = arith.addf %9, %11 : vector<64x128xf32>
    %cst_11 = arith.constant 0.000000e+00 : f32
    %13 = vector.broadcast %cst_11 : f32 to vector<64x128xf32>
    %14 = arith.maximumf %12, %13 : vector<64x128xf32>
    %c0_12 = arith.constant 0 : index
    %c0_13 = arith.constant 0 : index
    %15 = vector.load %arg6[%c0_12, %c0_13] : memref<128x128xf32, #tpu.memory_space<vmem>>, vector<128x128xf32>
    %cst_14 = arith.constant dense<0.000000e+00> : vector<64x128xf32>
    %16 = tpu.matmul %14, %15, %cst_14 {dimension_numbers = #tpu.dot_dimension_numbers<[1], [0], [0], [1], [0, 0, 1, 1], [], []>} : vector<64x128xf32>, vector<128x128xf32>, vector<64x128xf32> -> vector<64x128xf32>
    %c0_15 = arith.constant 0 : index
    %c0_16 = arith.constant 0 : index
    %17 = vector.load %arg7[%c0_15, %c0_16] : memref<1x128xf32, #tpu.memory_space<vmem>>, vector<1x128xf32>
    %18 = vector.broadcast %17 : vector<1x128xf32> to vector<64x128xf32>
    %19 = arith.addf %16, %18 : vector<64x128xf32>
    %cst_17 = arith.constant 0.000000e+00 : f32
    %20 = vector.broadcast %cst_17 : f32 to vector<64x128xf32>
    %21 = arith.maximumf %19, %20 : vector<64x128xf32>
    %c0_18 = arith.constant 0 : index
    %c0_19 = arith.constant 0 : index
    %22 = vector.load %arg8[%c0_18, %c0_19] : memref<128x128xf32, #tpu.memory_space<vmem>>, vector<128x128xf32>
    %cst_20 = arith.constant dense<0.000000e+00> : vector<64x128xf32>
    %23 = tpu.matmul %21, %22, %cst_20 {dimension_numbers = #tpu.dot_dimension_numbers<[1], [0], [0], [1], [0, 0, 1, 1], [], []>} : vector<64x128xf32>, vector<128x128xf32>, vector<64x128xf32> -> vector<64x128xf32>
    %c0_21 = arith.constant 0 : index
    %c0_22 = arith.constant 0 : index
    %24 = vector.load %arg9[%c0_21, %c0_22] : memref<1x128xf32, #tpu.memory_space<vmem>>, vector<1x128xf32>
    %25 = vector.broadcast %24 : vector<1x128xf32> to vector<64x128xf32>
    %26 = arith.addf %23, %25 : vector<64x128xf32>
    %c0_23 = arith.constant 0 : index
    %c0_24 = arith.constant 0 : index
    %27 = vector.load %arg18[%c0_23, %c0_24] : memref<64x128xf32, #tpu.memory_space<vmem>>, vector<64x128xf32>
    tpu.vector_store %arg18[%c0_23, %c0_24], %26 {strides = array<i32>} : memref<64x128xf32, #tpu.memory_space<vmem>>, vector<64x128xf32>,
    %c0_25 = arith.constant 0 : index
    %c0_26 = arith.constant 0 : index
    %28 = vector.load %arg10[%c0_25, %c0_26] : memref<128x128xf32, #tpu.memory_space<vmem>>, vector<128x128xf32>
    %cst_27 = arith.constant dense<0.000000e+00> : vector<64x128xf32>
    %29 = tpu.matmul %26, %28, %cst_27 {dimension_numbers = #tpu.dot_dimension_numbers<[1], [0], [0], [1], [0, 0, 1, 1], [], []>} : vector<64x128xf32>, vector<128x128xf32>, vector<64x128xf32> -> vector<64x128xf32>
    %c0_28 = arith.constant 0 : index
    %c0_29 = arith.constant 0 : index
    %30 = vector.load %arg11[%c0_28, %c0_29] : memref<1x128xf32, #tpu.memory_space<vmem>>, vector<1x128xf32>
    %31 = vector.broadcast %30 : vector<1x128xf32> to vector<64x128xf32>
    %32 = arith.addf %29, %31 : vector<64x128xf32>
    %cst_30 = arith.constant 0.000000e+00 : f32
    %33 = vector.broadcast %cst_30 : f32 to vector<64x128xf32>
    %34 = arith.maximumf %32, %33 : vector<64x128xf32>
    %c0_31 = arith.constant 0 : index
    %c0_32 = arith.constant 0 : index
    %35 = vector.load %arg12[%c0_31, %c0_32] : memref<128x128xf32, #tpu.memory_space<vmem>>, vector<128x128xf32>
    %cst_33 = arith.constant dense<0.000000e+00> : vector<64x128xf32>
    %36 = tpu.matmul %34, %35, %cst_33 {dimension_numbers = #tpu.dot_dimension_numbers<[1], [0], [0], [1], [0, 0, 1, 1], [], []>} : vector<64x128xf32>, vector<128x128xf32>, vector<64x128xf32> -> vector<64x128xf32>
    %c0_34 = arith.constant 0 : index
    %c0_35 = arith.constant 0 : index
    %37 = vector.load %arg13[%c0_34, %c0_35] : memref<1x128xf32, #tpu.memory_space<vmem>>, vector<1x128xf32>
    %38 = vector.broadcast %37 : vector<1x128xf32> to vector<64x128xf32>
    %39 = arith.addf %36, %38 : vector<64x128xf32>
    %cst_36 = arith.constant 0.000000e+00 : f32
    %40 = vector.broadcast %cst_36 : f32 to vector<64x128xf32>
    %41 = arith.maximumf %39, %40 : vector<64x128xf32>
    %c0_37 = arith.constant 0 : index
    %c0_38 = arith.constant 0 : index
    %42 = vector.load %arg14[%c0_37, %c0_38] : memref<128x128xf32, #tpu.memory_space<vmem>>, vector<128x128xf32>
    %cst_39 = arith.constant dense<0.000000e+00> : vector<64x128xf32>
    %43 = tpu.matmul %41, %42, %cst_39 {dimension_numbers = #tpu.dot_dimension_numbers<[1], [0], [0], [1], [0, 0, 1, 1], [], []>} : vector<64x128xf32>, vector<128x128xf32>, vector<64x128xf32> -> vector<64x128xf32>
    %c0_40 = arith.constant 0 : index
    %c0_41 = arith.constant 0 : index
    %44 = vector.load %arg15[%c0_40, %c0_41] : memref<1x128xf32, #tpu.memory_space<vmem>>, vector<1x128xf32>
    %45 = vector.broadcast %44 : vector<1x128xf32> to vector<64x128xf32>
    %46 = arith.addf %43, %45 : vector<64x128xf32>
    %cst_42 = arith.constant 0.000000e+00 : f32
    %47 = vector.broadcast %cst_42 : f32 to vector<64x128xf32>
    %48 = arith.maximumf %46, %47 : vector<64x128xf32>
    %c0_43 = arith.constant 0 : index
    %c0_44 = arith.constant 0 : index
    %49 = vector.load %arg16[%c0_43, %c0_44] : memref<128x128xf32, #tpu.memory_space<vmem>>, vector<128x128xf32>
    %cst_45 = arith.constant dense<0.000000e+00> : vector<64x128xf32>
    %50 = tpu.matmul %48, %49, %cst_45 {dimension_numbers = #tpu.dot_dimension_numbers<[1], [0], [0], [1], [0, 0, 1, 1], [], []>} : vector<64x128xf32>, vector<128x128xf32>, vector<64x128xf32> -> vector<64x128xf32>
    %c0_46 = arith.constant 0 : index
    %c0_47 = arith.constant 0 : index
    %51 = vector.load %arg17[%c0_46, %c0_47] : memref<1x128xf32, #tpu.memory_space<vmem>>, vector<1x128xf32>
    %52 = vector.broadcast %51 : vector<1x128xf32> to vector<64x128xf32>
    %53 = arith.addf %50, %52 : vector<64x128xf32>
    %c0_48 = arith.constant 0 : index
    %c0_49 = arith.constant 0 : index
    %54 = vector.load %arg19[%c0_48, %c0_49] : memref<64x128xf32, #tpu.memory_space<vmem>>, vector<64x128xf32>
    tpu.vector_store %arg19[%c0_48, %c0_49], %53 {strides = array<i32>} : memref<64x128xf32, #tpu.memory_space<vmem>>, vector<64x128xf32>,
    return
  }
  func.func @transform_0(%arg0: i32) -> (i32, i32) {
    %c0_i32 = arith.constant 0 : i32
    %c0_i32_0 = arith.constant 0 : i32
    return %arg0, %c0_i32 : i32, i32
  }
  func.func @transform_1(%arg0: i32) -> (i32, i32) {
    %c0_i32 = arith.constant 0 : i32
    %c0_i32_0 = arith.constant 0 : i32
    %c0_i32_1 = arith.constant 0 : i32
    return %c0_i32, %c0_i32_0 : i32, i32
  }
  func.func @transform_2(%arg0: i32) -> (i32, i32) {
    %c0_i32 = arith.constant 0 : i32
    %c0_i32_0 = arith.constant 0 : i32
    %c0_i32_1 = arith.constant 0 : i32
    return %c0_i32, %c0_i32_0 : i32, i32
  }
  func.func @transform_3(%arg0: i32) -> (i32, i32) {
    %c0_i32 = arith.constant 0 : i32
    %c0_i32_0 = arith.constant 0 : i32
    %c0_i32_1 = arith.constant 0 : i32
    return %c0_i32, %c0_i32_0 : i32, i32
  }
  func.func @transform_4(%arg0: i32) -> (i32, i32) {
    %c0_i32 = arith.constant 0 : i32
    %c0_i32_0 = arith.constant 0 : i32
    %c0_i32_1 = arith.constant 0 : i32
    return %c0_i32, %c0_i32_0 : i32, i32
  }
  func.func @transform_5(%arg0: i32) -> (i32, i32) {
    %c0_i32 = arith.constant 0 : i32
    %c0_i32_0 = arith.constant 0 : i32
    %c0_i32_1 = arith.constant 0 : i32
    return %c0_i32, %c0_i32_0 : i32, i32
  }
  func.func @transform_6(%arg0: i32) -> (i32, i32) {
    %c0_i32 = arith.constant 0 : i32
    %c0_i32_0 = arith.constant 0 : i32
    %c0_i32_1 = arith.constant 0 : i32
    return %c0_i32, %c0_i32_0 : i32, i32
  }
  func.func @transform_7(%arg0: i32) -> (i32, i32) {
    %c0_i32 = arith.constant 0 : i32
    %c0_i32_0 = arith.constant 0 : i32
    %c0_i32_1 = arith.constant 0 : i32
    return %c0_i32, %c0_i32_0 : i32, i32
  }
  func.func @transform_8(%arg0: i32) -> (i32, i32) {
    %c0_i32 = arith.constant 0 : i32
    %c0_i32_0 = arith.constant 0 : i32
    %c0_i32_1 = arith.constant 0 : i32
    return %c0_i32, %c0_i32_0 : i32, i32
  }
  func.func @transform_9(%arg0: i32) -> (i32, i32) {
    %c0_i32 = arith.constant 0 : i32
    %c0_i32_0 = arith.constant 0 : i32
    %c0_i32_1 = arith.constant 0 : i32
    return %c0_i32, %c0_i32_0 : i32, i32
  }
  func.func @transform_10(%arg0: i32) -> (i32, i32) {
    %c0_i32 = arith.constant 0 : i32
    %c0_i32_0 = arith.constant 0 : i32
    %c0_i32_1 = arith.constant 0 : i32
    return %c0_i32, %c0_i32_0 : i32, i32
  }
  func.func @transform_11(%arg0: i32) -> (i32, i32) {
    %c0_i32 = arith.constant 0 : i32
    %c0_i32_0 = arith.constant 0 : i32
    %c0_i32_1 = arith.constant 0 : i32
    return %c0_i32, %c0_i32_0 : i32, i32
  }
  func.func @transform_12(%arg0: i32) -> (i32, i32) {
    %c0_i32 = arith.constant 0 : i32
    %c0_i32_0 = arith.constant 0 : i32
    %c0_i32_1 = arith.constant 0 : i32
    return %c0_i32, %c0_i32_0 : i32, i32
  }
  func.func @transform_13(%arg0: i32) -> (i32, i32) {
    %c0_i32 = arith.constant 0 : i32
    %c0_i32_0 = arith.constant 0 : i32
    %c0_i32_1 = arith.constant 0 : i32
    return %c0_i32, %c0_i32_0 : i32, i32
  }
  func.func @transform_14(%arg0: i32) -> (i32, i32) {
    %c0_i32 = arith.constant 0 : i32
    %c0_i32_0 = arith.constant 0 : i32
    %c0_i32_1 = arith.constant 0 : i32
    return %c0_i32, %c0_i32_0 : i32, i32
  }
  func.func @transform_15(%arg0: i32) -> (i32, i32) {
    %c0_i32 = arith.constant 0 : i32
    %c0_i32_0 = arith.constant 0 : i32
    %c0_i32_1 = arith.constant 0 : i32
    return %c0_i32, %c0_i32_0 : i32, i32
  }
  func.func @transform_16(%arg0: i32) -> (i32, i32) {
    %c0_i32 = arith.constant 0 : i32
    %c0_i32_0 = arith.constant 0 : i32
    %c0_i32_1 = arith.constant 0 : i32
    return %c0_i32, %c0_i32_0 : i32, i32
  }
  func.func @transform_17(%arg0: i32) -> (i32, i32) {
    %c0_i32 = arith.constant 0 : i32
    %c0_i32_0 = arith.constant 0 : i32
    return %arg0, %c0_i32 : i32, i32
  }
  func.func @transform_18(%arg0: i32) -> (i32, i32) {
    %c0_i32 = arith.constant 0 : i32
    %c0_i32_0 = arith.constant 0 : i32
    return %arg0, %c0_i32 : i32, i32
  }
}

module attributes {stable_mosaic.version = 11 : i64} {
  func.func @kernel(%arg0: i32, %arg1: memref<64x128xf32, #tpu.memory_space<vmem>>, %arg2: memref<128x128xf32, #tpu.memory_space<vmem>>, %arg3: memref<1x128xf32, #tpu.memory_space<vmem>>, %arg4: memref<128x128xf32, #tpu.memory_space<vmem>>, %arg5: memref<1x128xf32, #tpu.memory_space<vmem>>, %arg6: memref<128x128xf32, #tpu.memory_space<vmem>>, %arg7: memref<1x128xf32, #tpu.memory_space<vmem>>, %arg8: memref<128x128xf32, #tpu.memory_space<vmem>>, %arg9: memref<1x128xf32, #tpu.memory_space<vmem>>, %arg10: memref<128x128xf32, #tpu.memory_space<vmem>>, %arg11: memref<1x128xf32, #tpu.memory_space<vmem>>, %arg12: memref<128x128xf32, #tpu.memory_space<vmem>>, %arg13: memref<1x128xf32, #tpu.memory_space<vmem>>, %arg14: memref<128x128xf32, #tpu.memory_space<vmem>>, %arg15: memref<1x128xf32, #tpu.memory_space<vmem>>, %arg16: memref<128x128xf32, #tpu.memory_space<vmem>>, %arg17: memref<1x128xf32, #tpu.memory_space<vmem>>, %arg18: memref<64x128xf32, #tpu.memory_space<vmem>>, %arg19: memref<64x128xf32, #tpu.memory_space<vmem>>) attributes {dimension_semantics = [#tpu.dimension_semantics<parallel>], iteration_bounds = array<i64: 2>, scalar_prefetch = 0 : i64, scratch_operands = 0 : i64, tpu.core_type = #tpu.core_type<tc>, window_params = [{transform_indices = @transform_0, window_bounds = array<i64: 64, 128>}, {pipeline_mode = #tpu.pipeline_mode<synchronous>, transform_indices = @transform_1, window_bounds = array<i64: 128, 128>}, {pipeline_mode = #tpu.pipeline_mode<synchronous>, transform_indices = @transform_2, window_bounds = array<i64: 1, 128>}, {pipeline_mode = #tpu.pipeline_mode<synchronous>, transform_indices = @transform_3, window_bounds = array<i64: 128, 128>}, {pipeline_mode = #tpu.pipeline_mode<synchronous>, transform_indices = @transform_4, window_bounds = array<i64: 1, 128>}, {pipeline_mode = #tpu.pipeline_mode<synchronous>, transform_indices = @transform_5, window_bounds = array<i64: 128, 128>}, {pipeline_mode = #tpu.pipeline_mode<synchronous>, transform_indices = @transform_6, window_bounds = array<i64: 1, 128>}, {pipeline_mode = #tpu.pipeline_mode<synchronous>, transform_indices = @transform_7, window_bounds = array<i64: 128, 128>}, {pipeline_mode = #tpu.pipeline_mode<synchronous>, transform_indices = @transform_8, window_bounds = array<i64: 1, 128>}, {pipeline_mode = #tpu.pipeline_mode<synchronous>, transform_indices = @transform_9, window_bounds = array<i64: 128, 128>}, {pipeline_mode = #tpu.pipeline_mode<synchronous>, transform_indices = @transform_10, window_bounds = array<i64: 1, 128>}, {pipeline_mode = #tpu.pipeline_mode<synchronous>, transform_indices = @transform_11, window_bounds = array<i64: 128, 128>}, {pipeline_mode = #tpu.pipeline_mode<synchronous>, transform_indices = @transform_12, window_bounds = array<i64: 1, 128>}, {pipeline_mode = #tpu.pipeline_mode<synchronous>, transform_indices = @transform_13, window_bounds = array<i64: 128, 128>}, {pipeline_mode = #tpu.pipeline_mode<synchronous>, transform_indices = @transform_14, window_bounds = array<i64: 1, 128>}, {pipeline_mode = #tpu.pipeline_mode<synchronous>, transform_indices = @transform_15, window_bounds = array<i64: 128, 128>}, {pipeline_mode = #tpu.pipeline_mode<synchronous>, transform_indices = @transform_16, window_bounds = array<i64: 1, 128>}, {transform_indices = @transform_17, window_bounds = array<i64: 64, 128>}, {transform_indices = @transform_18, window_bounds = array<i64: 64, 128>}]} {
    %c0 = arith.constant 0 : index
    %c0_0 = arith.constant 0 : index
    %0 = vector.load %arg1[%c0, %c0_0] : memref<64x128xf32, #tpu.memory_space<vmem>>, vector<64x128xf32>
    %c0_1 = arith.constant 0 : index
    %c0_2 = arith.constant 0 : index
    %1 = vector.load %arg2[%c0_1, %c0_2] : memref<128x128xf32, #tpu.memory_space<vmem>>, vector<128x128xf32>
    %cst = arith.constant dense<0.000000e+00> : vector<64x128xf32>
    %2 = tpu.matmul %0, %1, %cst {dimension_numbers = #tpu.dot_dimension_numbers<[1], [0], [0], [1], [0, 0, 1, 1], [], []>} : vector<64x128xf32>, vector<128x128xf32>, vector<64x128xf32> -> vector<64x128xf32>
    %c0_3 = arith.constant 0 : index
    %c0_4 = arith.constant 0 : index
    %3 = vector.load %arg3[%c0_3, %c0_4] : memref<1x128xf32, #tpu.memory_space<vmem>>, vector<1x128xf32>
    %4 = vector.broadcast %3 : vector<1x128xf32> to vector<64x128xf32>
    %5 = arith.addf %2, %4 : vector<64x128xf32>
    %cst_5 = arith.constant 0.000000e+00 : f32
    %6 = vector.broadcast %cst_5 : f32 to vector<64x128xf32>
    %7 = arith.maximumf %5, %6 : vector<64x128xf32>
    %c0_6 = arith.constant 0 : index
    %c0_7 = arith.constant 0 : index
    %8 = vector.load %arg4[%c0_6, %c0_7] : memref<128x128xf32, #tpu.memory_space<vmem>>, vector<128x128xf32>
    %cst_8 = arith.constant dense<0.000000e+00> : vector<64x128xf32>
    %9 = tpu.matmul %7, %8, %cst_8 {dimension_numbers = #tpu.dot_dimension_numbers<[1], [0], [0], [1], [0, 0, 1, 1], [], []>} : vector<64x128xf32>, vector<128x128xf32>, vector<64x128xf32> -> vector<64x128xf32>
    %c0_9 = arith.constant 0 : index
    %c0_10 = arith.constant 0 : index
    %10 = vector.load %arg5[%c0_9, %c0_10] : memref<1x128xf32, #tpu.memory_space<vmem>>, vector<1x128xf32>
    %11 = vector.broadcast %10 : vector<1x128xf32> to vector<64x128xf32>
    %12 = arith.addf %9, %11 : vector<64x128xf32>
    %cst_11 = arith.constant 0.000000e+00 : f32
    %13 = vector.broadcast %cst_11 : f32 to vector<64x128xf32>
    %14 = arith.maximumf %12, %13 : vector<64x128xf32>
    %c0_12 = arith.constant 0 : index
    %c0_13 = arith.constant 0 : index
    %15 = vector.load %arg6[%c0_12, %c0_13] : memref<128x128xf32, #tpu.memory_space<vmem>>, vector<128x128xf32>
    %cst_14 = arith.constant dense<0.000000e+00> : vector<64x128xf32>
    %16 = tpu.matmul %14, %15, %cst_14 {dimension_numbers = #tpu.dot_dimension_numbers<[1], [0], [0], [1], [0, 0, 1, 1], [], []>} : vector<64x128xf32>, vector<128x128xf32>, vector<64x128xf32> -> vector<64x128xf32>
    %c0_15 = arith.constant 0 : index
    %c0_16 = arith.constant 0 : index
    %17 = vector.load %arg7[%c0_15, %c0_16] : memref<1x128xf32, #tpu.memory_space<vmem>>, vector<1x128xf32>
    %18 = vector.broadcast %17 : vector<1x128xf32> to vector<64x128xf32>
    %19 = arith.addf %16, %18 : vector<64x128xf32>
    %cst_17 = arith.constant 0.000000e+00 : f32
    %20 = vector.broadcast %cst_17 : f32 to vector<64x128xf32>
    %21 = arith.maximumf %19, %20 : vector<64x128xf32>
    %c0_18 = arith.constant 0 : index
    %c0_19 = arith.constant 0 : index
    %22 = vector.load %arg8[%c0_18, %c0_19] : memref<128x128xf32, #tpu.memory_space<vmem>>, vector<128x128xf32>
    %cst_20 = arith.constant dense<0.000000e+00> : vector<64x128xf32>
    %23 = tpu.matmul %21, %22, %cst_20 {dimension_numbers = #tpu.dot_dimension_numbers<[1], [0], [0], [1], [0, 0, 1, 1], [], []>} : vector<64x128xf32>, vector<128x128xf32>, vector<64x128xf32> -> vector<64x128xf32>
    %c0_21 = arith.constant 0 : index
    %c0_22 = arith.constant 0 : index
    %24 = vector.load %arg9[%c0_21, %c0_22] : memref<1x128xf32, #tpu.memory_space<vmem>>, vector<1x128xf32>
    %25 = vector.broadcast %24 : vector<1x128xf32> to vector<64x128xf32>
    %26 = arith.addf %23, %25 : vector<64x128xf32>
    %c0_23 = arith.constant 0 : index
    %c0_24 = arith.constant 0 : index
    %27 = vector.load %arg18[%c0_23, %c0_24] : memref<64x128xf32, #tpu.memory_space<vmem>>, vector<64x128xf32>
    tpu.vector_store %arg18[%c0_23, %c0_24], %26 {strides = array<i32>} : memref<64x128xf32, #tpu.memory_space<vmem>>, vector<64x128xf32>,
    %c0_25 = arith.constant 0 : index
    %c0_26 = arith.constant 0 : index
    %28 = vector.load %arg10[%c0_25, %c0_26] : memref<128x128xf32, #tpu.memory_space<vmem>>, vector<128x128xf32>
    %cst_27 = arith.constant dense<0.000000e+00> : vector<64x128xf32>
    %29 = tpu.matmul %26, %28, %cst_27 {dimension_numbers = #tpu.dot_dimension_numbers<[1], [0], [0], [1], [0, 0, 1, 1], [], []>} : vector<64x128xf32>, vector<128x128xf32>, vector<64x128xf32> -> vector<64x128xf32>
    %c0_28 = arith.constant 0 : index
    %c0_29 = arith.constant 0 : index
    %30 = vector.load %arg11[%c0_28, %c0_29] : memref<1x128xf32, #tpu.memory_space<vmem>>, vector<1x128xf32>
    %31 = vector.broadcast %30 : vector<1x128xf32> to vector<64x128xf32>
    %32 = arith.addf %29, %31 : vector<64x128xf32>
    %cst_30 = arith.constant 0.000000e+00 : f32
    %33 = vector.broadcast %cst_30 : f32 to vector<64x128xf32>
    %34 = arith.maximumf %32, %33 : vector<64x128xf32>
    %c0_31 = arith.constant 0 : index
    %c0_32 = arith.constant 0 : index
    %35 = vector.load %arg12[%c0_31, %c0_32] : memref<128x128xf32, #tpu.memory_space<vmem>>, vector<128x128xf32>
    %cst_33 = arith.constant dense<0.000000e+00> : vector<64x128xf32>
    %36 = tpu.matmul %34, %35, %cst_33 {dimension_numbers = #tpu.dot_dimension_numbers<[1], [0], [0], [1], [0, 0, 1, 1], [], []>} : vector<64x128xf32>, vector<128x128xf32>, vector<64x128xf32> -> vector<64x128xf32>
    %c0_34 = arith.constant 0 : index
    %c0_35 = arith.constant 0 : index
    %37 = vector.load %arg13[%c0_34, %c0_35] : memref<1x128xf32, #tpu.memory_space<vmem>>, vector<1x128xf32>
    %38 = vector.broadcast %37 : vector<1x128xf32> to vector<64x128xf32>
    %39 = arith.addf %36, %38 : vector<64x128xf32>
    %cst_36 = arith.constant 0.000000e+00 : f32
    %40 = vector.broadcast %cst_36 : f32 to vector<64x128xf32>
    %41 = arith.maximumf %39, %40 : vector<64x128xf32>
    %c0_37 = arith.constant 0 : index
    %c0_38 = arith.constant 0 : index
    %42 = vector.load %arg14[%c0_37, %c0_38] : memref<128x128xf32, #tpu.memory_space<vmem>>, vector<128x128xf32>
    %cst_39 = arith.constant dense<0.000000e+00> : vector<64x128xf32>
    %43 = tpu.matmul %41, %42, %cst_39 {dimension_numbers = #tpu.dot_dimension_numbers<[1], [0], [0], [1], [0, 0, 1, 1], [], []>} : vector<64x128xf32>, vector<128x128xf32>, vector<64x128xf32> -> vector<64x128xf32>
    %c0_40 = arith.constant 0 : index
    %c0_41 = arith.constant 0 : index
    %44 = vector.load %arg15[%c0_40, %c0_41] : memref<1x128xf32, #tpu.memory_space<vmem>>, vector<1x128xf32>
    %45 = vector.broadcast %44 : vector<1x128xf32> to vector<64x128xf32>
    %46 = arith.addf %43, %45 : vector<64x128xf32>
    %cst_42 = arith.constant 0.000000e+00 : f32
    %47 = vector.broadcast %cst_42 : f32 to vector<64x128xf32>
    %48 = arith.maximumf %46, %47 : vector<64x128xf32>
    %c0_43 = arith.constant 0 : index
    %c0_44 = arith.constant 0 : index
    %49 = vector.load %arg16[%c0_43, %c0_44] : memref<128x128xf32, #tpu.memory_space<vmem>>, vector<128x128xf32>
    %cst_45 = arith.constant dense<0.000000e+00> : vector<64x128xf32>
    %50 = tpu.matmul %48, %49, %cst_45 {dimension_numbers = #tpu.dot_dimension_numbers<[1], [0], [0], [1], [0, 0, 1, 1], [], []>} : vector<64x128xf32>, vector<128x128xf32>, vector<64x128xf32> -> vector<64x128xf32>
    %c0_46 = arith.constant 0 : index
    %c0_47 = arith.constant 0 : index
    %51 = vector.load %arg17[%c0_46, %c0_47] : memref<1x128xf32, #tpu.memory_space<vmem>>, vector<1x128xf32>
    %52 = vector.broadcast %51 : vector<1x128xf32> to vector<64x128xf32>
    %53 = arith.addf %50, %52 : vector<64x128xf32>
    %c0_48 = arith.constant 0 : index
    %c0_49 = arith.constant 0 : index
    %54 = vector.load %arg19[%c0_48, %c0_49] : memref<64x128xf32, #tpu.memory_space<vmem>>, vector<64x128xf32>
    tpu.vector_store %arg19[%c0_48, %c0_49], %53 {strides = array<i32>} : memref<64x128xf32, #tpu.memory_space<vmem>>, vector<64x128xf32>,
    return
  }
  func.func @transform_0(%arg0: i32) -> (i32, i32) {
    %c0_i32 = arith.constant 0 : i32
    %c0_i32_0 = arith.constant 0 : i32
    return %arg0, %c0_i32 : i32, i32
  }
  func.func @transform_1(%arg0: i32) -> (i32, i32) {
    %c0_i32 = arith.constant 0 : i32
    %c0_i32_0 = arith.constant 0 : i32
    %c0_i32_1 = arith.constant 0 : i32
    return %c0_i32, %c0_i32_0 : i32, i32
  }
  func.func @transform_2(%arg0: i32) -> (i32, i32) {
    %c0_i32 = arith.constant 0 : i32
    %c0_i32_0 = arith.constant 0 : i32
    %c0_i32_1 = arith.constant 0 : i32
    return %c0_i32, %c0_i32_0 : i32, i32
  }
  func.func @transform_3(%arg0: i32) -> (i32, i32) {
    %c0_i32 = arith.constant 0 : i32
    %c0_i32_0 = arith.constant 0 : i32
    %c0_i32_1 = arith.constant 0 : i32
    return %c0_i32, %c0_i32_0 : i32, i32
  }
  func.func @transform_4(%arg0: i32) -> (i32, i32) {
    %c0_i32 = arith.constant 0 : i32
    %c0_i32_0 = arith.constant 0 : i32
    %c0_i32_1 = arith.constant 0 : i32
    return %c0_i32, %c0_i32_0 : i32, i32
  }
  func.func @transform_5(%arg0: i32) -> (i32, i32) {
    %c0_i32 = arith.constant 0 : i32
    %c0_i32_0 = arith.constant 0 : i32
    %c0_i32_1 = arith.constant 0 : i32
    return %c0_i32, %c0_i32_0 : i32, i32
  }
  func.func @transform_6(%arg0: i32) -> (i32, i32) {
    %c0_i32 = arith.constant 0 : i32
    %c0_i32_0 = arith.constant 0 : i32
    %c0_i32_1 = arith.constant 0 : i32
    return %c0_i32, %c0_i32_0 : i32, i32
  }
  func.func @transform_7(%arg0: i32) -> (i32, i32) {
    %c0_i32 = arith.constant 0 : i32
    %c0_i32_0 = arith.constant 0 : i32
    %c0_i32_1 = arith.constant 0 : i32
    return %c0_i32, %c0_i32_0 : i32, i32
  }
  func.func @transform_8(%arg0: i32) -> (i32, i32) {
    %c0_i32 = arith.constant 0 : i32
    %c0_i32_0 = arith.constant 0 : i32
    %c0_i32_1 = arith.constant 0 : i32
    return %c0_i32, %c0_i32_0 : i32, i32
  }
  func.func @transform_9(%arg0: i32) -> (i32, i32) {
    %c0_i32 = arith.constant 0 : i32
    %c0_i32_0 = arith.constant 0 : i32
    %c0_i32_1 = arith.constant 0 : i32
    return %c0_i32, %c0_i32_0 : i32, i32
  }
  func.func @transform_10(%arg0: i32) -> (i32, i32) {
    %c0_i32 = arith.constant 0 : i32
    %c0_i32_0 = arith.constant 0 : i32
    %c0_i32_1 = arith.constant 0 : i32
    return %c0_i32, %c0_i32_0 : i32, i32
  }
  func.func @transform_11(%arg0: i32) -> (i32, i32) {
    %c0_i32 = arith.constant 0 : i32
    %c0_i32_0 = arith.constant 0 : i32
    %c0_i32_1 = arith.constant 0 : i32
    return %c0_i32, %c0_i32_0 : i32, i32
  }
  func.func @transform_12(%arg0: i32) -> (i32, i32) {
    %c0_i32 = arith.constant 0 : i32
    %c0_i32_0 = arith.constant 0 : i32
    %c0_i32_1 = arith.constant 0 : i32
    return %c0_i32, %c0_i32_0 : i32, i32
  }
  func.func @transform_13(%arg0: i32) -> (i32, i32) {
    %c0_i32 = arith.constant 0 : i32
    %c0_i32_0 = arith.constant 0 : i32
    %c0_i32_1 = arith.constant 0 : i32
    return %c0_i32, %c0_i32_0 : i32, i32
  }
  func.func @transform_14(%arg0: i32) -> (i32, i32) {
    %c0_i32 = arith.constant 0 : i32
    %c0_i32_0 = arith.constant 0 : i32
    %c0_i32_1 = arith.constant 0 : i32
    return %c0_i32, %c0_i32_0 : i32, i32
  }
  func.func @transform_15(%arg0: i32) -> (i32, i32) {
    %c0_i32 = arith.constant 0 : i32
    %c0_i32_0 = arith.constant 0 : i32
    %c0_i32_1 = arith.constant 0 : i32
    return %c0_i32, %c0_i32_0 : i32, i32
  }
  func.func @transform_16(%arg0: i32) -> (i32, i32) {
    %c0_i32 = arith.constant 0 : i32
    %c0_i32_0 = arith.constant 0 : i32
    %c0_i32_1 = arith.constant 0 : i32
    return %c0_i32, %c0_i32_0 : i32, i32
  }
  func.func @transform_17(%arg0: i32) -> (i32, i32) {
    %c0_i32 = arith.constant 0 : i32
    %c0_i32_0 = arith.constant 0 : i32
    return %arg0, %c0_i32 : i32, i32
  }
  func.func @transform_18(%arg0: i32) -> (i32, i32) {
    %c0_i32 = arith.constant 0 : i32
    %c0_i32_0 = arith.constant 0 : i32
    return %arg0, %c0_i32 : i32, i32
  }
}

</mosaic_0001>

<llo_original>
// kernel: tpu_custom_call.1
$region0: #{tpu_custom_call.1}
  #allocation0 [shape = 'u32[]', space=smem, size = 0x4, offset = 0x4, fixed_abs, tag = 'smem constant byte address 0x4 - core index']
  #allocation1 [shape = 'u32[144,128]{1,0:T(1,128)}', space=vmem, size = 0x12000, scoped, tag = 'internal scratch']
  %s0 = inlined_call_operand.hbm [shape: f32[128,128], index: 0, kind: input, shape index: {}]
  %s1 = inlined_call_operand.hbm [shape: f32[128,128], index: 1, kind: input, shape index: {}]
  %s2 = inlined_call_operand.vmem [shape: f32[1,128], index: 2, kind: input, shape index: {}]
  %s3 = inlined_call_operand.hbm [shape: f32[128,128], index: 3, kind: input, shape index: {}]
  %s4 = inlined_call_operand.vmem [shape: f32[1,128], index: 4, kind: input, shape index: {}]
  %s5 = inlined_call_operand.hbm [shape: f32[128,128], index: 5, kind: input, shape index: {}]
  %s6 = inlined_call_operand.vmem [shape: f32[1,128], index: 6, kind: input, shape index: {}]
  %s7 = inlined_call_operand.hbm [shape: f32[128,128], index: 7, kind: input, shape index: {}]
  %s8 = inlined_call_operand.vmem [shape: f32[1,128], index: 8, kind: input, shape index: {}]
  %s9 = inlined_call_operand.hbm [shape: f32[128,128], index: 9, kind: input, shape index: {}]
  %s10 = inlined_call_operand.vmem [shape: f32[1,128], index: 10, kind: input, shape index: {}]
  %s11 = inlined_call_operand.hbm [shape: f32[128,128], index: 11, kind: input, shape index: {}]
  %s12 = inlined_call_operand.vmem [shape: f32[1,128], index: 12, kind: input, shape index: {}]
  %s13 = inlined_call_operand.hbm [shape: f32[128,128], index: 13, kind: input, shape index: {}]
  %s14 = inlined_call_operand.vmem [shape: f32[1,128], index: 14, kind: input, shape index: {}]
  %s15 = inlined_call_operand.hbm [shape: f32[128,128], index: 15, kind: input, shape index: {}]
  %s16 = inlined_call_operand.vmem [shape: f32[1,128], index: 16, kind: input, shape index: {}]
  %s17 = inlined_call_operand.hbm [shape: f32[128,128], index: 17, kind: output, shape index: {0}]
  %s18 = inlined_call_operand.hbm [shape: f32[128,128], index: 18, kind: output, shape index: {1}]
  %19 = xla_tuple %s17, %s18
  %s20 = sld [smem:[#allocation0]]
  $region145: #{tpu_custom_call.1} parent=0
    _
  %s22 = ssub.s32 1, %s20
  %s23 = scalar_select 0, %s22, %s20
  $region1: #{tpu_custom_call.1} parent=0
    #allocation2 [shape = 'u8[65536]{0}', space=vmem, size = 0x10000, scoped, tag = 'input window, operand 0']
    #allocation3 [shape = 's32[2]{0}', space=sflag, size = 0x8, scoped, tag = 'scoped memory for tpu_custom_call.1']
    #allocation4 [shape = 's32[2]{0}', space=sflag, size = 0x8, scoped, tag = 'scoped memory for tpu_custom_call.1']
    #allocation5 [shape = 'u8[65536]{0}', space=vmem, size = 0x10000, scoped, tag = 'input window, operand 1, single buffered']
    #allocation6 [shape = 's32[1]{0}', space=sflag, size = 0x4, scoped, tag = 'scoped memory for tpu_custom_call.1']
    #allocation7 [shape = 'u8[65536]{0}', space=vmem, size = 0x10000, scoped, tag = 'input window, operand 3, single buffered']
    #allocation8 [shape = 'u8[65536]{0}', space=vmem, size = 0x10000, scoped, tag = 'input window, operand 5, single buffered']
    #allocation9 [shape = 's32[1]{0}', space=sflag, size = 0x4, scoped, tag = 'scoped memory for tpu_custom_call.1']
    #allocation10 [shape = 'u8[65536]{0}', space=vmem, size = 0x10000, scoped, tag = 'input window, operand 7, single buffered']
    #allocation11 [shape = 'u8[65536]{0}', space=vmem, size = 0x10000, scoped, tag = 'input window, operand 9, single buffered']
    #allocation12 [shape = 's32[1]{0}', space=sflag, size = 0x4, scoped, tag = 'scoped memory for tpu_custom_call.1']
    #allocation13 [shape = 'u8[65536]{0}', space=vmem, size = 0x10000, scoped, tag = 'input window, operand 11, single buffered']
    #allocation14 [shape = 'u8[65536]{0}', space=vmem, size = 0x10000, scoped, tag = 'input window, operand 13, single buffered']
    #allocation15 [shape = 's32[1]{0}', space=sflag, size = 0x4, scoped, tag = 'scoped memory for tpu_custom_call.1']
    #allocation16 [shape = 'u8[65536]{0}', space=vmem, size = 0x10000, scoped, tag = 'input window, operand 15, single buffered']
    #allocation17 [shape = 'u8[65536]{0}', space=vmem, size = 0x10000, scoped, tag = 'output window, operand 0']
    #allocation18 [shape = 'u8[65536]{0}', space=vmem, size = 0x10000, scoped, tag = 'output window, operand 1']
    #allocation19 [shape = 's32[2]{0}', space=sflag, size = 0x8, scoped, tag = 'scoped memory for tpu_custom_call.1']
    %24 = vsyncpa [#allocation3], 0
    %s25 = scalar_lea.sflag [#allocation3], 1
    %26 = vsyncpa %s25, 0
    %27 = vsyncpa [#allocation6], 0
    %28 = vsyncpa [#allocation9], 0
    %29 = vsyncpa [#allocation12], 0
    %30 = vsyncpa [#allocation15], 0
    %31 = vsyncpa [#allocation4], 0
    %s32 = scalar_lea.sflag [#allocation4], 1
    %33 = vsyncpa %s32, 0
    %34 = vsyncpa [#allocation19], 0
    %s35 = scalar_lea.sflag [#allocation19], 1
    %36 = vsyncpa %s35, 0
    loop: start=0, step=1, limit=4
    $region2: #{tpu_custom_call.1} parent=1 // loop_pre_header
      _
    $region3: #{tpu_custom_call.1} parent=1 // loop_header
      %s38 = sphi 0, %s42
      %p39 = scmp.ge.s32.totalorder %s38, 4
      %s48 = sphi 0, %s50
      %s51 = sphi 0, %s48
      %s52 = sphi 0, %s51
      %s68 = sphi 0, %s52
      %s72 = sphi 0, %s72
      %s74 = sphi 0, %s72
      %s75 = sphi 0, %s74
      %s89 = sphi 0, %s75
      %s93 = sphi 0, %s93
      %s95 = sphi 0, %s93
      %s96 = sphi 0, %s95
      %s110 = sphi 0, %s96
      %s114 = sphi 0, %s114
      %s116 = sphi 0, %s114
      %s117 = sphi 0, %s116
      %s131 = sphi 0, %s117
      %s135 = sphi 0, %s135
      %s137 = sphi 0, %s135
      %s138 = sphi 0, %s137
      %s152 = sphi 0, %s138
      %s156 = sphi 0, %s156
      %s158 = sphi 0, %s156
      %s159 = sphi 0, %s158
      %s173 = sphi 0, %s159
      %s177 = sphi 0, %s177
      %s179 = sphi 0, %s177
      %s180 = sphi 0, %s179
      %s194 = sphi 0, %s180
      %s198 = sphi 0, %s198
      %s200 = sphi 0, %s198
      %s201 = sphi 0, %s200
      %s215 = sphi 0, %s201
      %s219 = sphi 0, %s219
      %s221 = sphi 0, %s219
      %s222 = sphi 0, %s221
      %s236 = sphi 0, %s222
      %s240 = sphi 0, %s240
      %s242 = sphi 0, %s240
      %s243 = sphi 0, %s242
      %s257 = sphi 0, %s243
      %s261 = sphi 0, %s261
      %s263 = sphi 0, %s261
      %s264 = sphi 0, %s263
      %s278 = sphi 0, %s264
      %s282 = sphi 0, %s282
      %s284 = sphi 0, %s282
      %s285 = sphi 0, %s284
      %s299 = sphi 0, %s285
      %s303 = sphi 0, %s303
      %s305 = sphi 0, %s303
      %s306 = sphi 0, %s305
      %s320 = sphi 0, %s306
      %s324 = sphi 0, %s324
      %s326 = sphi 0, %s324
      %s327 = sphi 0, %s326
      %s341 = sphi 0, %s327
      %s345 = sphi 0, %s345
      %s347 = sphi 0, %s345
      %s348 = sphi 0, %s347
      %s362 = sphi 0, %s348
      %s366 = sphi 0, %s366
      %s368 = sphi 0, %s366
      %s369 = sphi 0, %s368
      %s383 = sphi 0, %s369
      %s387 = sphi 0, %s387
      %s389 = sphi 0, %s387
      %s390 = sphi 0, %s389
      %s404 = sphi 0, %s390
      %s410 = sphi 0, %s412
      %s413 = sphi 0, %s410
      %s414 = sphi 0, %s413
      %s430 = sphi 0, %s414
      %s436 = sphi 0, %s438
      %s439 = sphi 0, %s436
      %s440 = sphi 0, %s439
      %s456 = sphi 0, %s440
    $region4: #{tpu_custom_call.1} parent=1 // loop_header_branch
      %41 = sbr.rel (%p39) target = $region8
    $region5: #{tpu_custom_call.1} parent=1 // loop_body
      %s43 = ssub.s32 %s38, 1
      %s44 = ssub.s32 %s38, 2
      %s45 = sadd.s32 %s38, 1
      %s46 = ssub.s32 %s38, %s45
      %p47 = scmp.eq.s32.totalorder %s46, 0
      %s49 = sadd.s32 %s48, 1
      %s50 = scalar_select %p47, %s48, %s49
      %p53 = pneg %p47
      %p54 = scmp.eq.s32.totalorder %s38, 1
      %p55 = por %p53, %p54
      %p56 = scmp.ne.s32.totalorder %s48, %s51
      %p57 = scmp.eq.s32.totalorder %s38, 0
      %p58 = por %p56, %p57
      %p59 = scmp.ne.s32.totalorder %s48, %s51
      %p60 = scmp.eq.s32.totalorder %s43, 1
      %p61 = por %p59, %p60
      %p62 = scmp.ne.s32.totalorder %s51, %s52
      %p63 = scmp.eq.s32.totalorder %s43, 0
      %p64 = por %p62, %p63
      %p65 = scmp.ne.s32.totalorder %s51, %s52
      %p66 = scmp.eq.s32.totalorder %s44, 1
      %p67 = por %p65, %p66
      %p69 = scmp.ne.s32.totalorder %s52, %s68
      %p70 = scmp.eq.s32.totalorder %s44, 0
      %p71 = por %p69, %p70
      %s73 = sadd.s32 %s72, 1
      %p76 = scmp.eq.s32.totalorder %s38, 1
      %p77 = scmp.ne.s32.totalorder %s72, %s74
      %p78 = scmp.eq.s32.totalorder %s38, 0
      %p79 = por %p77, %p78
      %p80 = scmp.ne.s32.totalorder %s72, %s74
      %p81 = scmp.eq.s32.totalorder %s43, 1
      %p82 = por %p80, %p81
      %p83 = scmp.ne.s32.totalorder %s74, %s75
      %p84 = scmp.eq.s32.totalorder %s43, 0
      %p85 = por %p83, %p84
      %p86 = scmp.ne.s32.totalorder %s74, %s75
      %p87 = scmp.eq.s32.totalorder %s44, 1
      %p88 = por %p86, %p87
      %p90 = scmp.ne.s32.totalorder %s75, %s89
      %p91 = scmp.eq.s32.totalorder %s44, 0
      %p92 = por %p90, %p91
      %s94 = sadd.s32 %s93, 1
      %p97 = scmp.eq.s32.totalorder %s38, 1
      %p98 = scmp.ne.s32.totalorder %s93, %s95
      %p99 = scmp.eq.s32.totalorder %s38, 0
      %p100 = por %p98, %p99
      %p101 = scmp.ne.s32.totalorder %s93, %s95
      %p102 = scmp.eq.s32.totalorder %s43, 1
      %p103 = por %p101, %p102
      %p104 = scmp.ne.s32.totalorder %s95, %s96
      %p105 = scmp.eq.s32.totalorder %s43, 0
      %p106 = por %p104, %p105
      %p107 = scmp.ne.s32.totalorder %s95, %s96
      %p108 = scmp.eq.s32.totalorder %s44, 1
      %p109 = por %p107, %p108
      %p111 = scmp.ne.s32.totalorder %s96, %s110
      %p112 = scmp.eq.s32.totalorder %s44, 0
      %p113 = por %p111, %p112
      %s115 = sadd.s32 %s114, 1
      %p118 = scmp.eq.s32.totalorder %s38, 1
      %p119 = scmp.ne.s32.totalorder %s114, %s116
      %p120 = scmp.eq.s32.totalorder %s38, 0
      %p121 = por %p119, %p120
      %p122 = scmp.ne.s32.totalorder %s114, %s116
      %p123 = scmp.eq.s32.totalorder %s43, 1
      %p124 = por %p122, %p123
      %p125 = scmp.ne.s32.totalorder %s116, %s117
      %p126 = scmp.eq.s32.totalorder %s43, 0
      %p127 = por %p125, %p126
      %p128 = scmp.ne.s32.totalorder %s116, %s117
      %p129 = scmp.eq.s32.totalorder %s44, 1
      %p130 = por %p128, %p129
      %p132 = scmp.ne.s32.totalorder %s117, %s131
      %p133 = scmp.eq.s32.totalorder %s44, 0
      %p134 = por %p132, %p133
      %s136 = sadd.s32 %s135, 1
      %p139 = scmp.eq.s32.totalorder %s38, 1
      %p140 = scmp.ne.s32.totalorder %s135, %s137
      %p141 = scmp.eq.s32.totalorder %s38, 0
      %p142 = por %p140, %p141
      %p143 = scmp.ne.s32.totalorder %s135, %s137
      %p144 = scmp.eq.s32.totalorder %s43, 1
      %p145 = por %p143, %p144
      %p146 = scmp.ne.s32.totalorder %s137, %s138
      %p147 = scmp.eq.s32.totalorder %s43, 0
      %p148 = por %p146, %p147
      %p149 = scmp.ne.s32.totalorder %s137, %s138
      %p150 = scmp.eq.s32.totalorder %s44, 1
      %p151 = por %p149, %p150
      %p153 = scmp.ne.s32.totalorder %s138, %s152
      %p154 = scmp.eq.s32.totalorder %s44, 0
      %p155 = por %p153, %p154
      %s157 = sadd.s32 %s156, 1
      %p160 = scmp.eq.s32.totalorder %s38, 1
      %p161 = scmp.ne.s32.totalorder %s156, %s158
      %p162 = scmp.eq.s32.totalorder %s38, 0
      %p163 = por %p161, %p162
      %p164 = scmp.ne.s32.totalorder %s156, %s158
      %p165 = scmp.eq.s32.totalorder %s43, 1
      %p166 = por %p164, %p165
      %p167 = scmp.ne.s32.totalorder %s158, %s159
      %p168 = scmp.eq.s32.totalorder %s43, 0
      %p169 = por %p167, %p168
      %p170 = scmp.ne.s32.totalorder %s158, %s159
      %p171 = scmp.eq.s32.totalorder %s44, 1
      %p172 = por %p170, %p171
      %p174 = scmp.ne.s32.totalorder %s159, %s173
      %p175 = scmp.eq.s32.totalorder %s44, 0
      %p176 = por %p174, %p175
      %s178 = sadd.s32 %s177, 1
      %p181 = scmp.eq.s32.totalorder %s38, 1
      %p182 = scmp.ne.s32.totalorder %s177, %s179
      %p183 = scmp.eq.s32.totalorder %s38, 0
      %p184 = por %p182, %p183
      %p185 = scmp.ne.s32.totalorder %s177, %s179
      %p186 = scmp.eq.s32.totalorder %s43, 1
      %p187 = por %p185, %p186
      %p188 = scmp.ne.s32.totalorder %s179, %s180
      %p189 = scmp.eq.s32.totalorder %s43, 0
      %p190 = por %p188, %p189
      %p191 = scmp.ne.s32.totalorder %s179, %s180
      %p192 = scmp.eq.s32.totalorder %s44, 1
      %p193 = por %p191, %p192
      %p195 = scmp.ne.s32.totalorder %s180, %s194
      %p196 = scmp.eq.s32.totalorder %s44, 0
      %p197 = por %p195, %p196
      %s199 = sadd.s32 %s198, 1
      %p202 = scmp.eq.s32.totalorder %s38, 1
      %p203 = scmp.ne.s32.totalorder %s198, %s200
      %p204 = scmp.eq.s32.totalorder %s38, 0
      %p205 = por %p203, %p204
      %p206 = scmp.ne.s32.totalorder %s198, %s200
      %p207 = scmp.eq.s32.totalorder %s43, 1
      %p208 = por %p206, %p207
      %p209 = scmp.ne.s32.totalorder %s200, %s201
      %p210 = scmp.eq.s32.totalorder %s43, 0
      %p211 = por %p209, %p210
      %p212 = scmp.ne.s32.totalorder %s200, %s201
      %p213 = scmp.eq.s32.totalorder %s44, 1
      %p214 = por %p212, %p213
      %p216 = scmp.ne.s32.totalorder %s201, %s215
      %p217 = scmp.eq.s32.totalorder %s44, 0
      %p218 = por %p216, %p217
      %s220 = sadd.s32 %s219, 1
      %p223 = scmp.eq.s32.totalorder %s38, 1
      %p224 = scmp.ne.s32.totalorder %s219, %s221
      %p225 = scmp.eq.s32.totalorder %s38, 0
      %p226 = por %p224, %p225
      %p227 = scmp.ne.s32.totalorder %s219, %s221
      %p228 = scmp.eq.s32.totalorder %s43, 1
      %p229 = por %p227, %p228
      %p230 = scmp.ne.s32.totalorder %s221, %s222
      %p231 = scmp.eq.s32.totalorder %s43, 0
      %p232 = por %p230, %p231
      %p233 = scmp.ne.s32.totalorder %s221, %s222
      %p234 = scmp.eq.s32.totalorder %s44, 1
      %p235 = por %p233, %p234
      %p237 = scmp.ne.s32.totalorder %s222, %s236
      %p238 = scmp.eq.s32.totalorder %s44, 0
      %p239 = por %p237, %p238
      %s241 = sadd.s32 %s240, 1
      %p244 = scmp.eq.s32.totalorder %s38, 1
      %p245 = scmp.ne.s32.totalorder %s240, %s242
      %p246 = scmp.eq.s32.totalorder %s38, 0
      %p247 = por %p245, %p246
      %p248 = scmp.ne.s32.totalorder %s240, %s242
      %p249 = scmp.eq.s32.totalorder %s43, 1
      %p250 = por %p248, %p249
      %p251 = scmp.ne.s32.totalorder %s242, %s243
      %p252 = scmp.eq.s32.totalorder %s43, 0
      %p253 = por %p251, %p252
      %p254 = scmp.ne.s32.totalorder %s242, %s243
      %p255 = scmp.eq.s32.totalorder %s44, 1
      %p256 = por %p254, %p255
      %p258 = scmp.ne.s32.totalorder %s243, %s257
      %p259 = scmp.eq.s32.totalorder %s44, 0
      %p260 = por %p258, %p259
      %s262 = sadd.s32 %s261, 1
      %p265 = scmp.eq.s32.totalorder %s38, 1
      %p266 = scmp.ne.s32.totalorder %s261, %s263
      %p267 = scmp.eq.s32.totalorder %s38, 0
      %p268 = por %p266, %p267
      %p269 = scmp.ne.s32.totalorder %s261, %s263
      %p270 = scmp.eq.s32.totalorder %s43, 1
      %p271 = por %p269, %p270
      %p272 = scmp.ne.s32.totalorder %s263, %s264
      %p273 = scmp.eq.s32.totalorder %s43, 0
      %p274 = por %p272, %p273
      %p275 = scmp.ne.s32.totalorder %s263, %s264
      %p276 = scmp.eq.s32.totalorder %s44, 1
      %p277 = por %p275, %p276
      %p279 = scmp.ne.s32.totalorder %s264, %s278
      %p280 = scmp.eq.s32.totalorder %s44, 0
      %p281 = por %p279, %p280
      %s283 = sadd.s32 %s282, 1
      %p286 = scmp.eq.s32.totalorder %s38, 1
      %p287 = scmp.ne.s32.totalorder %s282, %s284
      %p288 = scmp.eq.s32.totalorder %s38, 0
      %p289 = por %p287, %p288
      %p290 = scmp.ne.s32.totalorder %s282, %s284
      %p291 = scmp.eq.s32.totalorder %s43, 1
      %p292 = por %p290, %p291
      %p293 = scmp.ne.s32.totalorder %s284, %s285
      %p294 = scmp.eq.s32.totalorder %s43, 0
      %p295 = por %p293, %p294
      %p296 = scmp.ne.s32.totalorder %s284, %s285
      %p297 = scmp.eq.s32.totalorder %s44, 1
      %p298 = por %p296, %p297
      %p300 = scmp.ne.s32.totalorder %s285, %s299
      %p301 = scmp.eq.s32.totalorder %s44, 0
      %p302 = por %p300, %p301
      %s304 = sadd.s32 %s303, 1
      %p307 = scmp.eq.s32.totalorder %s38, 1
      %p308 = scmp.ne.s32.totalorder %s303, %s305
      %p309 = scmp.eq.s32.totalorder %s38, 0
      %p310 = por %p308, %p309
      %p311 = scmp.ne.s32.totalorder %s303, %s305
      %p312 = scmp.eq.s32.totalorder %s43, 1
      %p313 = por %p311, %p312
      %p314 = scmp.ne.s32.totalorder %s305, %s306
      %p315 = scmp.eq.s32.totalorder %s43, 0
      %p316 = por %p314, %p315
      %p317 = scmp.ne.s32.totalorder %s305, %s306
      %p318 = scmp.eq.s32.totalorder %s44, 1
      %p319 = por %p317, %p318
      %p321 = scmp.ne.s32.totalorder %s306, %s320
      %p322 = scmp.eq.s32.totalorder %s44, 0
      %p323 = por %p321, %p322
      %s325 = sadd.s32 %s324, 1
      %p328 = scmp.eq.s32.totalorder %s38, 1
      %p329 = scmp.ne.s32.totalorder %s324, %s326
      %p330 = scmp.eq.s32.totalorder %s38, 0
      %p331 = por %p329, %p330
      %p332 = scmp.ne.s32.totalorder %s324, %s326
      %p333 = scmp.eq.s32.totalorder %s43, 1
      %p334 = por %p332, %p333
      %p335 = scmp.ne.s32.totalorder %s326, %s327
      %p336 = scmp.eq.s32.totalorder %s43, 0
      %p337 = por %p335, %p336
      %p338 = scmp.ne.s32.totalorder %s326, %s327
      %p339 = scmp.eq.s32.totalorder %s44, 1
      %p340 = por %p338, %p339
      %p342 = scmp.ne.s32.totalorder %s327, %s341
      %p343 = scmp.eq.s32.totalorder %s44, 0
      %p344 = por %p342, %p343
      %s346 = sadd.s32 %s345, 1
      %p349 = scmp.eq.s32.totalorder %s38, 1
      %p350 = scmp.ne.s32.totalorder %s345, %s347
      %p351 = scmp.eq.s32.totalorder %s38, 0
      %p352 = por %p350, %p351
      %p353 = scmp.ne.s32.totalorder %s345, %s347
      %p354 = scmp.eq.s32.totalorder %s43, 1
      %p355 = por %p353, %p354
      %p356 = scmp.ne.s32.totalorder %s347, %s348
      %p357 = scmp.eq.s32.totalorder %s43, 0
      %p358 = por %p356, %p357
      %p359 = scmp.ne.s32.totalorder %s347, %s348
      %p360 = scmp.eq.s32.totalorder %s44, 1
      %p361 = por %p359, %p360
      %p363 = scmp.ne.s32.totalorder %s348, %s362
      %p364 = scmp.eq.s32.totalorder %s44, 0
      %p365 = por %p363, %p364
      %s367 = sadd.s32 %s366, 1
      %p370 = scmp.eq.s32.totalorder %s38, 1
      %p371 = scmp.ne.s32.totalorder %s366, %s368
      %p372 = scmp.eq.s32.totalorder %s38, 0
      %p373 = por %p371, %p372
      %p374 = scmp.ne.s32.totalorder %s366, %s368
      %p375 = scmp.eq.s32.totalorder %s43, 1
      %p376 = por %p374, %p375
      %p377 = scmp.ne.s32.totalorder %s368, %s369
      %p378 = scmp.eq.s32.totalorder %s43, 0
      %p379 = por %p377, %p378
      %p380 = scmp.ne.s32.totalorder %s368, %s369
      %p381 = scmp.eq.s32.totalorder %s44, 1
      %p382 = por %p380, %p381
      %p384 = scmp.ne.s32.totalorder %s369, %s383
      %p385 = scmp.eq.s32.totalorder %s44, 0
      %p386 = por %p384, %p385
      %s388 = sadd.s32 %s387, 1
      %p391 = scmp.eq.s32.totalorder %s38, 1
      %p392 = scmp.ne.s32.totalorder %s387, %s389
      %p393 = scmp.eq.s32.totalorder %s38, 0
      %p394 = por %p392, %p393
      %p395 = scmp.ne.s32.totalorder %s387, %s389
      %p396 = scmp.eq.s32.totalorder %s43, 1
      %p397 = por %p395, %p396
      %p398 = scmp.ne.s32.totalorder %s389, %s390
      %p399 = scmp.eq.s32.totalorder %s43, 0
      %p400 = por %p398, %p399
      %p401 = scmp.ne.s32.totalorder %s389, %s390
      %p402 = scmp.eq.s32.totalorder %s44, 1
      %p403 = por %p401, %p402
      %p405 = scmp.ne.s32.totalorder %s390, %s404
      %p406 = scmp.eq.s32.totalorder %s44, 0
      %p407 = por %p405, %p406
      %s408 = ssub.s32 %s38, %s45
      %p409 = scmp.eq.s32.totalorder %s408, 0
      %s411 = sadd.s32 %s410, 1
      %s412 = scalar_select %p409, %s410, %s411
      %p415 = pneg %p409
      %p416 = scmp.eq.s32.totalorder %s38, 1
      %p417 = por %p415, %p416
      %p418 = scmp.ne.s32.totalorder %s410, %s413
      %p419 = scmp.eq.s32.totalorder %s38, 0
      %p420 = por %p418, %p419
      %p421 = scmp.ne.s32.totalorder %s410, %s413
      %p422 = scmp.eq.s32.totalorder %s43, 1
      %p423 = por %p421, %p422
      %p424 = scmp.ne.s32.totalorder %s413, %s414
      %p425 = scmp.eq.s32.totalorder %s43, 0
      %p426 = por %p424, %p425
      %p427 = scmp.ne.s32.totalorder %s413, %s414
      %p428 = scmp.eq.s32.totalorder %s44, 1
      %p429 = por %p427, %p428
      %p431 = scmp.ne.s32.totalorder %s414, %s430
      %p432 = scmp.eq.s32.totalorder %s44, 0
      %p433 = por %p431, %p432
      %s434 = ssub.s32 %s38, %s45
      %p435 = scmp.eq.s32.totalorder %s434, 0
      %s437 = sadd.s32 %s436, 1
      %s438 = scalar_select %p435, %s436, %s437
      %p441 = pneg %p435
      %p442 = scmp.eq.s32.totalorder %s38, 1
      %p443 = por %p441, %p442
      %p444 = scmp.ne.s32.totalorder %s436, %s439
      %p445 = scmp.eq.s32.totalorder %s38, 0
      %p446 = por %p444, %p445
      %p447 = scmp.ne.s32.totalorder %s436, %s439
      %p448 = scmp.eq.s32.totalorder %s43, 1
      %p449 = por %p447, %p448
      %p450 = scmp.ne.s32.totalorder %s439, %s440
      %p451 = scmp.eq.s32.totalorder %s43, 0
      %p452 = por %p450, %p451
      %p453 = scmp.ne.s32.totalorder %s439, %s440
      %p454 = scmp.eq.s32.totalorder %s44, 1
      %p455 = por %p453, %p454
      %p457 = scmp.ne.s32.totalorder %s440, %s456
      %p458 = scmp.eq.s32.totalorder %s44, 0
      %p459 = por %p457, %p458
      %p460 = scmp.le.s32.totalorder 1, %s38
      %p461 = scmp.lt.s32.totalorder %s38, 3
      %p462 = pnand %p460, %p461
      %p463 = pneg %p462
      // Predicated region
      $region9: #{tpu_custom_call.1} parent=5 // pred_check
        _
      $region10: #{tpu_custom_call.1} parent=5 // pred_check_branch
        %465 = sbr.rel (%p462) target = $region12
      $region11: #{tpu_custom_call.1} parent=5 // pred_region
        %s466 = ssub.s32 %s38, 1
        // Predicated region
        $region13: #{tpu_custom_call.1} parent=11 // pred_check
          %p467 = pneg %p85
        $region14: #{tpu_custom_call.1} parent=11 // pred_check_branch
          %469 = sbr.rel (%p467) target = $region16
        $region15: #{tpu_custom_call.1} parent=11 // pred_region
          %s471 = ssub.s32 2048, 2048
          %472 = vsyncadd [#allocation6], %s471
          %s473 = sshll.u32 [#allocation5], 4
          %s474 = int_to_ptr.vmem [resolvable:$true] %s473
          %479 = dma.hbm_to_vmem [thread:$0]  %s1, 2048, %s474, [#allocation6], 128, 128, 8
        $region16: #{tpu_custom_call.1} parent=11 // pred_fallthru
          _
        // Predicated region
        $region17: #{tpu_custom_call.1} parent=11 // pred_check
          %p480 = pneg %p106
        $region18: #{tpu_custom_call.1} parent=11 // pred_check_branch
          %482 = sbr.rel (%p480) target = $region20
        $region19: #{tpu_custom_call.1} parent=11 // pred_region
          _
        $region20: #{tpu_custom_call.1} parent=11 // pred_fallthru
          _
        // Predicated region
        $region21: #{tpu_custom_call.1} parent=11 // pred_check
          %p483 = pneg %p127
        $region22: #{tpu_custom_call.1} parent=11 // pred_check_branch
          %485 = sbr.rel (%p483) target = $region24
        $region23: #{tpu_custom_call.1} parent=11 // pred_region
          %s487 = ssub.s32 2048, 2048
          %488 = vsyncadd [#allocation6], %s487
          %s489 = sshll.u32 [#allocation7], 4
          %s490 = int_to_ptr.vmem [resolvable:$true] %s489
          %495 = dma.hbm_to_vmem [thread:$0]  %s3, 2048, %s490, [#allocation6], 128, 128, 8
        $region24: #{tpu_custom_call.1} parent=11 // pred_fallthru
          _
        // Predicated region
        $region25: #{tpu_custom_call.1} parent=11 // pred_check
          %p496 = pneg %p148
        $region26: #{tpu_custom_call.1} parent=11 // pred_check_branch
          %498 = sbr.rel (%p496) target = $region28
        $region27: #{tpu_custom_call.1} parent=11 // pred_region
          _
        $region28: #{tpu_custom_call.1} parent=11 // pred_fallthru
          _
        // Predicated region
        $region29: #{tpu_custom_call.1} parent=11 // pred_check
          %p499 = pneg %p169
        $region30: #{tpu_custom_call.1} parent=11 // pred_check_branch
          %501 = sbr.rel (%p499) target = $region32
        $region31: #{tpu_custom_call.1} parent=11 // pred_region
          %s503 = ssub.s32 2048, 2048
          %504 = vsyncadd [#allocation9], %s503
          %s505 = sshll.u32 [#allocation8], 4
          %s506 = int_to_ptr.vmem [resolvable:$true] %s505
          %511 = dma.hbm_to_vmem [thread:$0]  %s5, 2048, %s506, [#allocation9], 128, 128, 8
        $region32: #{tpu_custom_call.1} parent=11 // pred_fallthru
          _
        // Predicated region
        $region33: #{tpu_custom_call.1} parent=11 // pred_check
          %p512 = pneg %p190
        $region34: #{tpu_custom_call.1} parent=11 // pred_check_branch
          %514 = sbr.rel (%p512) target = $region36
        $region35: #{tpu_custom_call.1} parent=11 // pred_region
          _
        $region36: #{tpu_custom_call.1} parent=11 // pred_fallthru
          _
        // Predicated region
        $region37: #{tpu_custom_call.1} parent=11 // pred_check
          %p515 = pneg %p211
        $region38: #{tpu_custom_call.1} parent=11 // pred_check_branch
          %517 = sbr.rel (%p515) target = $region40
        $region39: #{tpu_custom_call.1} parent=11 // pred_region
          %s519 = ssub.s32 2048, 2048
          %520 = vsyncadd [#allocation9], %s519
          %s521 = sshll.u32 [#allocation10], 4
          %s522 = int_to_ptr.vmem [resolvable:$true] %s521
          %527 = dma.hbm_to_vmem [thread:$0]  %s7, 2048, %s522, [#allocation9], 128, 128, 8
        $region40: #{tpu_custom_call.1} parent=11 // pred_fallthru
          _
        // Predicated region
        $region41: #{tpu_custom_call.1} parent=11 // pred_check
          %p528 = pneg %p232
        $region42: #{tpu_custom_call.1} parent=11 // pred_check_branch
          %530 = sbr.rel (%p528) target = $region44
        $region43: #{tpu_custom_call.1} parent=11 // pred_region
          _
        $region44: #{tpu_custom_call.1} parent=11 // pred_fallthru
          _
        // Predicated region
        $region45: #{tpu_custom_call.1} parent=11 // pred_check
          %p531 = pneg %p253
        $region46: #{tpu_custom_call.1} parent=11 // pred_check_branch
          %533 = sbr.rel (%p531) target = $region48
        $region47: #{tpu_custom_call.1} parent=11 // pred_region
          %s535 = ssub.s32 2048, 2048
          %536 = vsyncadd [#allocation12], %s535
          %s537 = sshll.u32 [#allocation11], 4
          %s538 = int_to_ptr.vmem [resolvable:$true] %s537
          %543 = dma.hbm_to_vmem [thread:$0]  %s9, 2048, %s538, [#allocation12], 128, 128, 8
        $region48: #{tpu_custom_call.1} parent=11 // pred_fallthru
          _
        // Predicated region
        $region49: #{tpu_custom_call.1} parent=11 // pred_check
          %p544 = pneg %p274
        $region50: #{tpu_custom_call.1} parent=11 // pred_check_branch
          %546 = sbr.rel (%p544) target = $region52
        $region51: #{tpu_custom_call.1} parent=11 // pred_region
          _
        $region52: #{tpu_custom_call.1} parent=11 // pred_fallthru
          _
        // Predicated region
        $region53: #{tpu_custom_call.1} parent=11 // pred_check
          %p547 = pneg %p295
        $region54: #{tpu_custom_call.1} parent=11 // pred_check_branch
          %549 = sbr.rel (%p547) target = $region56
        $region55: #{tpu_custom_call.1} parent=11 // pred_region
          %s551 = ssub.s32 2048, 2048
          %552 = vsyncadd [#allocation12], %s551
          %s553 = sshll.u32 [#allocation13], 4
          %s554 = int_to_ptr.vmem [resolvable:$true] %s553
          %559 = dma.hbm_to_vmem [thread:$0]  %s11, 2048, %s554, [#allocation12], 128, 128, 8
        $region56: #{tpu_custom_call.1} parent=11 // pred_fallthru
          _
        // Predicated region
        $region57: #{tpu_custom_call.1} parent=11 // pred_check
          %p560 = pneg %p316
        $region58: #{tpu_custom_call.1} parent=11 // pred_check_branch
          %562 = sbr.rel (%p560) target = $region60
        $region59: #{tpu_custom_call.1} parent=11 // pred_region
          _
        $region60: #{tpu_custom_call.1} parent=11 // pred_fallthru
          _
        // Predicated region
        $region61: #{tpu_custom_call.1} parent=11 // pred_check
          %p563 = pneg %p337
        $region62: #{tpu_custom_call.1} parent=11 // pred_check_branch
          %565 = sbr.rel (%p563) target = $region64
        $region63: #{tpu_custom_call.1} parent=11 // pred_region
          %s567 = ssub.s32 2048, 2048
          %568 = vsyncadd [#allocation15], %s567
          %s569 = sshll.u32 [#allocation14], 4
          %s570 = int_to_ptr.vmem [resolvable:$true] %s569
          %575 = dma.hbm_to_vmem [thread:$0]  %s13, 2048, %s570, [#allocation15], 128, 128, 8
        $region64: #{tpu_custom_call.1} parent=11 // pred_fallthru
          _
        // Predicated region
        $region65: #{tpu_custom_call.1} parent=11 // pred_check
          %p576 = pneg %p358
        $region66: #{tpu_custom_call.1} parent=11 // pred_check_branch
          %578 = sbr.rel (%p576) target = $region68
        $region67: #{tpu_custom_call.1} parent=11 // pred_region
          _
        $region68: #{tpu_custom_call.1} parent=11 // pred_fallthru
          _
        // Predicated region
        $region69: #{tpu_custom_call.1} parent=11 // pred_check
          %p579 = pneg %p379
        $region70: #{tpu_custom_call.1} parent=11 // pred_check_branch
          %581 = sbr.rel (%p579) target = $region72
        $region71: #{tpu_custom_call.1} parent=11 // pred_region
          %s583 = ssub.s32 2048, 2048
          %584 = vsyncadd [#allocation15], %s583
          %s585 = sshll.u32 [#allocation16], 4
          %s586 = int_to_ptr.vmem [resolvable:$true] %s585
          %591 = dma.hbm_to_vmem [thread:$0]  %s15, 2048, %s586, [#allocation15], 128, 128, 8
        $region72: #{tpu_custom_call.1} parent=11 // pred_fallthru
          _
        // Predicated region
        $region73: #{tpu_custom_call.1} parent=11 // pred_check
          %p592 = pneg %p400
        $region74: #{tpu_custom_call.1} parent=11 // pred_check_branch
          %594 = sbr.rel (%p592) target = $region76
        $region75: #{tpu_custom_call.1} parent=11 // pred_region
          _
        $region76: #{tpu_custom_call.1} parent=11 // pred_fallthru
          _
      $region12: #{tpu_custom_call.1} parent=5 // pred_fallthru
        _
      %p595 = scmp.lt.s32.totalorder %s38, 2
      // Predicated region
      $region77: #{tpu_custom_call.1} parent=5 // pred_check
        %p596 = pneg %p595
      $region78: #{tpu_custom_call.1} parent=5 // pred_check_branch
        %598 = sbr.rel (%p596) target = $region80
      $region79: #{tpu_custom_call.1} parent=5 // pred_region
        // Predicated region
        $region81: #{tpu_custom_call.1} parent=79 // pred_check
          %p599 = pneg %p58
        $region82: #{tpu_custom_call.1} parent=79 // pred_check_branch
          %601 = sbr.rel (%p599) target = $region84
        $region83: #{tpu_custom_call.1} parent=79 // pred_region
          %s602 = sand.u32 %s48, 1
          %s603 = scalar_lea.sflag [#allocation3], %s602
          %s604 = sand.u32 %s48, 1
          %s605 = smul.addr %s604, 64
          %s606 = scalar_lea.vmem [#allocation2], %s605
          %s607 = smul.u32 8, %s38
          %s609 = ssub.s32 1024, 1024
          %610 = vsyncadd %s603, %s609
          %s611 = smul.addr %s607, 128
          %s612 = scalar_lea.hbm %s0, %s611
          %s613 = sshll.u32 %s606, 4
          %s614 = int_to_ptr.vmem [resolvable:$true] %s613
          %619 = dma.hbm_to_vmem [thread:$0]  %s612, 1024, %s614, %s603, 128, 128, 8
        $region84: #{tpu_custom_call.1} parent=79 // pred_fallthru
          _
      $region80: #{tpu_custom_call.1} parent=5 // pred_fallthru
        _
      %p620 = scmp.le.s32.totalorder 1, %s38
      %p621 = scmp.lt.s32.totalorder %s38, 3
      %p622 = pnand %p620, %p621
      %p623 = pneg %p622
      // Predicated region
      $region85: #{tpu_custom_call.1} parent=5 // pred_check
        _
      $region86: #{tpu_custom_call.1} parent=5 // pred_check_branch
        %625 = sbr.rel (%p622) target = $region88
      $region87: #{tpu_custom_call.1} parent=5 // pred_region
        %s626 = ssub.s32 %s38, 1
        %s627 = sand.u32 %s51, 1
        %s628 = scalar_lea.sflag [#allocation3], %s627
        %s629 = sand.u32 %s51, 1
        %s630 = smul.addr %s629, 64
        %s631 = scalar_lea.vmem [#allocation2], %s630
        // Predicated region
        $region89: #{tpu_custom_call.1} parent=87 // pred_check
          %p632 = pneg %p64
        $region90: #{tpu_custom_call.1} parent=87 // pred_check_branch
          %634 = sbr.rel (%p632) target = $region92
        $region91: #{tpu_custom_call.1} parent=87 // pred_region
          %635 = dma.done %s628, 1024
        $region92: #{tpu_custom_call.1} parent=87 // pred_fallthru
          _
        // Predicated region
        $region93: #{tpu_custom_call.1} parent=87 // pred_check
          %p636 = pneg %p85
        $region94: #{tpu_custom_call.1} parent=87 // pred_check_branch
          %638 = sbr.rel (%p636) target = $region96
        $region95: #{tpu_custom_call.1} parent=87 // pred_region
          %639 = dma.done [#allocation6], 2048
        $region96: #{tpu_custom_call.1} parent=87 // pred_fallthru
          _
        // Predicated region
        $region97: #{tpu_custom_call.1} parent=87 // pred_check
          %p640 = pneg %p127
        $region98: #{tpu_custom_call.1} parent=87 // pred_check_branch
          %642 = sbr.rel (%p640) target = $region100
        $region99: #{tpu_custom_call.1} parent=87 // pred_region
          %643 = dma.done [#allocation6], 2048
        $region100: #{tpu_custom_call.1} parent=87 // pred_fallthru
          _
        // Predicated region
        $region101: #{tpu_custom_call.1} parent=87 // pred_check
          %p644 = pneg %p169
        $region102: #{tpu_custom_call.1} parent=87 // pred_check_branch
          %646 = sbr.rel (%p644) target = $region104
        $region103: #{tpu_custom_call.1} parent=87 // pred_region
          %647 = dma.done [#allocation9], 2048
        $region104: #{tpu_custom_call.1} parent=87 // pred_fallthru
          _
        // Predicated region
        $region105: #{tpu_custom_call.1} parent=87 // pred_check
          %p648 = pneg %p211
        $region106: #{tpu_custom_call.1} parent=87 // pred_check_branch
          %650 = sbr.rel (%p648) target = $region108
        $region107: #{tpu_custom_call.1} parent=87 // pred_region
          %651 = dma.done [#allocation9], 2048
        $region108: #{tpu_custom_call.1} parent=87 // pred_fallthru
          _
        // Predicated region
        $region109: #{tpu_custom_call.1} parent=87 // pred_check
          %p652 = pneg %p253
        $region110: #{tpu_custom_call.1} parent=87 // pred_check_branch
          %654 = sbr.rel (%p652) target = $region112
        $region111: #{tpu_custom_call.1} parent=87 // pred_region
          %655 = dma.done [#allocation12], 2048
        $region112: #{tpu_custom_call.1} parent=87 // pred_fallthru
          _
        // Predicated region
        $region113: #{tpu_custom_call.1} parent=87 // pred_check
          %p656 = pneg %p295
        $region114: #{tpu_custom_call.1} parent=87 // pred_check_branch
          %658 = sbr.rel (%p656) target = $region116
        $region115: #{tpu_custom_call.1} parent=87 // pred_region
          %659 = dma.done [#allocation12], 2048
        $region116: #{tpu_custom_call.1} parent=87 // pred_fallthru
          _
        // Predicated region
        $region117: #{tpu_custom_call.1} parent=87 // pred_check
          %p660 = pneg %p337
        $region118: #{tpu_custom_call.1} parent=87 // pred_check_branch
          %662 = sbr.rel (%p660) target = $region120
        $region119: #{tpu_custom_call.1} parent=87 // pred_region
          %663 = dma.done [#allocation15], 2048
        $region120: #{tpu_custom_call.1} parent=87 // pred_fallthru
          _
        // Predicated region
        $region121: #{tpu_custom_call.1} parent=87 // pred_check
          %p664 = pneg %p379
        $region122: #{tpu_custom_call.1} parent=87 // pred_check_branch
          %666 = sbr.rel (%p664) target = $region124
        $region123: #{tpu_custom_call.1} parent=87 // pred_region
          %667 = dma.done [#allocation15], 2048
        $region124: #{tpu_custom_call.1} parent=87 // pred_fallthru
          _
        %s668 = sand.u32 %s51, 1
        %s669 = scalar_lea.sflag [#allocation3], %s668
        %s670 = sand.u32 %s51, 1
        %s671 = smul.addr %s670, 64
        %s672 = scalar_lea.vmem [#allocation2], %s671
        %p673 = pneg %p64
        %p674 = pneg %p61
        %p675 = pneg %p85
        %p676 = pneg %p82
        %p677 = pneg %p106
        %p678 = pneg %p103
        %p679 = pneg %p127
        %p680 = pneg %p124
        %p681 = pneg %p148
        %p682 = pneg %p145
        %p683 = pneg %p169
        %p684 = pneg %p166
        %p685 = pneg %p190
        %p686 = pneg %p187
        %p687 = pneg %p211
        %p688 = pneg %p208
        %p689 = pneg %p232
        %p690 = pneg %p229
        %p691 = pneg %p253
        %p692 = pneg %p250
        %p693 = pneg %p274
        %p694 = pneg %p271
        %p695 = pneg %p295
        %p696 = pneg %p292
        %p697 = pneg %p316
        %p698 = pneg %p313
        %p699 = pneg %p337
        %p700 = pneg %p334
        %p701 = pneg %p358
        %p702 = pneg %p355
        %p703 = pneg %p379
        %p704 = pneg %p376
        %p705 = pneg %p400
        %p706 = pneg %p397
        %p707 = pneg %p426
        %p708 = pneg %p423
        %s709 = sand.u32 %s413, 1
        %s710 = scalar_lea.sflag [#allocation4], %s709
        %s711 = sand.u32 %s413, 1
        %s712 = smul.addr %s711, 64
        %s713 = scalar_lea.vmem [#allocation17], %s712
        %p714 = pneg %p452
        %p715 = pneg %p449
        %s716 = sand.u32 %s439, 1
        %s717 = scalar_lea.sflag [#allocation19], %s716
        %s718 = sand.u32 %s439, 1
        %s719 = smul.addr %s718, 64
        %s720 = scalar_lea.vmem [#allocation18], %s719
        %s721 = smul.u32 8, %s43
        %s722 = smul.u32 8, %s43
        %s723 = smul.u32 8, %s43
        %v724 = vld [vmem:[%s631] sm:$0xff]
        %v725 = vld [vmem:[%s631 + $0x8] sm:$0xff]
        %v726 = vld [vmem:[%s631 + $0x10] sm:$0xff]
        %v727 = vld [vmem:[%s631 + $0x18] sm:$0xff]
        %v728 = vld [vmem:[%s631 + $0x20] sm:$0xff]
        %v729 = vld [vmem:[%s631 + $0x28] sm:$0xff]
        %v730 = vld [vmem:[%s631 + $0x30] sm:$0xff]
        %v731 = vld [vmem:[%s631 + $0x38] sm:$0xff]
        %v732 = vld [vmem:[#allocation5] sm:$0xff]
        %v733 = vld [vmem:[#allocation5 + $0x8] sm:$0xff]
        %v734 = vld [vmem:[#allocation5 + $0x10] sm:$0xff]
        %v735 = vld [vmem:[#allocation5 + $0x18] sm:$0xff]
        %v736 = vld [vmem:[#allocation5 + $0x20] sm:$0xff]
        %v737 = vld [vmem:[#allocation5 + $0x28] sm:$0xff]
        %v738 = vld [vmem:[#allocation5 + $0x30] sm:$0xff]
        %v739 = vld [vmem:[#allocation5 + $0x38] sm:$0xff]
        %v740 = vld [vmem:[#allocation5 + $0x40] sm:$0xff]
        %v741 = vld [vmem:[#allocation5 + $0x48] sm:$0xff]
        %v742 = vld [vmem:[#allocation5 + $0x50] sm:$0xff]
        %v743 = vld [vmem:[#allocation5 + $0x58] sm:$0xff]
        %v744 = vld [vmem:[#allocation5 + $0x60] sm:$0xff]
        %v745 = vld [vmem:[#allocation5 + $0x68] sm:$0xff]
        %v746 = vld [vmem:[#allocation5 + $0x70] sm:$0xff]
        %v747 = vld [vmem:[#allocation5 + $0x78] sm:$0xff]
        %v748 = vld [vmem:[%s2] sm:$0x1]
        %v750 = vlaneseq
        %v751 = vshrl.u32 %v750, 7
        %v752 = vsub.s32 0, %v751
        %v753 = vrot.slane %v748, %v752
        %755 = vmatprep.subr.mxu0 0.0
        %756 = vmatpush1.msra.mxu0 %v747
        %757 = vmatprep.subr.mxu0 0.0
        %758 = vmatpush1.msra.mxu0 %v746
        %759 = vmatprep.subr.mxu0 0.0
        %760 = vmatpush1.msra.mxu0 %v745
        %761 = vmatprep.subr.mxu0 0.0
        %762 = vmatpush1.msra.mxu0 %v744
        %763 = vmatprep.subr.mxu0 0.0
        %764 = vmatpush1.msra.mxu0 %v743
        %765 = vmatprep.subr.mxu0 0.0
        %766 = vmatpush1.msra.mxu0 %v742
        %767 = vmatprep.subr.mxu0 0.0
        %768 = vmatpush1.msra.mxu0 %v741
        %769 = vmatprep.subr.mxu0 0.0
        %770 = vmatpush1.msra.mxu0 %v740
        %771 = vmatprep.subr.mxu0 0.0
        %772 = vmatpush1.msra.mxu0 %v739
        %773 = vmatprep.subr.mxu0 0.0
        %774 = vmatpush1.msra.mxu0 %v738
        %775 = vmatprep.subr.mxu0 0.0
        %776 = vmatpush1.msra.mxu0 %v737
        %777 = vmatprep.subr.mxu0 0.0
        %778 = vmatpush1.msra.mxu0 %v736
        %779 = vmatprep.subr.mxu0 0.0
        %780 = vmatpush1.msra.mxu0 %v735
        %781 = vmatprep.subr.mxu0 0.0
        %782 = vmatpush1.msra.mxu0 %v734
        %783 = vmatprep.subr.mxu0 0.0
        %784 = vmatpush1.msra.mxu0 %v733
        %785 = vmatprep.subr.mxu0 0.0
        %786 = vmatpush1.msra.mxu0 %v732
        %787 = vmatprep.subr.mxu0 0.0
        %788 = vmatpush2.msra.mxu0 0.0
        %789 = vmatprep.subr.mxu0 0.0
        %790 = vmatpush2.msra.mxu0 0.0
        %791 = vmatprep.subr.mxu0 0.0
        %792 = vmatpush2.msra.mxu0 0.0
        %793 = vmatprep.subr.mxu0 0.0
        %794 = vmatpush2.msra.mxu0 0.0
        %795 = vmatprep.subr.mxu0 0.0
        %796 = vmatpush2.msra.mxu0 0.0
        %797 = vmatprep.subr.mxu0 0.0
        %798 = vmatpush2.msra.mxu0 0.0
        %799 = vmatprep.subr.mxu0 0.0
        %800 = vmatpush2.msra.mxu0 0.0
        %801 = vmatprep.subr.mxu0 0.0
        %802 = vmatpush2.msra.mxu0 0.0
        %803 = vmatprep.subr.mxu0 0.0
        %804 = vmatpush2.msra.mxu0 0.0
        %805 = vmatprep.subr.mxu0 0.0
        %806 = vmatpush2.msra.mxu0 0.0
        %807 = vmatprep.subr.mxu0 0.0
        %808 = vmatpush2.msra.mxu0 0.0
        %809 = vmatprep.subr.mxu0 0.0
        %810 = vmatpush2.msra.mxu0 0.0
        %811 = vmatprep.subr.mxu0 0.0
        %812 = vmatpush2.msra.mxu0 0.0
        %813 = vmatprep.subr.mxu0 0.0
        %814 = vmatpush2.msra.mxu0 0.0
        %815 = vmatprep.subr.mxu0 0.0
        %816 = vmatpush2.msra.mxu0 0.0
        %817 = vmatprep.subr.mxu0 0.0
        %818 = vmatpush2.msra.mxu0 0.0
        %819 = vmatprep.mubr.f32.mxu0 0.0
        %820 = vmatmul.mubr.f32.gmra.mxu0 %v724
        %v821 = vpop.f32.mrf.mxu0
        %v822 = vadd.f32 %v753, %v821
        %v823 = vpop.f32.mrf.mxu0
        %824 = vmatprep.mubr.f32.mxu0 0.0
        %825 = vmatmul.mubr.f32.gmra.mxu0 %v725
        %v826 = vpop.f32.mrf.mxu0
        %v827 = vadd.f32 %v753, %v826
        %v828 = vpop.f32.mrf.mxu0
        %829 = vmatprep.mubr.f32.mxu0 0.0
        %830 = vmatmul.mubr.f32.gmra.mxu0 %v726
        %v831 = vpop.f32.mrf.mxu0
        %v832 = vadd.f32 %v753, %v831
        %v833 = vpop.f32.mrf.mxu0
        %834 = vmatprep.mubr.f32.mxu0 0.0
        %835 = vmatmul.mubr.f32.gmra.mxu0 %v727
        %v836 = vpop.f32.mrf.mxu0
        %v837 = vadd.f32 %v753, %v836
        %v838 = vpop.f32.mrf.mxu0
        %839 = vmatprep.mubr.f32.mxu0 0.0
        %840 = vmatmul.mubr.f32.gmra.mxu0 %v728
        %v841 = vpop.f32.mrf.mxu0
        %v842 = vadd.f32 %v753, %v841
        %v843 = vpop.f32.mrf.mxu0
        %844 = vmatprep.mubr.f32.mxu0 0.0
        %845 = vmatmul.mubr.f32.gmra.mxu0 %v729
        %v846 = vpop.f32.mrf.mxu0
        %v847 = vadd.f32 %v753, %v846
        %v848 = vpop.f32.mrf.mxu0
        %849 = vmatprep.mubr.f32.mxu0 0.0
        %850 = vmatmul.mubr.f32.gmra.mxu0 %v730
        %v851 = vpop.f32.mrf.mxu0
        %v852 = vadd.f32 %v753, %v851
        %v853 = vpop.f32.mrf.mxu0
        %854 = vmatprep.mubr.f32.mxu0 0.0
        %855 = vmatmul.mubr.f32.gmra.mxu0 %v731
        %v856 = vpop.f32.mrf.mxu0
        %v857 = vadd.f32 %v753, %v856
        %v858 = vpop.f32.mrf.mxu0
        %859 = vdwg.mxu0
        %v860 = vmax.f32 %v822, 0.0
        %v861 = vmax.f32 %v827, 0.0
        %v862 = vmax.f32 %v832, 0.0
        %v863 = vmax.f32 %v837, 0.0
        %v864 = vmax.f32 %v842, 0.0
        %v865 = vmax.f32 %v847, 0.0
        %v866 = vmax.f32 %v852, 0.0
        %v867 = vmax.f32 %v857, 0.0
        %v868 = vld [vmem:[#allocation7] sm:$0xff]
        %v869 = vld [vmem:[#allocation7 + $0x8] sm:$0xff]
        %v870 = vld [vmem:[#allocation7 + $0x10] sm:$0xff]
        %v871 = vld [vmem:[#allocation7 + $0x18] sm:$0xff]
        %v872 = vld [vmem:[#allocation7 + $0x20] sm:$0xff]
        %v873 = vld [vmem:[#allocation7 + $0x28] sm:$0xff]
        %v874 = vld [vmem:[#allocation7 + $0x30] sm:$0xff]
        %v875 = vld [vmem:[#allocation7 + $0x38] sm:$0xff]
        %v876 = vld [vmem:[#allocation7 + $0x40] sm:$0xff]
        %v877 = vld [vmem:[#allocation7 + $0x48] sm:$0xff]
        %v878 = vld [vmem:[#allocation7 + $0x50] sm:$0xff]
        %v879 = vld [vmem:[#allocation7 + $0x58] sm:$0xff]
        %v880 = vld [vmem:[#allocation7 + $0x60] sm:$0xff]
        %v881 = vld [vmem:[#allocation7 + $0x68] sm:$0xff]
        %v882 = vld [vmem:[#allocation7 + $0x70] sm:$0xff]
        %v883 = vld [vmem:[#allocation7 + $0x78] sm:$0xff]
        %v884 = vld [vmem:[%s4] sm:$0x1]
        %v886 = vlaneseq
        %v887 = vshrl.u32 %v886, 7
        %v888 = vsub.s32 0, %v887
        %v889 = vrot.slane %v884, %v888
        %891 = vmatprep.subr.mxu0 0.0
        %892 = vmatpush1.msra.mxu0 %v883
        %893 = vmatprep.subr.mxu0 0.0
        %894 = vmatpush1.msra.mxu0 %v882
        %895 = vmatprep.subr.mxu0 0.0
        %896 = vmatpush1.msra.mxu0 %v881
        %897 = vmatprep.subr.mxu0 0.0
        %898 = vmatpush1.msra.mxu0 %v880
        %899 = vmatprep.subr.mxu0 0.0
        %900 = vmatpush1.msra.mxu0 %v879
        %901 = vmatprep.subr.mxu0 0.0
        %902 = vmatpush1.msra.mxu0 %v878
        %903 = vmatprep.subr.mxu0 0.0
        %904 = vmatpush1.msra.mxu0 %v877
        %905 = vmatprep.subr.mxu0 0.0
        %906 = vmatpush1.msra.mxu0 %v876
        %907 = vmatprep.subr.mxu0 0.0
        %908 = vmatpush1.msra.mxu0 %v875
        %909 = vmatprep.subr.mxu0 0.0
        %910 = vmatpush1.msra.mxu0 %v874
        %911 = vmatprep.subr.mxu0 0.0
        %912 = vmatpush1.msra.mxu0 %v873
        %913 = vmatprep.subr.mxu0 0.0
        %914 = vmatpush1.msra.mxu0 %v872
        %915 = vmatprep.subr.mxu0 0.0
        %916 = vmatpush1.msra.mxu0 %v871
        %917 = vmatprep.subr.mxu0 0.0
        %918 = vmatpush1.msra.mxu0 %v870
        %919 = vmatprep.subr.mxu0 0.0
        %920 = vmatpush1.msra.mxu0 %v869
        %921 = vmatprep.subr.mxu0 0.0
        %922 = vmatpush1.msra.mxu0 %v868
        %923 = vmatprep.subr.mxu0 0.0
        %924 = vmatpush2.msra.mxu0 0.0
        %925 = vmatprep.subr.mxu0 0.0
        %926 = vmatpush2.msra.mxu0 0.0
        %927 = vmatprep.subr.mxu0 0.0
        %928 = vmatpush2.msra.mxu0 0.0
        %929 = vmatprep.subr.mxu0 0.0
        %930 = vmatpush2.msra.mxu0 0.0
        %931 = vmatprep.subr.mxu0 0.0
        %932 = vmatpush2.msra.mxu0 0.0
        %933 = vmatprep.subr.mxu0 0.0
        %934 = vmatpush2.msra.mxu0 0.0
        %935 = vmatprep.subr.mxu0 0.0
        %936 = vmatpush2.msra.mxu0 0.0
        %937 = vmatprep.subr.mxu0 0.0
        %938 = vmatpush2.msra.mxu0 0.0
        %939 = vmatprep.subr.mxu0 0.0
        %940 = vmatpush2.msra.mxu0 0.0
        %941 = vmatprep.subr.mxu0 0.0
        %942 = vmatpush2.msra.mxu0 0.0
        %943 = vmatprep.subr.mxu0 0.0
        %944 = vmatpush2.msra.mxu0 0.0
        %945 = vmatprep.subr.mxu0 0.0
        %946 = vmatpush2.msra.mxu0 0.0
        %947 = vmatprep.subr.mxu0 0.0
        %948 = vmatpush2.msra.mxu0 0.0
        %949 = vmatprep.subr.mxu0 0.0
        %950 = vmatpush2.msra.mxu0 0.0
        %951 = vmatprep.subr.mxu0 0.0
        %952 = vmatpush2.msra.mxu0 0.0
        %953 = vmatprep.subr.mxu0 0.0
        %954 = vmatpush2.msra.mxu0 0.0
        %955 = vmatprep.mubr.f32.mxu0 0.0
        %956 = vmatmul.mubr.f32.gmra.mxu0 %v860
        %v957 = vpop.f32.mrf.mxu0
        %v958 = vadd.f32 %v889, %v957
        %v959 = vpop.f32.mrf.mxu0
        %960 = vmatprep.mubr.f32.mxu0 0.0
        %961 = vmatmul.mubr.f32.gmra.mxu0 %v861
        %v962 = vpop.f32.mrf.mxu0
        %v963 = vadd.f32 %v889, %v962
        %v964 = vpop.f32.mrf.mxu0
        %965 = vmatprep.mubr.f32.mxu0 0.0
        %966 = vmatmul.mubr.f32.gmra.mxu0 %v862
        %v967 = vpop.f32.mrf.mxu0
        %v968 = vadd.f32 %v889, %v967
        %v969 = vpop.f32.mrf.mxu0
        %970 = vmatprep.mubr.f32.mxu0 0.0
        %971 = vmatmul.mubr.f32.gmra.mxu0 %v863
        %v972 = vpop.f32.mrf.mxu0
        %v973 = vadd.f32 %v889, %v972
        %v974 = vpop.f32.mrf.mxu0
        %975 = vmatprep.mubr.f32.mxu0 0.0
        %976 = vmatmul.mubr.f32.gmra.mxu0 %v864
        %v977 = vpop.f32.mrf.mxu0
        %v978 = vadd.f32 %v889, %v977
        %v979 = vpop.f32.mrf.mxu0
        %980 = vmatprep.mubr.f32.mxu0 0.0
        %981 = vmatmul.mubr.f32.gmra.mxu0 %v865
        %v982 = vpop.f32.mrf.mxu0
        %v983 = vadd.f32 %v889, %v982
        %v984 = vpop.f32.mrf.mxu0
        %985 = vmatprep.mubr.f32.mxu0 0.0
        %986 = vmatmul.mubr.f32.gmra.mxu0 %v866
        %v987 = vpop.f32.mrf.mxu0
        %v988 = vadd.f32 %v889, %v987
        %v989 = vpop.f32.mrf.mxu0
        %990 = vmatprep.mubr.f32.mxu0 0.0
        %991 = vmatmul.mubr.f32.gmra.mxu0 %v867
        %v992 = vpop.f32.mrf.mxu0
        %v993 = vadd.f32 %v889, %v992
        %v994 = vpop.f32.mrf.mxu0
        %995 = vdwg.mxu0
        %v996 = vmax.f32 %v958, 0.0
        %v997 = vmax.f32 %v963, 0.0
        %v998 = vmax.f32 %v968, 0.0
        %v999 = vmax.f32 %v973, 0.0
        %v1000 = vmax.f32 %v978, 0.0
        %v1001 = vmax.f32 %v983, 0.0
        %v1002 = vmax.f32 %v988, 0.0
        %v1003 = vmax.f32 %v993, 0.0
        %v1004 = vld [vmem:[#allocation8] sm:$0xff]
        %v1005 = vld [vmem:[#allocation8 + $0x8] sm:$0xff]
        %v1006 = vld [vmem:[#allocation8 + $0x10] sm:$0xff]
        %v1007 = vld [vmem:[#allocation8 + $0x18] sm:$0xff]
        %v1008 = vld [vmem:[#allocation8 + $0x20] sm:$0xff]
        %v1009 = vld [vmem:[#allocation8 + $0x28] sm:$0xff]
        %v1010 = vld [vmem:[#allocation8 + $0x30] sm:$0xff]
        %v1011 = vld [vmem:[#allocation8 + $0x38] sm:$0xff]
        %v1012 = vld [vmem:[#allocation8 + $0x40] sm:$0xff]
        %v1013 = vld [vmem:[#allocation8 + $0x48] sm:$0xff]
        %v1014 = vld [vmem:[#allocation8 + $0x50] sm:$0xff]
        %v1015 = vld [vmem:[#allocation8 + $0x58] sm:$0xff]
        %v1016 = vld [vmem:[#allocation8 + $0x60] sm:$0xff]
        %v1017 = vld [vmem:[#allocation8 + $0x68] sm:$0xff]
        %v1018 = vld [vmem:[#allocation8 + $0x70] sm:$0xff]
        %v1019 = vld [vmem:[#allocation8 + $0x78] sm:$0xff]
        %v1020 = vld [vmem:[%s6] sm:$0x1]
        %v1022 = vlaneseq
        %v1023 = vshrl.u32 %v1022, 7
        %v1024 = vsub.s32 0, %v1023
        %v1025 = vrot.slane %v1020, %v1024
        %1027 = vmatprep.subr.mxu0 0.0
        %1028 = vmatpush1.msra.mxu0 %v1019
        %1029 = vmatprep.subr.mxu0 0.0
        %1030 = vmatpush1.msra.mxu0 %v1018
        %1031 = vmatprep.subr.mxu0 0.0
        %1032 = vmatpush1.msra.mxu0 %v1017
        %1033 = vmatprep.subr.mxu0 0.0
        %1034 = vmatpush1.msra.mxu0 %v1016
        %1035 = vmatprep.subr.mxu0 0.0
        %1036 = vmatpush1.msra.mxu0 %v1015
        %1037 = vmatprep.subr.mxu0 0.0
        %1038 = vmatpush1.msra.mxu0 %v1014
        %1039 = vmatprep.subr.mxu0 0.0
        %1040 = vmatpush1.msra.mxu0 %v1013
        %1041 = vmatprep.subr.mxu0 0.0
        %1042 = vmatpush1.msra.mxu0 %v1012
        %1043 = vmatprep.subr.mxu0 0.0
        %1044 = vmatpush1.msra.mxu0 %v1011
        %1045 = vmatprep.subr.mxu0 0.0
        %1046 = vmatpush1.msra.mxu0 %v1010
        %1047 = vmatprep.subr.mxu0 0.0
        %1048 = vmatpush1.msra.mxu0 %v1009
        %1049 = vmatprep.subr.mxu0 0.0
        %1050 = vmatpush1.msra.mxu0 %v1008
        %1051 = vmatprep.subr.mxu0 0.0
        %1052 = vmatpush1.msra.mxu0 %v1007
        %1053 = vmatprep.subr.mxu0 0.0
        %1054 = vmatpush1.msra.mxu0 %v1006
        %1055 = vmatprep.subr.mxu0 0.0
        %1056 = vmatpush1.msra.mxu0 %v1005
        %1057 = vmatprep.subr.mxu0 0.0
        %1058 = vmatpush1.msra.mxu0 %v1004
        %1059 = vmatprep.subr.mxu0 0.0
        %1060 = vmatpush2.msra.mxu0 0.0
        %1061 = vmatprep.subr.mxu0 0.0
        %1062 = vmatpush2.msra.mxu0 0.0
        %1063 = vmatprep.subr.mxu0 0.0
        %1064 = vmatpush2.msra.mxu0 0.0
        %1065 = vmatprep.subr.mxu0 0.0
        %1066 = vmatpush2.msra.mxu0 0.0
        %1067 = vmatprep.subr.mxu0 0.0
        %1068 = vmatpush2.msra.mxu0 0.0
        %1069 = vmatprep.subr.mxu0 0.0
        %1070 = vmatpush2.msra.mxu0 0.0
        %1071 = vmatprep.subr.mxu0 0.0
        %1072 = vmatpush2.msra.mxu0 0.0
        %1073 = vmatprep.subr.mxu0 0.0
        %1074 = vmatpush2.msra.mxu0 0.0
        %1075 = vmatprep.subr.mxu0 0.0
        %1076 = vmatpush2.msra.mxu0 0.0
        %1077 = vmatprep.subr.mxu0 0.0
        %1078 = vmatpush2.msra.mxu0 0.0
        %1079 = vmatprep.subr.mxu0 0.0
        %1080 = vmatpush2.msra.mxu0 0.0
        %1081 = vmatprep.subr.mxu0 0.0
        %1082 = vmatpush2.msra.mxu0 0.0
        %1083 = vmatprep.subr.mxu0 0.0
        %1084 = vmatpush2.msra.mxu0 0.0
        %1085 = vmatprep.subr.mxu0 0.0
        %1086 = vmatpush2.msra.mxu0 0.0
        %1087 = vmatprep.subr.mxu0 0.0
        %1088 = vmatpush2.msra.mxu0 0.0
        %1089 = vmatprep.subr.mxu0 0.0
        %1090 = vmatpush2.msra.mxu0 0.0
        %1091 = vmatprep.mubr.f32.mxu0 0.0
        %1092 = vmatmul.mubr.f32.gmra.mxu0 %v996
        %v1093 = vpop.f32.mrf.mxu0
        %v1094 = vadd.f32 %v1025, %v1093
        %v1095 = vpop.f32.mrf.mxu0
        %1096 = vmatprep.mubr.f32.mxu0 0.0
        %1097 = vmatmul.mubr.f32.gmra.mxu0 %v997
        %v1098 = vpop.f32.mrf.mxu0
        %v1099 = vadd.f32 %v1025, %v1098
        %v1100 = vpop.f32.mrf.mxu0
        %1101 = vmatprep.mubr.f32.mxu0 0.0
        %1102 = vmatmul.mubr.f32.gmra.mxu0 %v998
        %v1103 = vpop.f32.mrf.mxu0
        %v1104 = vadd.f32 %v1025, %v1103
        %v1105 = vpop.f32.mrf.mxu0
        %1106 = vmatprep.mubr.f32.mxu0 0.0
        %1107 = vmatmul.mubr.f32.gmra.mxu0 %v999
        %v1108 = vpop.f32.mrf.mxu0
        %v1109 = vadd.f32 %v1025, %v1108
        %v1110 = vpop.f32.mrf.mxu0
        %1111 = vmatprep.mubr.f32.mxu0 0.0
        %1112 = vmatmul.mubr.f32.gmra.mxu0 %v1000
        %v1113 = vpop.f32.mrf.mxu0
        %v1114 = vadd.f32 %v1025, %v1113
        %v1115 = vpop.f32.mrf.mxu0
        %1116 = vmatprep.mubr.f32.mxu0 0.0
        %1117 = vmatmul.mubr.f32.gmra.mxu0 %v1001
        %v1118 = vpop.f32.mrf.mxu0
        %v1119 = vadd.f32 %v1025, %v1118
        %v1120 = vpop.f32.mrf.mxu0
        %1121 = vmatprep.mubr.f32.mxu0 0.0
        %1122 = vmatmul.mubr.f32.gmra.mxu0 %v1002
        %v1123 = vpop.f32.mrf.mxu0
        %v1124 = vadd.f32 %v1025, %v1123
        %v1125 = vpop.f32.mrf.mxu0
        %1126 = vmatprep.mubr.f32.mxu0 0.0
        %1127 = vmatmul.mubr.f32.gmra.mxu0 %v1003
        %v1128 = vpop.f32.mrf.mxu0
        %v1129 = vadd.f32 %v1025, %v1128
        %v1130 = vpop.f32.mrf.mxu0
        %1131 = vdwg.mxu0
        %v1132 = vmax.f32 %v1094, 0.0
        %v1133 = vmax.f32 %v1099, 0.0
        %v1134 = vmax.f32 %v1104, 0.0
        %v1135 = vmax.f32 %v1109, 0.0
        %v1136 = vmax.f32 %v1114, 0.0
        %v1137 = vmax.f32 %v1119, 0.0
        %v1138 = vmax.f32 %v1124, 0.0
        %v1139 = vmax.f32 %v1129, 0.0
        %v1140 = vld [vmem:[#allocation10] sm:$0xff]
        %v1141 = vld [vmem:[#allocation10 + $0x8] sm:$0xff]
        %v1142 = vld [vmem:[#allocation10 + $0x10] sm:$0xff]
        %v1143 = vld [vmem:[#allocation10 + $0x18] sm:$0xff]
        %v1144 = vld [vmem:[#allocation10 + $0x20] sm:$0xff]
        %v1145 = vld [vmem:[#allocation10 + $0x28] sm:$0xff]
        %v1146 = vld [vmem:[#allocation10 + $0x30] sm:$0xff]
        %v1147 = vld [vmem:[#allocation10 + $0x38] sm:$0xff]
        %v1148 = vld [vmem:[#allocation10 + $0x40] sm:$0xff]
        %v1149 = vld [vmem:[#allocation10 + $0x48] sm:$0xff]
        %v1150 = vld [vmem:[#allocation10 + $0x50] sm:$0xff]
        %v1151 = vld [vmem:[#allocation10 + $0x58] sm:$0xff]
        %v1152 = vld [vmem:[#allocation10 + $0x60] sm:$0xff]
        %v1153 = vld [vmem:[#allocation10 + $0x68] sm:$0xff]
        %v1154 = vld [vmem:[#allocation10 + $0x70] sm:$0xff]
        %v1155 = vld [vmem:[#allocation10 + $0x78] sm:$0xff]
        %v1156 = vld [vmem:[%s8] sm:$0x1]
        %v1158 = vlaneseq
        %v1159 = vshrl.u32 %v1158, 7
        %v1160 = vsub.s32 0, %v1159
        %v1161 = vrot.slane %v1156, %v1160
        %1163 = vmatprep.subr.mxu0 0.0
        %1164 = vmatpush1.msra.mxu0 %v1155
        %1165 = vmatprep.subr.mxu0 0.0
        %1166 = vmatpush1.msra.mxu0 %v1154
        %1167 = vmatprep.subr.mxu0 0.0
        %1168 = vmatpush1.msra.mxu0 %v1153
        %1169 = vmatprep.subr.mxu0 0.0
        %1170 = vmatpush1.msra.mxu0 %v1152
        %1171 = vmatprep.subr.mxu0 0.0
        %1172 = vmatpush1.msra.mxu0 %v1151
        %1173 = vmatprep.subr.mxu0 0.0
        %1174 = vmatpush1.msra.mxu0 %v1150
        %1175 = vmatprep.subr.mxu0 0.0
        %1176 = vmatpush1.msra.mxu0 %v1149
        %1177 = vmatprep.subr.mxu0 0.0
        %1178 = vmatpush1.msra.mxu0 %v1148
        %1179 = vmatprep.subr.mxu0 0.0
        %1180 = vmatpush1.msra.mxu0 %v1147
        %1181 = vmatprep.subr.mxu0 0.0
        %1182 = vmatpush1.msra.mxu0 %v1146
        %1183 = vmatprep.subr.mxu0 0.0
        %1184 = vmatpush1.msra.mxu0 %v1145
        %1185 = vmatprep.subr.mxu0 0.0
        %1186 = vmatpush1.msra.mxu0 %v1144
        %1187 = vmatprep.subr.mxu0 0.0
        %1188 = vmatpush1.msra.mxu0 %v1143
        %1189 = vmatprep.subr.mxu0 0.0
        %1190 = vmatpush1.msra.mxu0 %v1142
        %1191 = vmatprep.subr.mxu0 0.0
        %1192 = vmatpush1.msra.mxu0 %v1141
        %1193 = vmatprep.subr.mxu0 0.0
        %1194 = vmatpush1.msra.mxu0 %v1140
        %1195 = vmatprep.subr.mxu0 0.0
        %1196 = vmatpush2.msra.mxu0 0.0
        %1197 = vmatprep.subr.mxu0 0.0
        %1198 = vmatpush2.msra.mxu0 0.0
        %1199 = vmatprep.subr.mxu0 0.0
        %1200 = vmatpush2.msra.mxu0 0.0
        %1201 = vmatprep.subr.mxu0 0.0
        %1202 = vmatpush2.msra.mxu0 0.0
        %1203 = vmatprep.subr.mxu0 0.0
        %1204 = vmatpush2.msra.mxu0 0.0
        %1205 = vmatprep.subr.mxu0 0.0
        %1206 = vmatpush2.msra.mxu0 0.0
        %1207 = vmatprep.subr.mxu0 0.0
        %1208 = vmatpush2.msra.mxu0 0.0
        %1209 = vmatprep.subr.mxu0 0.0
        %1210 = vmatpush2.msra.mxu0 0.0
        %1211 = vmatprep.subr.mxu0 0.0
        %1212 = vmatpush2.msra.mxu0 0.0
        %1213 = vmatprep.subr.mxu0 0.0
        %1214 = vmatpush2.msra.mxu0 0.0
        %1215 = vmatprep.subr.mxu0 0.0
        %1216 = vmatpush2.msra.mxu0 0.0
        %1217 = vmatprep.subr.mxu0 0.0
        %1218 = vmatpush2.msra.mxu0 0.0
        %1219 = vmatprep.subr.mxu0 0.0
        %1220 = vmatpush2.msra.mxu0 0.0
        %1221 = vmatprep.subr.mxu0 0.0
        %1222 = vmatpush2.msra.mxu0 0.0
        %1223 = vmatprep.subr.mxu0 0.0
        %1224 = vmatpush2.msra.mxu0 0.0
        %1225 = vmatprep.subr.mxu0 0.0
        %1226 = vmatpush2.msra.mxu0 0.0
        %1227 = vmatprep.mubr.f32.mxu0 0.0
        %1228 = vmatmul.mubr.f32.gmra.mxu0 %v1132
        %v1229 = vpop.f32.mrf.mxu0
        %v1230 = vadd.f32 %v1161, %v1229
        %v1231 = vpop.f32.mrf.mxu0
        %1232 = vmatprep.mubr.f32.mxu0 0.0
        %1233 = vmatmul.mubr.f32.gmra.mxu0 %v1133
        %v1234 = vpop.f32.mrf.mxu0
        %v1235 = vadd.f32 %v1161, %v1234
        %v1236 = vpop.f32.mrf.mxu0
        %1237 = vmatprep.mubr.f32.mxu0 0.0
        %1238 = vmatmul.mubr.f32.gmra.mxu0 %v1134
        %v1239 = vpop.f32.mrf.mxu0
        %v1240 = vadd.f32 %v1161, %v1239
        %v1241 = vpop.f32.mrf.mxu0
        %1242 = vmatprep.mubr.f32.mxu0 0.0
        %1243 = vmatmul.mubr.f32.gmra.mxu0 %v1135
        %v1244 = vpop.f32.mrf.mxu0
        %v1245 = vadd.f32 %v1161, %v1244
        %v1246 = vpop.f32.mrf.mxu0
        %1247 = vmatprep.mubr.f32.mxu0 0.0
        %1248 = vmatmul.mubr.f32.gmra.mxu0 %v1136
        %v1249 = vpop.f32.mrf.mxu0
        %v1250 = vadd.f32 %v1161, %v1249
        %v1251 = vpop.f32.mrf.mxu0
        %1252 = vmatprep.mubr.f32.mxu0 0.0
        %1253 = vmatmul.mubr.f32.gmra.mxu0 %v1137
        %v1254 = vpop.f32.mrf.mxu0
        %v1255 = vadd.f32 %v1161, %v1254
        %v1256 = vpop.f32.mrf.mxu0
        %1257 = vmatprep.mubr.f32.mxu0 0.0
        %1258 = vmatmul.mubr.f32.gmra.mxu0 %v1138
        %v1259 = vpop.f32.mrf.mxu0
        %v1260 = vadd.f32 %v1161, %v1259
        %v1261 = vpop.f32.mrf.mxu0
        %1262 = vmatprep.mubr.f32.mxu0 0.0
        %1263 = vmatmul.mubr.f32.gmra.mxu0 %v1139
        %v1264 = vpop.f32.mrf.mxu0
        %v1265 = vadd.f32 %v1161, %v1264
        %v1266 = vpop.f32.mrf.mxu0
        %1267 = vdwg.mxu0
        %1268 = vst [vmem:[%s713] sm:$0xff] %v1230
        %1269 = vst [vmem:[%s713 + $0x8] sm:$0xff] %v1235
        %1270 = vst [vmem:[%s713 + $0x10] sm:$0xff] %v1240
        %1271 = vst [vmem:[%s713 + $0x18] sm:$0xff] %v1245
        %1272 = vst [vmem:[%s713 + $0x20] sm:$0xff] %v1250
        %1273 = vst [vmem:[%s713 + $0x28] sm:$0xff] %v1255
        %1274 = vst [vmem:[%s713 + $0x30] sm:$0xff] %v1260
        %1275 = vst [vmem:[%s713 + $0x38] sm:$0xff] %v1265
        %v1276 = vld [vmem:[#allocation11] sm:$0xff]
        %v1277 = vld [vmem:[#allocation11 + $0x8] sm:$0xff]
        %v1278 = vld [vmem:[#allocation11 + $0x10] sm:$0xff]
        %v1279 = vld [vmem:[#allocation11 + $0x18] sm:$0xff]
        %v1280 = vld [vmem:[#allocation11 + $0x20] sm:$0xff]
        %v1281 = vld [vmem:[#allocation11 + $0x28] sm:$0xff]
        %v1282 = vld [vmem:[#allocation11 + $0x30] sm:$0xff]
        %v1283 = vld [vmem:[#allocation11 + $0x38] sm:$0xff]
        %v1284 = vld [vmem:[#allocation11 + $0x40] sm:$0xff]
        %v1285 = vld [vmem:[#allocation11 + $0x48] sm:$0xff]
        %v1286 = vld [vmem:[#allocation11 + $0x50] sm:$0xff]
        %v1287 = vld [vmem:[#allocation11 + $0x58] sm:$0xff]
        %v1288 = vld [vmem:[#allocation11 + $0x60] sm:$0xff]
        %v1289 = vld [vmem:[#allocation11 + $0x68] sm:$0xff]
        %v1290 = vld [vmem:[#allocation11 + $0x70] sm:$0xff]
        %v1291 = vld [vmem:[#allocation11 + $0x78] sm:$0xff]
        %v1292 = vld [vmem:[%s10] sm:$0x1]
        %v1294 = vlaneseq
        %v1295 = vshrl.u32 %v1294, 7
        %v1296 = vsub.s32 0, %v1295
        %v1297 = vrot.slane %v1292, %v1296
        %1299 = vmatprep.subr.mxu0 0.0
        %1300 = vmatpush1.msra.mxu0 %v1291
        %1301 = vmatprep.subr.mxu0 0.0
        %1302 = vmatpush1.msra.mxu0 %v1290
        %1303 = vmatprep.subr.mxu0 0.0
        %1304 = vmatpush1.msra.mxu0 %v1289
        %1305 = vmatprep.subr.mxu0 0.0
        %1306 = vmatpush1.msra.mxu0 %v1288
        %1307 = vmatprep.subr.mxu0 0.0
        %1308 = vmatpush1.msra.mxu0 %v1287
        %1309 = vmatprep.subr.mxu0 0.0
        %1310 = vmatpush1.msra.mxu0 %v1286
        %1311 = vmatprep.subr.mxu0 0.0
        %1312 = vmatpush1.msra.mxu0 %v1285
        %1313 = vmatprep.subr.mxu0 0.0
        %1314 = vmatpush1.msra.mxu0 %v1284
        %1315 = vmatprep.subr.mxu0 0.0
        %1316 = vmatpush1.msra.mxu0 %v1283
        %1317 = vmatprep.subr.mxu0 0.0
        %1318 = vmatpush1.msra.mxu0 %v1282
        %1319 = vmatprep.subr.mxu0 0.0
        %1320 = vmatpush1.msra.mxu0 %v1281
        %1321 = vmatprep.subr.mxu0 0.0
        %1322 = vmatpush1.msra.mxu0 %v1280
        %1323 = vmatprep.subr.mxu0 0.0
        %1324 = vmatpush1.msra.mxu0 %v1279
        %1325 = vmatprep.subr.mxu0 0.0
        %1326 = vmatpush1.msra.mxu0 %v1278
        %1327 = vmatprep.subr.mxu0 0.0
        %1328 = vmatpush1.msra.mxu0 %v1277
        %1329 = vmatprep.subr.mxu0 0.0
        %1330 = vmatpush1.msra.mxu0 %v1276
        %1331 = vmatprep.subr.mxu0 0.0
        %1332 = vmatpush2.msra.mxu0 0.0
        %1333 = vmatprep.subr.mxu0 0.0
        %1334 = vmatpush2.msra.mxu0 0.0
        %1335 = vmatprep.subr.mxu0 0.0
        %1336 = vmatpush2.msra.mxu0 0.0
        %1337 = vmatprep.subr.mxu0 0.0
        %1338 = vmatpush2.msra.mxu0 0.0
        %1339 = vmatprep.subr.mxu0 0.0
        %1340 = vmatpush2.msra.mxu0 0.0
        %1341 = vmatprep.subr.mxu0 0.0
        %1342 = vmatpush2.msra.mxu0 0.0
        %1343 = vmatprep.subr.mxu0 0.0
        %1344 = vmatpush2.msra.mxu0 0.0
        %1345 = vmatprep.subr.mxu0 0.0
        %1346 = vmatpush2.msra.mxu0 0.0
        %1347 = vmatprep.subr.mxu0 0.0
        %1348 = vmatpush2.msra.mxu0 0.0
        %1349 = vmatprep.subr.mxu0 0.0
        %1350 = vmatpush2.msra.mxu0 0.0
        %1351 = vmatprep.subr.mxu0 0.0
        %1352 = vmatpush2.msra.mxu0 0.0
        %1353 = vmatprep.subr.mxu0 0.0
        %1354 = vmatpush2.msra.mxu0 0.0
        %1355 = vmatprep.subr.mxu0 0.0
        %1356 = vmatpush2.msra.mxu0 0.0
        %1357 = vmatprep.subr.mxu0 0.0
        %1358 = vmatpush2.msra.mxu0 0.0
        %1359 = vmatprep.subr.mxu0 0.0
        %1360 = vmatpush2.msra.mxu0 0.0
        %1361 = vmatprep.subr.mxu0 0.0
        %1362 = vmatpush2.msra.mxu0 0.0
        %1363 = vmatprep.mubr.f32.mxu0 0.0
        %1364 = vmatmul.mubr.f32.gmra.mxu0 %v1230
        %v1365 = vpop.f32.mrf.mxu0
        %v1366 = vadd.f32 %v1297, %v1365
        %v1367 = vpop.f32.mrf.mxu0
        %1368 = vmatprep.mubr.f32.mxu0 0.0
        %1369 = vmatmul.mubr.f32.gmra.mxu0 %v1235
        %v1370 = vpop.f32.mrf.mxu0
        %v1371 = vadd.f32 %v1297, %v1370
        %v1372 = vpop.f32.mrf.mxu0
        %1373 = vmatprep.mubr.f32.mxu0 0.0
        %1374 = vmatmul.mubr.f32.gmra.mxu0 %v1240
        %v1375 = vpop.f32.mrf.mxu0
        %v1376 = vadd.f32 %v1297, %v1375
        %v1377 = vpop.f32.mrf.mxu0
        %1378 = vmatprep.mubr.f32.mxu0 0.0
        %1379 = vmatmul.mubr.f32.gmra.mxu0 %v1245
        %v1380 = vpop.f32.mrf.mxu0
        %v1381 = vadd.f32 %v1297, %v1380
        %v1382 = vpop.f32.mrf.mxu0
        %1383 = vmatprep.mubr.f32.mxu0 0.0
        %1384 = vmatmul.mubr.f32.gmra.mxu0 %v1250
        %v1385 = vpop.f32.mrf.mxu0
        %v1386 = vadd.f32 %v1297, %v1385
        %v1387 = vpop.f32.mrf.mxu0
        %1388 = vmatprep.mubr.f32.mxu0 0.0
        %1389 = vmatmul.mubr.f32.gmra.mxu0 %v1255
        %v1390 = vpop.f32.mrf.mxu0
        %v1391 = vadd.f32 %v1297, %v1390
        %v1392 = vpop.f32.mrf.mxu0
        %1393 = vmatprep.mubr.f32.mxu0 0.0
        %1394 = vmatmul.mubr.f32.gmra.mxu0 %v1260
        %v1395 = vpop.f32.mrf.mxu0
        %v1396 = vadd.f32 %v1297, %v1395
        %v1397 = vpop.f32.mrf.mxu0
        %1398 = vmatprep.mubr.f32.mxu0 0.0
        %1399 = vmatmul.mubr.f32.gmra.mxu0 %v1265
        %v1400 = vpop.f32.mrf.mxu0
        %v1401 = vadd.f32 %v1297, %v1400
        %v1402 = vpop.f32.mrf.mxu0
        %1403 = vdwg.mxu0
        %v1404 = vmax.f32 %v1366, 0.0
        %v1405 = vmax.f32 %v1371, 0.0
        %v1406 = vmax.f32 %v1376, 0.0
        %v1407 = vmax.f32 %v1381, 0.0
        %v1408 = vmax.f32 %v1386, 0.0
        %v1409 = vmax.f32 %v1391, 0.0
        %v1410 = vmax.f32 %v1396, 0.0
        %v1411 = vmax.f32 %v1401, 0.0
        %v1412 = vld [vmem:[#allocation13] sm:$0xff]
        %v1413 = vld [vmem:[#allocation13 + $0x8] sm:$0xff]
        %v1414 = vld [vmem:[#allocation13 + $0x10] sm:$0xff]
        %v1415 = vld [vmem:[#allocation13 + $0x18] sm:$0xff]
        %v1416 = vld [vmem:[#allocation13 + $0x20] sm:$0xff]
        %v1417 = vld [vmem:[#allocation13 + $0x28] sm:$0xff]
        %v1418 = vld [vmem:[#allocation13 + $0x30] sm:$0xff]
        %v1419 = vld [vmem:[#allocation13 + $0x38] sm:$0xff]
        %v1420 = vld [vmem:[#allocation13 + $0x40] sm:$0xff]
        %v1421 = vld [vmem:[#allocation13 + $0x48] sm:$0xff]
        %v1422 = vld [vmem:[#allocation13 + $0x50] sm:$0xff]
        %v1423 = vld [vmem:[#allocation13 + $0x58] sm:$0xff]
        %v1424 = vld [vmem:[#allocation13 + $0x60] sm:$0xff]
        %v1425 = vld [vmem:[#allocation13 + $0x68] sm:$0xff]
        %v1426 = vld [vmem:[#allocation13 + $0x70] sm:$0xff]
        %v1427 = vld [vmem:[#allocation13 + $0x78] sm:$0xff]
        %v1428 = vld [vmem:[%s12] sm:$0x1]
        %v1430 = vlaneseq
        %v1431 = vshrl.u32 %v1430, 7
        %v1432 = vsub.s32 0, %v1431
        %v1433 = vrot.slane %v1428, %v1432
        %1435 = vmatprep.subr.mxu0 0.0
        %1436 = vmatpush1.msra.mxu0 %v1427
        %1437 = vmatprep.subr.mxu0 0.0
        %1438 = vmatpush1.msra.mxu0 %v1426
        %1439 = vmatprep.subr.mxu0 0.0
        %1440 = vmatpush1.msra.mxu0 %v1425
        %1441 = vmatprep.subr.mxu0 0.0
        %1442 = vmatpush1.msra.mxu0 %v1424
        %1443 = vmatprep.subr.mxu0 0.0
        %1444 = vmatpush1.msra.mxu0 %v1423
        %1445 = vmatprep.subr.mxu0 0.0
        %1446 = vmatpush1.msra.mxu0 %v1422
        %1447 = vmatprep.subr.mxu0 0.0
        %1448 = vmatpush1.msra.mxu0 %v1421
        %1449 = vmatprep.subr.mxu0 0.0
        %1450 = vmatpush1.msra.mxu0 %v1420
        %1451 = vmatprep.subr.mxu0 0.0
        %1452 = vmatpush1.msra.mxu0 %v1419
        %1453 = vmatprep.subr.mxu0 0.0
        %1454 = vmatpush1.msra.mxu0 %v1418
        %1455 = vmatprep.subr.mxu0 0.0
        %1456 = vmatpush1.msra.mxu0 %v1417
        %1457 = vmatprep.subr.mxu0 0.0
        %1458 = vmatpush1.msra.mxu0 %v1416
        %1459 = vmatprep.subr.mxu0 0.0
        %1460 = vmatpush1.msra.mxu0 %v1415
        %1461 = vmatprep.subr.mxu0 0.0
        %1462 = vmatpush1.msra.mxu0 %v1414
        %1463 = vmatprep.subr.mxu0 0.0
        %1464 = vmatpush1.msra.mxu0 %v1413
        %1465 = vmatprep.subr.mxu0 0.0
        %1466 = vmatpush1.msra.mxu0 %v1412
        %1467 = vmatprep.subr.mxu0 0.0
        %1468 = vmatpush2.msra.mxu0 0.0
        %1469 = vmatprep.subr.mxu0 0.0
        %1470 = vmatpush2.msra.mxu0 0.0
        %1471 = vmatprep.subr.mxu0 0.0
        %1472 = vmatpush2.msra.mxu0 0.0
        %1473 = vmatprep.subr.mxu0 0.0
        %1474 = vmatpush2.msra.mxu0 0.0
        %1475 = vmatprep.subr.mxu0 0.0
        %1476 = vmatpush2.msra.mxu0 0.0
        %1477 = vmatprep.subr.mxu0 0.0
        %1478 = vmatpush2.msra.mxu0 0.0
        %1479 = vmatprep.subr.mxu0 0.0
        %1480 = vmatpush2.msra.mxu0 0.0
        %1481 = vmatprep.subr.mxu0 0.0
        %1482 = vmatpush2.msra.mxu0 0.0
        %1483 = vmatprep.subr.mxu0 0.0
        %1484 = vmatpush2.msra.mxu0 0.0
        %1485 = vmatprep.subr.mxu0 0.0
        %1486 = vmatpush2.msra.mxu0 0.0
        %1487 = vmatprep.subr.mxu0 0.0
        %1488 = vmatpush2.msra.mxu0 0.0
        %1489 = vmatprep.subr.mxu0 0.0
        %1490 = vmatpush2.msra.mxu0 0.0
        %1491 = vmatprep.subr.mxu0 0.0
        %1492 = vmatpush2.msra.mxu0 0.0
        %1493 = vmatprep.subr.mxu0 0.0
        %1494 = vmatpush2.msra.mxu0 0.0
        %1495 = vmatprep.subr.mxu0 0.0
        %1496 = vmatpush2.msra.mxu0 0.0
        %1497 = vmatprep.subr.mxu0 0.0
        %1498 = vmatpush2.msra.mxu0 0.0
        %1499 = vmatprep.mubr.f32.mxu0 0.0
        %1500 = vmatmul.mubr.f32.gmra.mxu0 %v1404
        %v1501 = vpop.f32.mrf.mxu0
        %v1502 = vadd.f32 %v1433, %v1501
        %v1503 = vpop.f32.mrf.mxu0
        %1504 = vmatprep.mubr.f32.mxu0 0.0
        %1505 = vmatmul.mubr.f32.gmra.mxu0 %v1405
        %v1506 = vpop.f32.mrf.mxu0
        %v1507 = vadd.f32 %v1433, %v1506
        %v1508 = vpop.f32.mrf.mxu0
        %1509 = vmatprep.mubr.f32.mxu0 0.0
        %1510 = vmatmul.mubr.f32.gmra.mxu0 %v1406
        %v1511 = vpop.f32.mrf.mxu0
        %v1512 = vadd.f32 %v1433, %v1511
        %v1513 = vpop.f32.mrf.mxu0
        %1514 = vmatprep.mubr.f32.mxu0 0.0
        %1515 = vmatmul.mubr.f32.gmra.mxu0 %v1407
        %v1516 = vpop.f32.mrf.mxu0
        %v1517 = vadd.f32 %v1433, %v1516
        %v1518 = vpop.f32.mrf.mxu0
        %1519 = vmatprep.mubr.f32.mxu0 0.0
        %1520 = vmatmul.mubr.f32.gmra.mxu0 %v1408
        %v1521 = vpop.f32.mrf.mxu0
        %v1522 = vadd.f32 %v1433, %v1521
        %v1523 = vpop.f32.mrf.mxu0
        %1524 = vmatprep.mubr.f32.mxu0 0.0
        %1525 = vmatmul.mubr.f32.gmra.mxu0 %v1409
        %v1526 = vpop.f32.mrf.mxu0
        %v1527 = vadd.f32 %v1433, %v1526
        %v1528 = vpop.f32.mrf.mxu0
        %1529 = vmatprep.mubr.f32.mxu0 0.0
        %1530 = vmatmul.mubr.f32.gmra.mxu0 %v1410
        %v1531 = vpop.f32.mrf.mxu0
        %v1532 = vadd.f32 %v1433, %v1531
        %v1533 = vpop.f32.mrf.mxu0
        %1534 = vmatprep.mubr.f32.mxu0 0.0
        %1535 = vmatmul.mubr.f32.gmra.mxu0 %v1411
        %v1536 = vpop.f32.mrf.mxu0
        %v1537 = vadd.f32 %v1433, %v1536
        %v1538 = vpop.f32.mrf.mxu0
        %1539 = vdwg.mxu0
        %v1540 = vmax.f32 %v1502, 0.0
        %v1541 = vmax.f32 %v1507, 0.0
        %v1542 = vmax.f32 %v1512, 0.0
        %v1543 = vmax.f32 %v1517, 0.0
        %v1544 = vmax.f32 %v1522, 0.0
        %v1545 = vmax.f32 %v1527, 0.0
        %v1546 = vmax.f32 %v1532, 0.0
        %v1547 = vmax.f32 %v1537, 0.0
        %v1548 = vld [vmem:[#allocation14] sm:$0xff]
        %v1549 = vld [vmem:[#allocation14 + $0x8] sm:$0xff]
        %v1550 = vld [vmem:[#allocation14 + $0x10] sm:$0xff]
        %v1551 = vld [vmem:[#allocation14 + $0x18] sm:$0xff]
        %v1552 = vld [vmem:[#allocation14 + $0x20] sm:$0xff]
        %v1553 = vld [vmem:[#allocation14 + $0x28] sm:$0xff]
        %v1554 = vld [vmem:[#allocation14 + $0x30] sm:$0xff]
        %v1555 = vld [vmem:[#allocation14 + $0x38] sm:$0xff]
        %v1556 = vld [vmem:[#allocation14 + $0x40] sm:$0xff]
        %v1557 = vld [vmem:[#allocation14 + $0x48] sm:$0xff]
        %v1558 = vld [vmem:[#allocation14 + $0x50] sm:$0xff]
        %v1559 = vld [vmem:[#allocation14 + $0x58] sm:$0xff]
        %v1560 = vld [vmem:[#allocation14 + $0x60] sm:$0xff]
        %v1561 = vld [vmem:[#allocation14 + $0x68] sm:$0xff]
        %v1562 = vld [vmem:[#allocation14 + $0x70] sm:$0xff]
        %v1563 = vld [vmem:[#allocation14 + $0x78] sm:$0xff]
        %v1564 = vld [vmem:[%s14] sm:$0x1]
        %v1566 = vlaneseq
        %v1567 = vshrl.u32 %v1566, 7
        %v1568 = vsub.s32 0, %v1567
        %v1569 = vrot.slane %v1564, %v1568
        %1571 = vmatprep.subr.mxu0 0.0
        %1572 = vmatpush1.msra.mxu0 %v1563
        %1573 = vmatprep.subr.mxu0 0.0
        %1574 = vmatpush1.msra.mxu0 %v1562
        %1575 = vmatprep.subr.mxu0 0.0
        %1576 = vmatpush1.msra.mxu0 %v1561
        %1577 = vmatprep.subr.mxu0 0.0
        %1578 = vmatpush1.msra.mxu0 %v1560
        %1579 = vmatprep.subr.mxu0 0.0
        %1580 = vmatpush1.msra.mxu0 %v1559
        %1581 = vmatprep.subr.mxu0 0.0
        %1582 = vmatpush1.msra.mxu0 %v1558
        %1583 = vmatprep.subr.mxu0 0.0
        %1584 = vmatpush1.msra.mxu0 %v1557
        %1585 = vmatprep.subr.mxu0 0.0
        %1586 = vmatpush1.msra.mxu0 %v1556
        %1587 = vmatprep.subr.mxu0 0.0
        %1588 = vmatpush1.msra.mxu0 %v1555
        %1589 = vmatprep.subr.mxu0 0.0
        %1590 = vmatpush1.msra.mxu0 %v1554
        %1591 = vmatprep.subr.mxu0 0.0
        %1592 = vmatpush1.msra.mxu0 %v1553
        %1593 = vmatprep.subr.mxu0 0.0
        %1594 = vmatpush1.msra.mxu0 %v1552
        %1595 = vmatprep.subr.mxu0 0.0
        %1596 = vmatpush1.msra.mxu0 %v1551
        %1597 = vmatprep.subr.mxu0 0.0
        %1598 = vmatpush1.msra.mxu0 %v1550
        %1599 = vmatprep.subr.mxu0 0.0
        %1600 = vmatpush1.msra.mxu0 %v1549
        %1601 = vmatprep.subr.mxu0 0.0
        %1602 = vmatpush1.msra.mxu0 %v1548
        %1603 = vmatprep.subr.mxu0 0.0
        %1604 = vmatpush2.msra.mxu0 0.0
        %1605 = vmatprep.subr.mxu0 0.0
        %1606 = vmatpush2.msra.mxu0 0.0
        %1607 = vmatprep.subr.mxu0 0.0
        %1608 = vmatpush2.msra.mxu0 0.0
        %1609 = vmatprep.subr.mxu0 0.0
        %1610 = vmatpush2.msra.mxu0 0.0
        %1611 = vmatprep.subr.mxu0 0.0
        %1612 = vmatpush2.msra.mxu0 0.0
        %1613 = vmatprep.subr.mxu0 0.0
        %1614 = vmatpush2.msra.mxu0 0.0
        %1615 = vmatprep.subr.mxu0 0.0
        %1616 = vmatpush2.msra.mxu0 0.0
        %1617 = vmatprep.subr.mxu0 0.0
        %1618 = vmatpush2.msra.mxu0 0.0
        %1619 = vmatprep.subr.mxu0 0.0
        %1620 = vmatpush2.msra.mxu0 0.0
        %1621 = vmatprep.subr.mxu0 0.0
        %1622 = vmatpush2.msra.mxu0 0.0
        %1623 = vmatprep.subr.mxu0 0.0
        %1624 = vmatpush2.msra.mxu0 0.0
        %1625 = vmatprep.subr.mxu0 0.0
        %1626 = vmatpush2.msra.mxu0 0.0
        %1627 = vmatprep.subr.mxu0 0.0
        %1628 = vmatpush2.msra.mxu0 0.0
        %1629 = vmatprep.subr.mxu0 0.0
        %1630 = vmatpush2.msra.mxu0 0.0
        %1631 = vmatprep.subr.mxu0 0.0
        %1632 = vmatpush2.msra.mxu0 0.0
        %1633 = vmatprep.subr.mxu0 0.0
        %1634 = vmatpush2.msra.mxu0 0.0
        %1635 = vmatprep.mubr.f32.mxu0 0.0
        %1636 = vmatmul.mubr.f32.gmra.mxu0 %v1540
        %v1637 = vpop.f32.mrf.mxu0
        %v1638 = vadd.f32 %v1569, %v1637
        %v1639 = vpop.f32.mrf.mxu0
        %1640 = vmatprep.mubr.f32.mxu0 0.0
        %1641 = vmatmul.mubr.f32.gmra.mxu0 %v1541
        %v1642 = vpop.f32.mrf.mxu0
        %v1643 = vadd.f32 %v1569, %v1642
        %v1644 = vpop.f32.mrf.mxu0
        %1645 = vmatprep.mubr.f32.mxu0 0.0
        %1646 = vmatmul.mubr.f32.gmra.mxu0 %v1542
        %v1647 = vpop.f32.mrf.mxu0
        %v1648 = vadd.f32 %v1569, %v1647
        %v1649 = vpop.f32.mrf.mxu0
        %1650 = vmatprep.mubr.f32.mxu0 0.0
        %1651 = vmatmul.mubr.f32.gmra.mxu0 %v1543
        %v1652 = vpop.f32.mrf.mxu0
        %v1653 = vadd.f32 %v1569, %v1652
        %v1654 = vpop.f32.mrf.mxu0
        %1655 = vmatprep.mubr.f32.mxu0 0.0
        %1656 = vmatmul.mubr.f32.gmra.mxu0 %v1544
        %v1657 = vpop.f32.mrf.mxu0
        %v1658 = vadd.f32 %v1569, %v1657
        %v1659 = vpop.f32.mrf.mxu0
        %1660 = vmatprep.mubr.f32.mxu0 0.0
        %1661 = vmatmul.mubr.f32.gmra.mxu0 %v1545
        %v1662 = vpop.f32.mrf.mxu0
        %v1663 = vadd.f32 %v1569, %v1662
        %v1664 = vpop.f32.mrf.mxu0
        %1665 = vmatprep.mubr.f32.mxu0 0.0
        %1666 = vmatmul.mubr.f32.gmra.mxu0 %v1546
        %v1667 = vpop.f32.mrf.mxu0
        %v1668 = vadd.f32 %v1569, %v1667
        %v1669 = vpop.f32.mrf.mxu0
        %1670 = vmatprep.mubr.f32.mxu0 0.0
        %1671 = vmatmul.mubr.f32.gmra.mxu0 %v1547
        %v1672 = vpop.f32.mrf.mxu0
        %v1673 = vadd.f32 %v1569, %v1672
        %v1674 = vpop.f32.mrf.mxu0
        %1675 = vdwg.mxu0
        %v1676 = vmax.f32 %v1638, 0.0
        %v1677 = vmax.f32 %v1643, 0.0
        %v1678 = vmax.f32 %v1648, 0.0
        %v1679 = vmax.f32 %v1653, 0.0
        %v1680 = vmax.f32 %v1658, 0.0
        %v1681 = vmax.f32 %v1663, 0.0
        %v1682 = vmax.f32 %v1668, 0.0
        %v1683 = vmax.f32 %v1673, 0.0
        %v1684 = vld [vmem:[#allocation16] sm:$0xff]
        %v1685 = vld [vmem:[#allocation16 + $0x8] sm:$0xff]
        %v1686 = vld [vmem:[#allocation16 + $0x10] sm:$0xff]
        %v1687 = vld [vmem:[#allocation16 + $0x18] sm:$0xff]
        %v1688 = vld [vmem:[#allocation16 + $0x20] sm:$0xff]
        %v1689 = vld [vmem:[#allocation16 + $0x28] sm:$0xff]
        %v1690 = vld [vmem:[#allocation16 + $0x30] sm:$0xff]
        %v1691 = vld [vmem:[#allocation16 + $0x38] sm:$0xff]
        %v1692 = vld [vmem:[#allocation16 + $0x40] sm:$0xff]
        %v1693 = vld [vmem:[#allocation16 + $0x48] sm:$0xff]
        %v1694 = vld [vmem:[#allocation16 + $0x50] sm:$0xff]
        %v1695 = vld [vmem:[#allocation16 + $0x58] sm:$0xff]
        %v1696 = vld [vmem:[#allocation16 + $0x60] sm:$0xff]
        %v1697 = vld [vmem:[#allocation16 + $0x68] sm:$0xff]
        %v1698 = vld [vmem:[#allocation16 + $0x70] sm:$0xff]
        %v1699 = vld [vmem:[#allocation16 + $0x78] sm:$0xff]
        %v1700 = vld [vmem:[%s16] sm:$0x1]
        %v1702 = vlaneseq
        %v1703 = vshrl.u32 %v1702, 7
        %v1704 = vsub.s32 0, %v1703
        %v1705 = vrot.slane %v1700, %v1704
        %1707 = vmatprep.subr.mxu0 0.0
        %1708 = vmatpush1.msra.mxu0 %v1699
        %1709 = vmatprep.subr.mxu0 0.0
        %1710 = vmatpush1.msra.mxu0 %v1698
        %1711 = vmatprep.subr.mxu0 0.0
        %1712 = vmatpush1.msra.mxu0 %v1697
        %1713 = vmatprep.subr.mxu0 0.0
        %1714 = vmatpush1.msra.mxu0 %v1696
        %1715 = vmatprep.subr.mxu0 0.0
        %1716 = vmatpush1.msra.mxu0 %v1695
        %1717 = vmatprep.subr.mxu0 0.0
        %1718 = vmatpush1.msra.mxu0 %v1694
        %1719 = vmatprep.subr.mxu0 0.0
        %1720 = vmatpush1.msra.mxu0 %v1693
        %1721 = vmatprep.subr.mxu0 0.0
        %1722 = vmatpush1.msra.mxu0 %v1692
        %1723 = vmatprep.subr.mxu0 0.0
        %1724 = vmatpush1.msra.mxu0 %v1691
        %1725 = vmatprep.subr.mxu0 0.0
        %1726 = vmatpush1.msra.mxu0 %v1690
        %1727 = vmatprep.subr.mxu0 0.0
        %1728 = vmatpush1.msra.mxu0 %v1689
        %1729 = vmatprep.subr.mxu0 0.0
        %1730 = vmatpush1.msra.mxu0 %v1688
        %1731 = vmatprep.subr.mxu0 0.0
        %1732 = vmatpush1.msra.mxu0 %v1687
        %1733 = vmatprep.subr.mxu0 0.0
        %1734 = vmatpush1.msra.mxu0 %v1686
        %1735 = vmatprep.subr.mxu0 0.0
        %1736 = vmatpush1.msra.mxu0 %v1685
        %1737 = vmatprep.subr.mxu0 0.0
        %1738 = vmatpush1.msra.mxu0 %v1684
        %1739 = vmatprep.subr.mxu0 0.0
        %1740 = vmatpush2.msra.mxu0 0.0
        %1741 = vmatprep.subr.mxu0 0.0
        %1742 = vmatpush2.msra.mxu0 0.0
        %1743 = vmatprep.subr.mxu0 0.0
        %1744 = vmatpush2.msra.mxu0 0.0
        %1745 = vmatprep.subr.mxu0 0.0
        %1746 = vmatpush2.msra.mxu0 0.0
        %1747 = vmatprep.subr.mxu0 0.0
        %1748 = vmatpush2.msra.mxu0 0.0
        %1749 = vmatprep.subr.mxu0 0.0
        %1750 = vmatpush2.msra.mxu0 0.0
        %1751 = vmatprep.subr.mxu0 0.0
        %1752 = vmatpush2.msra.mxu0 0.0
        %1753 = vmatprep.subr.mxu0 0.0
        %1754 = vmatpush2.msra.mxu0 0.0
        %1755 = vmatprep.subr.mxu0 0.0
        %1756 = vmatpush2.msra.mxu0 0.0
        %1757 = vmatprep.subr.mxu0 0.0
        %1758 = vmatpush2.msra.mxu0 0.0
        %1759 = vmatprep.subr.mxu0 0.0
        %1760 = vmatpush2.msra.mxu0 0.0
        %1761 = vmatprep.subr.mxu0 0.0
        %1762 = vmatpush2.msra.mxu0 0.0
        %1763 = vmatprep.subr.mxu0 0.0
        %1764 = vmatpush2.msra.mxu0 0.0
        %1765 = vmatprep.subr.mxu0 0.0
        %1766 = vmatpush2.msra.mxu0 0.0
        %1767 = vmatprep.subr.mxu0 0.0
        %1768 = vmatpush2.msra.mxu0 0.0
        %1769 = vmatprep.subr.mxu0 0.0
        %1770 = vmatpush2.msra.mxu0 0.0
        %1771 = vmatprep.mubr.f32.mxu0 0.0
        %1772 = vmatmul.mubr.f32.gmra.mxu0 %v1676
        %v1773 = vpop.f32.mrf.mxu0
        %v1774 = vadd.f32 %v1705, %v1773
        %v1775 = vpop.f32.mrf.mxu0
        %1776 = vmatprep.mubr.f32.mxu0 0.0
        %1777 = vmatmul.mubr.f32.gmra.mxu0 %v1677
        %v1778 = vpop.f32.mrf.mxu0
        %v1779 = vadd.f32 %v1705, %v1778
        %v1780 = vpop.f32.mrf.mxu0
        %1781 = vmatprep.mubr.f32.mxu0 0.0
        %1782 = vmatmul.mubr.f32.gmra.mxu0 %v1678
        %v1783 = vpop.f32.mrf.mxu0
        %v1784 = vadd.f32 %v1705, %v1783
        %v1785 = vpop.f32.mrf.mxu0
        %1786 = vmatprep.mubr.f32.mxu0 0.0
        %1787 = vmatmul.mubr.f32.gmra.mxu0 %v1679
        %v1788 = vpop.f32.mrf.mxu0
        %v1789 = vadd.f32 %v1705, %v1788
        %v1790 = vpop.f32.mrf.mxu0
        %1791 = vmatprep.mubr.f32.mxu0 0.0
        %1792 = vmatmul.mubr.f32.gmra.mxu0 %v1680
        %v1793 = vpop.f32.mrf.mxu0
        %v1794 = vadd.f32 %v1705, %v1793
        %v1795 = vpop.f32.mrf.mxu0
        %1796 = vmatprep.mubr.f32.mxu0 0.0
        %1797 = vmatmul.mubr.f32.gmra.mxu0 %v1681
        %v1798 = vpop.f32.mrf.mxu0
        %v1799 = vadd.f32 %v1705, %v1798
        %v1800 = vpop.f32.mrf.mxu0
        %1801 = vmatprep.mubr.f32.mxu0 0.0
        %1802 = vmatmul.mubr.f32.gmra.mxu0 %v1682
        %v1803 = vpop.f32.mrf.mxu0
        %v1804 = vadd.f32 %v1705, %v1803
        %v1805 = vpop.f32.mrf.mxu0
        %1806 = vmatprep.mubr.f32.mxu0 0.0
        %1807 = vmatmul.mubr.f32.gmra.mxu0 %v1683
        %v1808 = vpop.f32.mrf.mxu0
        %v1809 = vadd.f32 %v1705, %v1808
        %v1810 = vpop.f32.mrf.mxu0
        %1811 = vdwg.mxu0
        %1812 = vst [vmem:[%s720] sm:$0xff] %v1774
        %1813 = vst [vmem:[%s720 + $0x8] sm:$0xff] %v1779
        %1814 = vst [vmem:[%s720 + $0x10] sm:$0xff] %v1784
        %1815 = vst [vmem:[%s720 + $0x18] sm:$0xff] %v1789
        %1816 = vst [vmem:[%s720 + $0x20] sm:$0xff] %v1794
        %1817 = vst [vmem:[%s720 + $0x28] sm:$0xff] %v1799
        %1818 = vst [vmem:[%s720 + $0x30] sm:$0xff] %v1804
        %1819 = vst [vmem:[%s720 + $0x38] sm:$0xff] %v1809
        %s1820 = sand.u32 %s413, 1
        %s1821 = scalar_lea.sflag [#allocation4], %s1820
        %s1822 = sand.u32 %s413, 1
        %s1823 = smul.addr %s1822, 64
        %s1824 = scalar_lea.vmem [#allocation17], %s1823
        %s1825 = sand.u32 %s439, 1
        %s1826 = scalar_lea.sflag [#allocation19], %s1825
        %s1827 = sand.u32 %s439, 1
        %s1828 = smul.addr %s1827, 64
        %s1829 = scalar_lea.vmem [#allocation18], %s1828
        // Predicated region
        $region125: #{tpu_custom_call.1} parent=87 // pred_check
          %p1830 = pneg %p423
        $region126: #{tpu_custom_call.1} parent=87 // pred_check_branch
          %1832 = sbr.rel (%p1830) target = $region128
        $region127: #{tpu_custom_call.1} parent=87 // pred_region
          %s1833 = smul.u32 8, %s43
          %s1835 = ssub.s32 1024, 1024
          %1836 = vsyncadd %s1821, %s1835
          %s1837 = smul.addr %s1833, 128
          %s1838 = scalar_lea.hbm %s17, %s1837
          %s1839 = sshll.u32 %s1824, 4
          %s1840 = int_to_ptr.vmem [resolvable:$true] %s1839
          %1845 = dma.vmem_to_hbm [thread:$0]  %s1840, 1024, %s1838, %s1821, 128, 128, 8
        $region128: #{tpu_custom_call.1} parent=87 // pred_fallthru
          _
        // Predicated region
        $region129: #{tpu_custom_call.1} parent=87 // pred_check
          %p1846 = pneg %p449
        $region130: #{tpu_custom_call.1} parent=87 // pred_check_branch
          %1848 = sbr.rel (%p1846) target = $region132
        $region131: #{tpu_custom_call.1} parent=87 // pred_region
          %s1849 = smul.u32 8, %s43
          %s1851 = ssub.s32 1024, 1024
          %1852 = vsyncadd %s1826, %s1851
          %s1853 = smul.addr %s1849, 128
          %s1854 = scalar_lea.hbm %s18, %s1853
          %s1855 = sshll.u32 %s1829, 4
          %s1856 = int_to_ptr.vmem [resolvable:$true] %s1855
          %1861 = dma.vmem_to_hbm [thread:$0]  %s1856, 1024, %s1854, %s1826, 128, 128, 8
        $region132: #{tpu_custom_call.1} parent=87 // pred_fallthru
          _
      $region88: #{tpu_custom_call.1} parent=5 // pred_fallthru
        _
      %p1862 = scmp.le.s32.totalorder 2, %s38
      // Predicated region
      $region133: #{tpu_custom_call.1} parent=5 // pred_check
        %p1863 = pneg %p1862
      $region134: #{tpu_custom_call.1} parent=5 // pred_check_branch
        %1865 = sbr.rel (%p1863) target = $region136
      $region135: #{tpu_custom_call.1} parent=5 // pred_region
        %s1866 = ssub.s32 %s38, 2
        // Predicated region
        $region137: #{tpu_custom_call.1} parent=135 // pred_check
          %p1867 = pneg %p429
        $region138: #{tpu_custom_call.1} parent=135 // pred_check_branch
          %1869 = sbr.rel (%p1867) target = $region140
        $region139: #{tpu_custom_call.1} parent=135 // pred_region
          %s1870 = sand.u32 %s414, 1
          %s1871 = scalar_lea.sflag [#allocation4], %s1870
          %s1872 = sand.u32 %s414, 1
          %s1873 = smul.addr %s1872, 64
          %s1874 = scalar_lea.vmem [#allocation17], %s1873
          %1875 = dma.done %s1871, 1024
        $region140: #{tpu_custom_call.1} parent=135 // pred_fallthru
          _
        // Predicated region
        $region141: #{tpu_custom_call.1} parent=135 // pred_check
          %p1876 = pneg %p455
        $region142: #{tpu_custom_call.1} parent=135 // pred_check_branch
          %1878 = sbr.rel (%p1876) target = $region144
        $region143: #{tpu_custom_call.1} parent=135 // pred_region
          %s1879 = sand.u32 %s440, 1
          %s1880 = scalar_lea.sflag [#allocation19], %s1879
          %s1881 = sand.u32 %s440, 1
          %s1882 = smul.addr %s1881, 64
          %s1883 = scalar_lea.vmem [#allocation18], %s1882
          %1884 = dma.done %s1880, 1024
        $region144: #{tpu_custom_call.1} parent=135 // pred_fallthru
          _
      $region136: #{tpu_custom_call.1} parent=5 // pred_fallthru
        _
    $region6: #{tpu_custom_call.1} parent=1 // loop_footer
      %s42 = sadd.s32 1, %s38
    $region7: #{tpu_custom_call.1} parent=1 // loop_footer_branch
      %37 = sbr.rel target = $region3
    $region8: #{tpu_custom_call.1} parent=1 // loop_exit
      _
    %1885 = vsyncpa [#allocation3], 1
    %s1886 = scalar_lea.sflag [#allocation3], 1
    %1887 = vsyncpa %s1886, 1
    %1888 = vsyncpa [#allocation6], 1
    %1889 = vsyncpa [#allocation9], 1
    %1890 = vsyncpa [#allocation12], 1
    %1891 = vsyncpa [#allocation15], 1
    %1892 = vsyncpa [#allocation4], 1
    %s1893 = scalar_lea.sflag [#allocation4], 1
    %1894 = vsyncpa %s1893, 1
    %1895 = vsyncpa [#allocation19], 1
    %s1896 = scalar_lea.sflag [#allocation19], 1
    %1897 = vsyncpa %s1896, 1

// kernel: tpu_custom_call.1
$region0: #{tpu_custom_call.1}
  #allocation0 [shape = 'u32[]', space=smem, size = 0x4, offset = 0x4, fixed_abs, tag = 'smem constant byte address 0x4 - core index']
  #allocation1 [shape = 'u32[144,128]{1,0:T(1,128)}', space=vmem, size = 0x12000, scoped, tag = 'internal scratch']
  %s0 = inlined_call_operand.hbm [shape: f32[128,128], index: 0, kind: input, shape index: {}]
  %s1 = inlined_call_operand.hbm [shape: f32[128,128], index: 1, kind: input, shape index: {}]
  %s2 = inlined_call_operand.vmem [shape: f32[1,128], index: 2, kind: input, shape index: {}]
  %s3 = inlined_call_operand.hbm [shape: f32[128,128], index: 3, kind: input, shape index: {}]
  %s4 = inlined_call_operand.vmem [shape: f32[1,128], index: 4, kind: input, shape index: {}]
  %s5 = inlined_call_operand.hbm [shape: f32[128,128], index: 5, kind: input, shape index: {}]
  %s6 = inlined_call_operand.vmem [shape: f32[1,128], index: 6, kind: input, shape index: {}]
  %s7 = inlined_call_operand.hbm [shape: f32[128,128], index: 7, kind: input, shape index: {}]
  %s8 = inlined_call_operand.vmem [shape: f32[1,128], index: 8, kind: input, shape index: {}]
  %s9 = inlined_call_operand.hbm [shape: f32[128,128], index: 9, kind: input, shape index: {}]
  %s10 = inlined_call_operand.vmem [shape: f32[1,128], index: 10, kind: input, shape index: {}]
  %s11 = inlined_call_operand.hbm [shape: f32[128,128], index: 11, kind: input, shape index: {}]
  %s12 = inlined_call_operand.vmem [shape: f32[1,128], index: 12, kind: input, shape index: {}]
  %s13 = inlined_call_operand.hbm [shape: f32[128,128], index: 13, kind: input, shape index: {}]
  %s14 = inlined_call_operand.vmem [shape: f32[1,128], index: 14, kind: input, shape index: {}]
  %s15 = inlined_call_operand.hbm [shape: f32[128,128], index: 15, kind: input, shape index: {}]
  %s16 = inlined_call_operand.vmem [shape: f32[1,128], index: 16, kind: input, shape index: {}]
  %s17 = inlined_call_operand.hbm [shape: f32[128,128], index: 17, kind: output, shape index: {0}]
  %s18 = inlined_call_operand.hbm [shape: f32[128,128], index: 18, kind: output, shape index: {1}]
  %19 = xla_tuple %s17, %s18
  %s20 = sld [smem:[#allocation0]]
  $region145: #{tpu_custom_call.1} parent=0
    _
  %s22 = ssub.s32 1, %s20
  %s23 = scalar_select 0, %s22, %s20
  $region1: #{tpu_custom_call.1} parent=0
    #allocation2 [shape = 'u8[65536]{0}', space=vmem, size = 0x10000, scoped, tag = 'input window, operand 0']
    #allocation3 [shape = 's32[2]{0}', space=sflag, size = 0x8, scoped, tag = 'scoped memory for tpu_custom_call.1']
    #allocation4 [shape = 's32[2]{0}', space=sflag, size = 0x8, scoped, tag = 'scoped memory for tpu_custom_call.1']
    #allocation5 [shape = 'u8[65536]{0}', space=vmem, size = 0x10000, scoped, tag = 'input window, operand 1, single buffered']
    #allocation6 [shape = 's32[1]{0}', space=sflag, size = 0x4, scoped, tag = 'scoped memory for tpu_custom_call.1']
    #allocation7 [shape = 'u8[65536]{0}', space=vmem, size = 0x10000, scoped, tag = 'input window, operand 3, single buffered']
    #allocation8 [shape = 'u8[65536]{0}', space=vmem, size = 0x10000, scoped, tag = 'input window, operand 5, single buffered']
    #allocation9 [shape = 's32[1]{0}', space=sflag, size = 0x4, scoped, tag = 'scoped memory for tpu_custom_call.1']
    #allocation10 [shape = 'u8[65536]{0}', space=vmem, size = 0x10000, scoped, tag = 'input window, operand 7, single buffered']
    #allocation11 [shape = 'u8[65536]{0}', space=vmem, size = 0x10000, scoped, tag = 'input window, operand 9, single buffered']
    #allocation12 [shape = 's32[1]{0}', space=sflag, size = 0x4, scoped, tag = 'scoped memory for tpu_custom_call.1']
    #allocation13 [shape = 'u8[65536]{0}', space=vmem, size = 0x10000, scoped, tag = 'input window, operand 11, single buffered']
    #allocation14 [shape = 'u8[65536]{0}', space=vmem, size = 0x10000, scoped, tag = 'input window, operand 13, single buffered']
    #allocation15 [shape = 's32[1]{0}', space=sflag, size = 0x4, scoped, tag = 'scoped memory for tpu_custom_call.1']
    #allocation16 [shape = 'u8[65536]{0}', space=vmem, size = 0x10000, scoped, tag = 'input window, operand 15, single buffered']
    #allocation17 [shape = 'u8[65536]{0}', space=vmem, size = 0x10000, scoped, tag = 'output window, operand 0']
    #allocation18 [shape = 'u8[65536]{0}', space=vmem, size = 0x10000, scoped, tag = 'output window, operand 1']
    #allocation19 [shape = 's32[2]{0}', space=sflag, size = 0x8, scoped, tag = 'scoped memory for tpu_custom_call.1']
    %24 = vsyncpa [#allocation3], 0
    %s25 = scalar_lea.sflag [#allocation3], 1
    %26 = vsyncpa %s25, 0
    %27 = vsyncpa [#allocation6], 0
    %28 = vsyncpa [#allocation9], 0
    %29 = vsyncpa [#allocation12], 0
    %30 = vsyncpa [#allocation15], 0
    %31 = vsyncpa [#allocation4], 0
    %s32 = scalar_lea.sflag [#allocation4], 1
    %33 = vsyncpa %s32, 0
    %34 = vsyncpa [#allocation19], 0
    %s35 = scalar_lea.sflag [#allocation19], 1
    %36 = vsyncpa %s35, 0
    loop: start=0, step=1, limit=4
    $region2: #{tpu_custom_call.1} parent=1 // loop_pre_header
      _
    $region3: #{tpu_custom_call.1} parent=1 // loop_header
      %s38 = sphi 0, %s42
      %p39 = scmp.ge.s32.totalorder %s38, 4
      %s48 = sphi 0, %s50
      %s51 = sphi 0, %s48
      %s52 = sphi 0, %s51
      %s68 = sphi 0, %s52
      %s72 = sphi 0, %s72
      %s74 = sphi 0, %s72
      %s75 = sphi 0, %s74
      %s89 = sphi 0, %s75
      %s93 = sphi 0, %s93
      %s95 = sphi 0, %s93
      %s96 = sphi 0, %s95
      %s110 = sphi 0, %s96
      %s114 = sphi 0, %s114
      %s116 = sphi 0, %s114
      %s117 = sphi 0, %s116
      %s131 = sphi 0, %s117
      %s135 = sphi 0, %s135
      %s137 = sphi 0, %s135
      %s138 = sphi 0, %s137
      %s152 = sphi 0, %s138
      %s156 = sphi 0, %s156
      %s158 = sphi 0, %s156
      %s159 = sphi 0, %s158
      %s173 = sphi 0, %s159
      %s177 = sphi 0, %s177
      %s179 = sphi 0, %s177
      %s180 = sphi 0, %s179
      %s194 = sphi 0, %s180
      %s198 = sphi 0, %s198
      %s200 = sphi 0, %s198
      %s201 = sphi 0, %s200
      %s215 = sphi 0, %s201
      %s219 = sphi 0, %s219
      %s221 = sphi 0, %s219
      %s222 = sphi 0, %s221
      %s236 = sphi 0, %s222
      %s240 = sphi 0, %s240
      %s242 = sphi 0, %s240
      %s243 = sphi 0, %s242
      %s257 = sphi 0, %s243
      %s261 = sphi 0, %s261
      %s263 = sphi 0, %s261
      %s264 = sphi 0, %s263
      %s278 = sphi 0, %s264
      %s282 = sphi 0, %s282
      %s284 = sphi 0, %s282
      %s285 = sphi 0, %s284
      %s299 = sphi 0, %s285
      %s303 = sphi 0, %s303
      %s305 = sphi 0, %s303
      %s306 = sphi 0, %s305
      %s320 = sphi 0, %s306
      %s324 = sphi 0, %s324
      %s326 = sphi 0, %s324
      %s327 = sphi 0, %s326
      %s341 = sphi 0, %s327
      %s345 = sphi 0, %s345
      %s347 = sphi 0, %s345
      %s348 = sphi 0, %s347
      %s362 = sphi 0, %s348
      %s366 = sphi 0, %s366
      %s368 = sphi 0, %s366
      %s369 = sphi 0, %s368
      %s383 = sphi 0, %s369
      %s387 = sphi 0, %s387
      %s389 = sphi 0, %s387
      %s390 = sphi 0, %s389
      %s404 = sphi 0, %s390
      %s410 = sphi 0, %s412
      %s413 = sphi 0, %s410
      %s414 = sphi 0, %s413
      %s430 = sphi 0, %s414
      %s436 = sphi 0, %s438
      %s439 = sphi 0, %s436
      %s440 = sphi 0, %s439
      %s456 = sphi 0, %s440
    $region4: #{tpu_custom_call.1} parent=1 // loop_header_branch
      %41 = sbr.rel (%p39) target = $region8
    $region5: #{tpu_custom_call.1} parent=1 // loop_body
      %s43 = ssub.s32 %s38, 1
      %s44 = ssub.s32 %s38, 2
      %s45 = sadd.s32 %s38, 1
      %s46 = ssub.s32 %s38, %s45
      %p47 = scmp.eq.s32.totalorder %s46, 0
      %s49 = sadd.s32 %s48, 1
      %s50 = scalar_select %p47, %s48, %s49
      %p53 = pneg %p47
      %p54 = scmp.eq.s32.totalorder %s38, 1
      %p55 = por %p53, %p54
      %p56 = scmp.ne.s32.totalorder %s48, %s51
      %p57 = scmp.eq.s32.totalorder %s38, 0
      %p58 = por %p56, %p57
      %p59 = scmp.ne.s32.totalorder %s48, %s51
      %p60 = scmp.eq.s32.totalorder %s43, 1
      %p61 = por %p59, %p60
      %p62 = scmp.ne.s32.totalorder %s51, %s52
      %p63 = scmp.eq.s32.totalorder %s43, 0
      %p64 = por %p62, %p63
      %p65 = scmp.ne.s32.totalorder %s51, %s52
      %p66 = scmp.eq.s32.totalorder %s44, 1
      %p67 = por %p65, %p66
      %p69 = scmp.ne.s32.totalorder %s52, %s68
      %p70 = scmp.eq.s32.totalorder %s44, 0
      %p71 = por %p69, %p70
      %s73 = sadd.s32 %s72, 1
      %p76 = scmp.eq.s32.totalorder %s38, 1
      %p77 = scmp.ne.s32.totalorder %s72, %s74
      %p78 = scmp.eq.s32.totalorder %s38, 0
      %p79 = por %p77, %p78
      %p80 = scmp.ne.s32.totalorder %s72, %s74
      %p81 = scmp.eq.s32.totalorder %s43, 1
      %p82 = por %p80, %p81
      %p83 = scmp.ne.s32.totalorder %s74, %s75
      %p84 = scmp.eq.s32.totalorder %s43, 0
      %p85 = por %p83, %p84
      %p86 = scmp.ne.s32.totalorder %s74, %s75
      %p87 = scmp.eq.s32.totalorder %s44, 1
      %p88 = por %p86, %p87
      %p90 = scmp.ne.s32.totalorder %s75, %s89
      %p91 = scmp.eq.s32.totalorder %s44, 0
      %p92 = por %p90, %p91
      %s94 = sadd.s32 %s93, 1
      %p97 = scmp.eq.s32.totalorder %s38, 1
      %p98 = scmp.ne.s32.totalorder %s93, %s95
      %p99 = scmp.eq.s32.totalorder %s38, 0
      %p100 = por %p98, %p99
      %p101 = scmp.ne.s32.totalorder %s93, %s95
      %p102 = scmp.eq.s32.totalorder %s43, 1
      %p103 = por %p101, %p102
      %p104 = scmp.ne.s32.totalorder %s95, %s96
      %p105 = scmp.eq.s32.totalorder %s43, 0
      %p106 = por %p104, %p105
      %p107 = scmp.ne.s32.totalorder %s95, %s96
      %p108 = scmp.eq.s32.totalorder %s44, 1
      %p109 = por %p107, %p108
      %p111 = scmp.ne.s32.totalorder %s96, %s110
      %p112 = scmp.eq.s32.totalorder %s44, 0
      %p113 = por %p111, %p112
      %s115 = sadd.s32 %s114, 1
      %p118 = scmp.eq.s32.totalorder %s38, 1
      %p119 = scmp.ne.s32.totalorder %s114, %s116
      %p120 = scmp.eq.s32.totalorder %s38, 0
      %p121 = por %p119, %p120
      %p122 = scmp.ne.s32.totalorder %s114, %s116
      %p123 = scmp.eq.s32.totalorder %s43, 1
      %p124 = por %p122, %p123
      %p125 = scmp.ne.s32.totalorder %s116, %s117
      %p126 = scmp.eq.s32.totalorder %s43, 0
      %p127 = por %p125, %p126
      %p128 = scmp.ne.s32.totalorder %s116, %s117
      %p129 = scmp.eq.s32.totalorder %s44, 1
      %p130 = por %p128, %p129
      %p132 = scmp.ne.s32.totalorder %s117, %s131
      %p133 = scmp.eq.s32.totalorder %s44, 0
      %p134 = por %p132, %p133
      %s136 = sadd.s32 %s135, 1
      %p139 = scmp.eq.s32.totalorder %s38, 1
      %p140 = scmp.ne.s32.totalorder %s135, %s137
      %p141 = scmp.eq.s32.totalorder %s38, 0
      %p142 = por %p140, %p141
      %p143 = scmp.ne.s32.totalorder %s135, %s137
      %p144 = scmp.eq.s32.totalorder %s43, 1
      %p145 = por %p143, %p144
      %p146 = scmp.ne.s32.totalorder %s137, %s138
      %p147 = scmp.eq.s32.totalorder %s43, 0
      %p148 = por %p146, %p147
      %p149 = scmp.ne.s32.totalorder %s137, %s138
      %p150 = scmp.eq.s32.totalorder %s44, 1
      %p151 = por %p149, %p150
      %p153 = scmp.ne.s32.totalorder %s138, %s152
      %p154 = scmp.eq.s32.totalorder %s44, 0
      %p155 = por %p153, %p154
      %s157 = sadd.s32 %s156, 1
      %p160 = scmp.eq.s32.totalorder %s38, 1
      %p161 = scmp.ne.s32.totalorder %s156, %s158
      %p162 = scmp.eq.s32.totalorder %s38, 0
      %p163 = por %p161, %p162
      %p164 = scmp.ne.s32.totalorder %s156, %s158
      %p165 = scmp.eq.s32.totalorder %s43, 1
      %p166 = por %p164, %p165
      %p167 = scmp.ne.s32.totalorder %s158, %s159
      %p168 = scmp.eq.s32.totalorder %s43, 0
      %p169 = por %p167, %p168
      %p170 = scmp.ne.s32.totalorder %s158, %s159
      %p171 = scmp.eq.s32.totalorder %s44, 1
      %p172 = por %p170, %p171
      %p174 = scmp.ne.s32.totalorder %s159, %s173
      %p175 = scmp.eq.s32.totalorder %s44, 0
      %p176 = por %p174, %p175
      %s178 = sadd.s32 %s177, 1
      %p181 = scmp.eq.s32.totalorder %s38, 1
      %p182 = scmp.ne.s32.totalorder %s177, %s179
      %p183 = scmp.eq.s32.totalorder %s38, 0
      %p184 = por %p182, %p183
      %p185 = scmp.ne.s32.totalorder %s177, %s179
      %p186 = scmp.eq.s32.totalorder %s43, 1
      %p187 = por %p185, %p186
      %p188 = scmp.ne.s32.totalorder %s179, %s180
      %p189 = scmp.eq.s32.totalorder %s43, 0
      %p190 = por %p188, %p189
      %p191 = scmp.ne.s32.totalorder %s179, %s180
      %p192 = scmp.eq.s32.totalorder %s44, 1
      %p193 = por %p191, %p192
      %p195 = scmp.ne.s32.totalorder %s180, %s194
      %p196 = scmp.eq.s32.totalorder %s44, 0
      %p197 = por %p195, %p196
      %s199 = sadd.s32 %s198, 1
      %p202 = scmp.eq.s32.totalorder %s38, 1
      %p203 = scmp.ne.s32.totalorder %s198, %s200
      %p204 = scmp.eq.s32.totalorder %s38, 0
      %p205 = por %p203, %p204
      %p206 = scmp.ne.s32.totalorder %s198, %s200
      %p207 = scmp.eq.s32.totalorder %s43, 1
      %p208 = por %p206, %p207
      %p209 = scmp.ne.s32.totalorder %s200, %s201
      %p210 = scmp.eq.s32.totalorder %s43, 0
      %p211 = por %p209, %p210
      %p212 = scmp.ne.s32.totalorder %s200, %s201
      %p213 = scmp.eq.s32.totalorder %s44, 1
      %p214 = por %p212, %p213
      %p216 = scmp.ne.s32.totalorder %s201, %s215
      %p217 = scmp.eq.s32.totalorder %s44, 0
      %p218 = por %p216, %p217
      %s220 = sadd.s32 %s219, 1
      %p223 = scmp.eq.s32.totalorder %s38, 1
      %p224 = scmp.ne.s32.totalorder %s219, %s221
      %p225 = scmp.eq.s32.totalorder %s38, 0
      %p226 = por %p224, %p225
      %p227 = scmp.ne.s32.totalorder %s219, %s221
      %p228 = scmp.eq.s32.totalorder %s43, 1
      %p229 = por %p227, %p228
      %p230 = scmp.ne.s32.totalorder %s221, %s222
      %p231 = scmp.eq.s32.totalorder %s43, 0
      %p232 = por %p230, %p231
      %p233 = scmp.ne.s32.totalorder %s221, %s222
      %p234 = scmp.eq.s32.totalorder %s44, 1
      %p235 = por %p233, %p234
      %p237 = scmp.ne.s32.totalorder %s222, %s236
      %p238 = scmp.eq.s32.totalorder %s44, 0
      %p239 = por %p237, %p238
      %s241 = sadd.s32 %s240, 1
      %p244 = scmp.eq.s32.totalorder %s38, 1
      %p245 = scmp.ne.s32.totalorder %s240, %s242
      %p246 = scmp.eq.s32.totalorder %s38, 0
      %p247 = por %p245, %p246
      %p248 = scmp.ne.s32.totalorder %s240, %s242
      %p249 = scmp.eq.s32.totalorder %s43, 1
      %p250 = por %p248, %p249
      %p251 = scmp.ne.s32.totalorder %s242, %s243
      %p252 = scmp.eq.s32.totalorder %s43, 0
      %p253 = por %p251, %p252
      %p254 = scmp.ne.s32.totalorder %s242, %s243
      %p255 = scmp.eq.s32.totalorder %s44, 1
      %p256 = por %p254, %p255
      %p258 = scmp.ne.s32.totalorder %s243, %s257
      %p259 = scmp.eq.s32.totalorder %s44, 0
      %p260 = por %p258, %p259
      %s262 = sadd.s32 %s261, 1
      %p265 = scmp.eq.s32.totalorder %s38, 1
      %p266 = scmp.ne.s32.totalorder %s261, %s263
      %p267 = scmp.eq.s32.totalorder %s38, 0
      %p268 = por %p266, %p267
      %p269 = scmp.ne.s32.totalorder %s261, %s263
      %p270 = scmp.eq.s32.totalorder %s43, 1
      %p271 = por %p269, %p270
      %p272 = scmp.ne.s32.totalorder %s263, %s264
      %p273 = scmp.eq.s32.totalorder %s43, 0
      %p274 = por %p272, %p273
      %p275 = scmp.ne.s32.totalorder %s263, %s264
      %p276 = scmp.eq.s32.totalorder %s44, 1
      %p277 = por %p275, %p276
      %p279 = scmp.ne.s32.totalorder %s264, %s278
      %p280 = scmp.eq.s32.totalorder %s44, 0
      %p281 = por %p279, %p280
      %s283 = sadd.s32 %s282, 1
      %p286 = scmp.eq.s32.totalorder %s38, 1
      %p287 = scmp.ne.s32.totalorder %s282, %s284
      %p288 = scmp.eq.s32.totalorder %s38, 0
      %p289 = por %p287, %p288
      %p290 = scmp.ne.s32.totalorder %s282, %s284
      %p291 = scmp.eq.s32.totalorder %s43, 1
      %p292 = por %p290, %p291
      %p293 = scmp.ne.s32.totalorder %s284, %s285
      %p294 = scmp.eq.s32.totalorder %s43, 0
      %p295 = por %p293, %p294
      %p296 = scmp.ne.s32.totalorder %s284, %s285
      %p297 = scmp.eq.s32.totalorder %s44, 1
      %p298 = por %p296, %p297
      %p300 = scmp.ne.s32.totalorder %s285, %s299
      %p301 = scmp.eq.s32.totalorder %s44, 0
      %p302 = por %p300, %p301
      %s304 = sadd.s32 %s303, 1
      %p307 = scmp.eq.s32.totalorder %s38, 1
      %p308 = scmp.ne.s32.totalorder %s303, %s305
      %p309 = scmp.eq.s32.totalorder %s38, 0
      %p310 = por %p308, %p309
      %p311 = scmp.ne.s32.totalorder %s303, %s305
      %p312 = scmp.eq.s32.totalorder %s43, 1
      %p313 = por %p311, %p312
      %p314 = scmp.ne.s32.totalorder %s305, %s306
      %p315 = scmp.eq.s32.totalorder %s43, 0
      %p316 = por %p314, %p315
      %p317 = scmp.ne.s32.totalorder %s305, %s306
      %p318 = scmp.eq.s32.totalorder %s44, 1
      %p319 = por %p317, %p318
      %p321 = scmp.ne.s32.totalorder %s306, %s320
      %p322 = scmp.eq.s32.totalorder %s44, 0
      %p323 = por %p321, %p322
      %s325 = sadd.s32 %s324, 1
      %p328 = scmp.eq.s32.totalorder %s38, 1
      %p329 = scmp.ne.s32.totalorder %s324, %s326
      %p330 = scmp.eq.s32.totalorder %s38, 0
      %p331 = por %p329, %p330
      %p332 = scmp.ne.s32.totalorder %s324, %s326
      %p333 = scmp.eq.s32.totalorder %s43, 1
      %p334 = por %p332, %p333
      %p335 = scmp.ne.s32.totalorder %s326, %s327
      %p336 = scmp.eq.s32.totalorder %s43, 0
      %p337 = por %p335, %p336
      %p338 = scmp.ne.s32.totalorder %s326, %s327
      %p339 = scmp.eq.s32.totalorder %s44, 1
      %p340 = por %p338, %p339
      %p342 = scmp.ne.s32.totalorder %s327, %s341
      %p343 = scmp.eq.s32.totalorder %s44, 0
      %p344 = por %p342, %p343
      %s346 = sadd.s32 %s345, 1
      %p349 = scmp.eq.s32.totalorder %s38, 1
      %p350 = scmp.ne.s32.totalorder %s345, %s347
      %p351 = scmp.eq.s32.totalorder %s38, 0
      %p352 = por %p350, %p351
      %p353 = scmp.ne.s32.totalorder %s345, %s347
      %p354 = scmp.eq.s32.totalorder %s43, 1
      %p355 = por %p353, %p354
      %p356 = scmp.ne.s32.totalorder %s347, %s348
      %p357 = scmp.eq.s32.totalorder %s43, 0
      %p358 = por %p356, %p357
      %p359 = scmp.ne.s32.totalorder %s347, %s348
      %p360 = scmp.eq.s32.totalorder %s44, 1
      %p361 = por %p359, %p360
      %p363 = scmp.ne.s32.totalorder %s348, %s362
      %p364 = scmp.eq.s32.totalorder %s44, 0
      %p365 = por %p363, %p364
      %s367 = sadd.s32 %s366, 1
      %p370 = scmp.eq.s32.totalorder %s38, 1
      %p371 = scmp.ne.s32.totalorder %s366, %s368
      %p372 = scmp.eq.s32.totalorder %s38, 0
      %p373 = por %p371, %p372
      %p374 = scmp.ne.s32.totalorder %s366, %s368
      %p375 = scmp.eq.s32.totalorder %s43, 1
      %p376 = por %p374, %p375
      %p377 = scmp.ne.s32.totalorder %s368, %s369
      %p378 = scmp.eq.s32.totalorder %s43, 0
      %p379 = por %p377, %p378
      %p380 = scmp.ne.s32.totalorder %s368, %s369
      %p381 = scmp.eq.s32.totalorder %s44, 1
      %p382 = por %p380, %p381
      %p384 = scmp.ne.s32.totalorder %s369, %s383
      %p385 = scmp.eq.s32.totalorder %s44, 0
      %p386 = por %p384, %p385
      %s388 = sadd.s32 %s387, 1
      %p391 = scmp.eq.s32.totalorder %s38, 1
      %p392 = scmp.ne.s32.totalorder %s387, %s389
      %p393 = scmp.eq.s32.totalorder %s38, 0
      %p394 = por %p392, %p393
      %p395 = scmp.ne.s32.totalorder %s387, %s389
      %p396 = scmp.eq.s32.totalorder %s43, 1
      %p397 = por %p395, %p396
      %p398 = scmp.ne.s32.totalorder %s389, %s390
      %p399 = scmp.eq.s32.totalorder %s43, 0
      %p400 = por %p398, %p399
      %p401 = scmp.ne.s32.totalorder %s389, %s390
      %p402 = scmp.eq.s32.totalorder %s44, 1
      %p403 = por %p401, %p402
      %p405 = scmp.ne.s32.totalorder %s390, %s404
      %p406 = scmp.eq.s32.totalorder %s44, 0
      %p407 = por %p405, %p406
      %s408 = ssub.s32 %s38, %s45
      %p409 = scmp.eq.s32.totalorder %s408, 0
      %s411 = sadd.s32 %s410, 1
      %s412 = scalar_select %p409, %s410, %s411
      %p415 = pneg %p409
      %p416 = scmp.eq.s32.totalorder %s38, 1
      %p417 = por %p415, %p416
      %p418 = scmp.ne.s32.totalorder %s410, %s413
      %p419 = scmp.eq.s32.totalorder %s38, 0
      %p420 = por %p418, %p419
      %p421 = scmp.ne.s32.totalorder %s410, %s413
      %p422 = scmp.eq.s32.totalorder %s43, 1
      %p423 = por %p421, %p422
      %p424 = scmp.ne.s32.totalorder %s413, %s414
      %p425 = scmp.eq.s32.totalorder %s43, 0
      %p426 = por %p424, %p425
      %p427 = scmp.ne.s32.totalorder %s413, %s414
      %p428 = scmp.eq.s32.totalorder %s44, 1
      %p429 = por %p427, %p428
      %p431 = scmp.ne.s32.totalorder %s414, %s430
      %p432 = scmp.eq.s32.totalorder %s44, 0
      %p433 = por %p431, %p432
      %s434 = ssub.s32 %s38, %s45
      %p435 = scmp.eq.s32.totalorder %s434, 0
      %s437 = sadd.s32 %s436, 1
      %s438 = scalar_select %p435, %s436, %s437
      %p441 = pneg %p435
      %p442 = scmp.eq.s32.totalorder %s38, 1
      %p443 = por %p441, %p442
      %p444 = scmp.ne.s32.totalorder %s436, %s439
      %p445 = scmp.eq.s32.totalorder %s38, 0
      %p446 = por %p444, %p445
      %p447 = scmp.ne.s32.totalorder %s436, %s439
      %p448 = scmp.eq.s32.totalorder %s43, 1
      %p449 = por %p447, %p448
      %p450 = scmp.ne.s32.totalorder %s439, %s440
      %p451 = scmp.eq.s32.totalorder %s43, 0
      %p452 = por %p450, %p451
      %p453 = scmp.ne.s32.totalorder %s439, %s440
      %p454 = scmp.eq.s32.totalorder %s44, 1
      %p455 = por %p453, %p454
      %p457 = scmp.ne.s32.totalorder %s440, %s456
      %p458 = scmp.eq.s32.totalorder %s44, 0
      %p459 = por %p457, %p458
      %p460 = scmp.le.s32.totalorder 1, %s38
      %p461 = scmp.lt.s32.totalorder %s38, 3
      %p462 = pnand %p460, %p461
      %p463 = pneg %p462
      // Predicated region
      $region9: #{tpu_custom_call.1} parent=5 // pred_check
        _
      $region10: #{tpu_custom_call.1} parent=5 // pred_check_branch
        %465 = sbr.rel (%p462) target = $region12
      $region11: #{tpu_custom_call.1} parent=5 // pred_region
        %s466 = ssub.s32 %s38, 1
        // Predicated region
        $region13: #{tpu_custom_call.1} parent=11 // pred_check
          %p467 = pneg %p85
        $region14: #{tpu_custom_call.1} parent=11 // pred_check_branch
          %469 = sbr.rel (%p467) target = $region16
        $region15: #{tpu_custom_call.1} parent=11 // pred_region
          %s471 = ssub.s32 2048, 2048
          %472 = vsyncadd [#allocation6], %s471
          %s473 = sshll.u32 [#allocation5], 4
          %s474 = int_to_ptr.vmem [resolvable:$true] %s473
          %479 = dma.hbm_to_vmem [thread:$0]  %s1, 2048, %s474, [#allocation6], 128, 128, 8
        $region16: #{tpu_custom_call.1} parent=11 // pred_fallthru
          _
        // Predicated region
        $region17: #{tpu_custom_call.1} parent=11 // pred_check
          %p480 = pneg %p106
        $region18: #{tpu_custom_call.1} parent=11 // pred_check_branch
          %482 = sbr.rel (%p480) target = $region20
        $region19: #{tpu_custom_call.1} parent=11 // pred_region
          _
        $region20: #{tpu_custom_call.1} parent=11 // pred_fallthru
          _
        // Predicated region
        $region21: #{tpu_custom_call.1} parent=11 // pred_check
          %p483 = pneg %p127
        $region22: #{tpu_custom_call.1} parent=11 // pred_check_branch
          %485 = sbr.rel (%p483) target = $region24
        $region23: #{tpu_custom_call.1} parent=11 // pred_region
          %s487 = ssub.s32 2048, 2048
          %488 = vsyncadd [#allocation6], %s487
          %s489 = sshll.u32 [#allocation7], 4
          %s490 = int_to_ptr.vmem [resolvable:$true] %s489
          %495 = dma.hbm_to_vmem [thread:$0]  %s3, 2048, %s490, [#allocation6], 128, 128, 8
        $region24: #{tpu_custom_call.1} parent=11 // pred_fallthru
          _
        // Predicated region
        $region25: #{tpu_custom_call.1} parent=11 // pred_check
          %p496 = pneg %p148
        $region26: #{tpu_custom_call.1} parent=11 // pred_check_branch
          %498 = sbr.rel (%p496) target = $region28
        $region27: #{tpu_custom_call.1} parent=11 // pred_region
          _
        $region28: #{tpu_custom_call.1} parent=11 // pred_fallthru
          _
        // Predicated region
        $region29: #{tpu_custom_call.1} parent=11 // pred_check
          %p499 = pneg %p169
        $region30: #{tpu_custom_call.1} parent=11 // pred_check_branch
          %501 = sbr.rel (%p499) target = $region32
        $region31: #{tpu_custom_call.1} parent=11 // pred_region
          %s503 = ssub.s32 2048, 2048
          %504 = vsyncadd [#allocation9], %s503
          %s505 = sshll.u32 [#allocation8], 4
          %s506 = int_to_ptr.vmem [resolvable:$true] %s505
          %511 = dma.hbm_to_vmem [thread:$0]  %s5, 2048, %s506, [#allocation9], 128, 128, 8
        $region32: #{tpu_custom_call.1} parent=11 // pred_fallthru
          _
        // Predicated region
        $region33: #{tpu_custom_call.1} parent=11 // pred_check
          %p512 = pneg %p190
        $region34: #{tpu_custom_call.1} parent=11 // pred_check_branch
          %514 = sbr.rel (%p512) target = $region36
        $region35: #{tpu_custom_call.1} parent=11 // pred_region
          _
        $region36: #{tpu_custom_call.1} parent=11 // pred_fallthru
          _
        // Predicated region
        $region37: #{tpu_custom_call.1} parent=11 // pred_check
          %p515 = pneg %p211
        $region38: #{tpu_custom_call.1} parent=11 // pred_check_branch
          %517 = sbr.rel (%p515) target = $region40
        $region39: #{tpu_custom_call.1} parent=11 // pred_region
          %s519 = ssub.s32 2048, 2048
          %520 = vsyncadd [#allocation9], %s519
          %s521 = sshll.u32 [#allocation10], 4
          %s522 = int_to_ptr.vmem [resolvable:$true] %s521
          %527 = dma.hbm_to_vmem [thread:$0]  %s7, 2048, %s522, [#allocation9], 128, 128, 8
        $region40: #{tpu_custom_call.1} parent=11 // pred_fallthru
          _
        // Predicated region
        $region41: #{tpu_custom_call.1} parent=11 // pred_check
          %p528 = pneg %p232
        $region42: #{tpu_custom_call.1} parent=11 // pred_check_branch
          %530 = sbr.rel (%p528) target = $region44
        $region43: #{tpu_custom_call.1} parent=11 // pred_region
          _
        $region44: #{tpu_custom_call.1} parent=11 // pred_fallthru
          _
        // Predicated region
        $region45: #{tpu_custom_call.1} parent=11 // pred_check
          %p531 = pneg %p253
        $region46: #{tpu_custom_call.1} parent=11 // pred_check_branch
          %533 = sbr.rel (%p531) target = $region48
        $region47: #{tpu_custom_call.1} parent=11 // pred_region
          %s535 = ssub.s32 2048, 2048
          %536 = vsyncadd [#allocation12], %s535
          %s537 = sshll.u32 [#allocation11], 4
          %s538 = int_to_ptr.vmem [resolvable:$true] %s537
          %543 = dma.hbm_to_vmem [thread:$0]  %s9, 2048, %s538, [#allocation12], 128, 128, 8
        $region48: #{tpu_custom_call.1} parent=11 // pred_fallthru
          _
        // Predicated region
        $region49: #{tpu_custom_call.1} parent=11 // pred_check
          %p544 = pneg %p274
        $region50: #{tpu_custom_call.1} parent=11 // pred_check_branch
          %546 = sbr.rel (%p544) target = $region52
        $region51: #{tpu_custom_call.1} parent=11 // pred_region
          _
        $region52: #{tpu_custom_call.1} parent=11 // pred_fallthru
          _
        // Predicated region
        $region53: #{tpu_custom_call.1} parent=11 // pred_check
          %p547 = pneg %p295
        $region54: #{tpu_custom_call.1} parent=11 // pred_check_branch
          %549 = sbr.rel (%p547) target = $region56
        $region55: #{tpu_custom_call.1} parent=11 // pred_region
          %s551 = ssub.s32 2048, 2048
          %552 = vsyncadd [#allocation12], %s551
          %s553 = sshll.u32 [#allocation13], 4
          %s554 = int_to_ptr.vmem [resolvable:$true] %s553
          %559 = dma.hbm_to_vmem [thread:$0]  %s11, 2048, %s554, [#allocation12], 128, 128, 8
        $region56: #{tpu_custom_call.1} parent=11 // pred_fallthru
          _
        // Predicated region
        $region57: #{tpu_custom_call.1} parent=11 // pred_check
          %p560 = pneg %p316
        $region58: #{tpu_custom_call.1} parent=11 // pred_check_branch
          %562 = sbr.rel (%p560) target = $region60
        $region59: #{tpu_custom_call.1} parent=11 // pred_region
          _
        $region60: #{tpu_custom_call.1} parent=11 // pred_fallthru
          _
        // Predicated region
        $region61: #{tpu_custom_call.1} parent=11 // pred_check
          %p563 = pneg %p337
        $region62: #{tpu_custom_call.1} parent=11 // pred_check_branch
          %565 = sbr.rel (%p563) target = $region64
        $region63: #{tpu_custom_call.1} parent=11 // pred_region
          %s567 = ssub.s32 2048, 2048
          %568 = vsyncadd [#allocation15], %s567
          %s569 = sshll.u32 [#allocation14], 4
          %s570 = int_to_ptr.vmem [resolvable:$true] %s569
          %575 = dma.hbm_to_vmem [thread:$0]  %s13, 2048, %s570, [#allocation15], 128, 128, 8
        $region64: #{tpu_custom_call.1} parent=11 // pred_fallthru
          _
        // Predicated region
        $region65: #{tpu_custom_call.1} parent=11 // pred_check
          %p576 = pneg %p358
        $region66: #{tpu_custom_call.1} parent=11 // pred_check_branch
          %578 = sbr.rel (%p576) target = $region68
        $region67: #{tpu_custom_call.1} parent=11 // pred_region
          _
        $region68: #{tpu_custom_call.1} parent=11 // pred_fallthru
          _
        // Predicated region
        $region69: #{tpu_custom_call.1} parent=11 // pred_check
          %p579 = pneg %p379
        $region70: #{tpu_custom_call.1} parent=11 // pred_check_branch
          %581 = sbr.rel (%p579) target = $region72
        $region71: #{tpu_custom_call.1} parent=11 // pred_region
          %s583 = ssub.s32 2048, 2048
          %584 = vsyncadd [#allocation15], %s583
          %s585 = sshll.u32 [#allocation16], 4
          %s586 = int_to_ptr.vmem [resolvable:$true] %s585
          %591 = dma.hbm_to_vmem [thread:$0]  %s15, 2048, %s586, [#allocation15], 128, 128, 8
        $region72: #{tpu_custom_call.1} parent=11 // pred_fallthru
          _
        // Predicated region
        $region73: #{tpu_custom_call.1} parent=11 // pred_check
          %p592 = pneg %p400
        $region74: #{tpu_custom_call.1} parent=11 // pred_check_branch
          %594 = sbr.rel (%p592) target = $region76
        $region75: #{tpu_custom_call.1} parent=11 // pred_region
          _
        $region76: #{tpu_custom_call.1} parent=11 // pred_fallthru
          _
      $region12: #{tpu_custom_call.1} parent=5 // pred_fallthru
        _
      %p595 = scmp.lt.s32.totalorder %s38, 2
      // Predicated region
      $region77: #{tpu_custom_call.1} parent=5 // pred_check
        %p596 = pneg %p595
      $region78: #{tpu_custom_call.1} parent=5 // pred_check_branch
        %598 = sbr.rel (%p596) target = $region80
      $region79: #{tpu_custom_call.1} parent=5 // pred_region
        // Predicated region
        $region81: #{tpu_custom_call.1} parent=79 // pred_check
          %p599 = pneg %p58
        $region82: #{tpu_custom_call.1} parent=79 // pred_check_branch
          %601 = sbr.rel (%p599) target = $region84
        $region83: #{tpu_custom_call.1} parent=79 // pred_region
          %s602 = sand.u32 %s48, 1
          %s603 = scalar_lea.sflag [#allocation3], %s602
          %s604 = sand.u32 %s48, 1
          %s605 = smul.addr %s604, 64
          %s606 = scalar_lea.vmem [#allocation2], %s605
          %s607 = smul.u32 8, %s38
          %s609 = ssub.s32 1024, 1024
          %610 = vsyncadd %s603, %s609
          %s611 = smul.addr %s607, 128
          %s612 = scalar_lea.hbm %s0, %s611
          %s613 = sshll.u32 %s606, 4
          %s614 = int_to_ptr.vmem [resolvable:$true] %s613
          %619 = dma.hbm_to_vmem [thread:$0]  %s612, 1024, %s614, %s603, 128, 128, 8
        $region84: #{tpu_custom_call.1} parent=79 // pred_fallthru
          _
      $region80: #{tpu_custom_call.1} parent=5 // pred_fallthru
        _
      %p620 = scmp.le.s32.totalorder 1, %s38
      %p621 = scmp.lt.s32.totalorder %s38, 3
      %p622 = pnand %p620, %p621
      %p623 = pneg %p622
      // Predicated region
      $region85: #{tpu_custom_call.1} parent=5 // pred_check
        _
      $region86: #{tpu_custom_call.1} parent=5 // pred_check_branch
        %625 = sbr.rel (%p622) target = $region88
      $region87: #{tpu_custom_call.1} parent=5 // pred_region
        %s626 = ssub.s32 %s38, 1
        %s627 = sand.u32 %s51, 1
        %s628 = scalar_lea.sflag [#allocation3], %s627
        %s629 = sand.u32 %s51, 1
        %s630 = smul.addr %s629, 64
        %s631 = scalar_lea.vmem [#allocation2], %s630
        // Predicated region
        $region89: #{tpu_custom_call.1} parent=87 // pred_check
          %p632 = pneg %p64
        $region90: #{tpu_custom_call.1} parent=87 // pred_check_branch
          %634 = sbr.rel (%p632) target = $region92
        $region91: #{tpu_custom_call.1} parent=87 // pred_region
          %635 = dma.done %s628, 1024
        $region92: #{tpu_custom_call.1} parent=87 // pred_fallthru
          _
        // Predicated region
        $region93: #{tpu_custom_call.1} parent=87 // pred_check
          %p636 = pneg %p85
        $region94: #{tpu_custom_call.1} parent=87 // pred_check_branch
          %638 = sbr.rel (%p636) target = $region96
        $region95: #{tpu_custom_call.1} parent=87 // pred_region
          %639 = dma.done [#allocation6], 2048
        $region96: #{tpu_custom_call.1} parent=87 // pred_fallthru
          _
        // Predicated region
        $region97: #{tpu_custom_call.1} parent=87 // pred_check
          %p640 = pneg %p127
        $region98: #{tpu_custom_call.1} parent=87 // pred_check_branch
          %642 = sbr.rel (%p640) target = $region100
        $region99: #{tpu_custom_call.1} parent=87 // pred_region
          %643 = dma.done [#allocation6], 2048
        $region100: #{tpu_custom_call.1} parent=87 // pred_fallthru
          _
        // Predicated region
        $region101: #{tpu_custom_call.1} parent=87 // pred_check
          %p644 = pneg %p169
        $region102: #{tpu_custom_call.1} parent=87 // pred_check_branch
          %646 = sbr.rel (%p644) target = $region104
        $region103: #{tpu_custom_call.1} parent=87 // pred_region
          %647 = dma.done [#allocation9], 2048
        $region104: #{tpu_custom_call.1} parent=87 // pred_fallthru
          _
        // Predicated region
        $region105: #{tpu_custom_call.1} parent=87 // pred_check
          %p648 = pneg %p211
        $region106: #{tpu_custom_call.1} parent=87 // pred_check_branch
          %650 = sbr.rel (%p648) target = $region108
        $region107: #{tpu_custom_call.1} parent=87 // pred_region
          %651 = dma.done [#allocation9], 2048
        $region108: #{tpu_custom_call.1} parent=87 // pred_fallthru
          _
        // Predicated region
        $region109: #{tpu_custom_call.1} parent=87 // pred_check
          %p652 = pneg %p253
        $region110: #{tpu_custom_call.1} parent=87 // pred_check_branch
          %654 = sbr.rel (%p652) target = $region112
        $region111: #{tpu_custom_call.1} parent=87 // pred_region
          %655 = dma.done [#allocation12], 2048
        $region112: #{tpu_custom_call.1} parent=87 // pred_fallthru
          _
        // Predicated region
        $region113: #{tpu_custom_call.1} parent=87 // pred_check
          %p656 = pneg %p295
        $region114: #{tpu_custom_call.1} parent=87 // pred_check_branch
          %658 = sbr.rel (%p656) target = $region116
        $region115: #{tpu_custom_call.1} parent=87 // pred_region
          %659 = dma.done [#allocation12], 2048
        $region116: #{tpu_custom_call.1} parent=87 // pred_fallthru
          _
        // Predicated region
        $region117: #{tpu_custom_call.1} parent=87 // pred_check
          %p660 = pneg %p337
        $region118: #{tpu_custom_call.1} parent=87 // pred_check_branch
          %662 = sbr.rel (%p660) target = $region120
        $region119: #{tpu_custom_call.1} parent=87 // pred_region
          %663 = dma.done [#allocation15], 2048
        $region120: #{tpu_custom_call.1} parent=87 // pred_fallthru
          _
        // Predicated region
        $region121: #{tpu_custom_call.1} parent=87 // pred_check
          %p664 = pneg %p379
        $region122: #{tpu_custom_call.1} parent=87 // pred_check_branch
          %666 = sbr.rel (%p664) target = $region124
        $region123: #{tpu_custom_call.1} parent=87 // pred_region
          %667 = dma.done [#allocation15], 2048
        $region124: #{tpu_custom_call.1} parent=87 // pred_fallthru
          _
        %s668 = sand.u32 %s51, 1
        %s669 = scalar_lea.sflag [#allocation3], %s668
        %s670 = sand.u32 %s51, 1
        %s671 = smul.addr %s670, 64
        %s672 = scalar_lea.vmem [#allocation2], %s671
        %p673 = pneg %p64
        %p674 = pneg %p61
        %p675 = pneg %p85
        %p676 = pneg %p82
        %p677 = pneg %p106
        %p678 = pneg %p103
        %p679 = pneg %p127
        %p680 = pneg %p124
        %p681 = pneg %p148
        %p682 = pneg %p145
        %p683 = pneg %p169
        %p684 = pneg %p166
        %p685 = pneg %p190
        %p686 = pneg %p187
        %p687 = pneg %p211
        %p688 = pneg %p208
        %p689 = pneg %p232
        %p690 = pneg %p229
        %p691 = pneg %p253
        %p692 = pneg %p250
        %p693 = pneg %p274
        %p694 = pneg %p271
        %p695 = pneg %p295
        %p696 = pneg %p292
        %p697 = pneg %p316
        %p698 = pneg %p313
        %p699 = pneg %p337
        %p700 = pneg %p334
        %p701 = pneg %p358
        %p702 = pneg %p355
        %p703 = pneg %p379
        %p704 = pneg %p376
        %p705 = pneg %p400
        %p706 = pneg %p397
        %p707 = pneg %p426
        %p708 = pneg %p423
        %s709 = sand.u32 %s413, 1
        %s710 = scalar_lea.sflag [#allocation4], %s709
        %s711 = sand.u32 %s413, 1
        %s712 = smul.addr %s711, 64
        %s713 = scalar_lea.vmem [#allocation17], %s712
        %p714 = pneg %p452
        %p715 = pneg %p449
        %s716 = sand.u32 %s439, 1
        %s717 = scalar_lea.sflag [#allocation19], %s716
        %s718 = sand.u32 %s439, 1
        %s719 = smul.addr %s718, 64
        %s720 = scalar_lea.vmem [#allocation18], %s719
        %s721 = smul.u32 8, %s43
        %s722 = smul.u32 8, %s43
        %s723 = smul.u32 8, %s43
        %v724 = vld [vmem:[%s631] sm:$0xff]
        %v725 = vld [vmem:[%s631 + $0x8] sm:$0xff]
        %v726 = vld [vmem:[%s631 + $0x10] sm:$0xff]
        %v727 = vld [vmem:[%s631 + $0x18] sm:$0xff]
        %v728 = vld [vmem:[%s631 + $0x20] sm:$0xff]
        %v729 = vld [vmem:[%s631 + $0x28] sm:$0xff]
        %v730 = vld [vmem:[%s631 + $0x30] sm:$0xff]
        %v731 = vld [vmem:[%s631 + $0x38] sm:$0xff]
        %v732 = vld [vmem:[#allocation5] sm:$0xff]
        %v733 = vld [vmem:[#allocation5 + $0x8] sm:$0xff]
        %v734 = vld [vmem:[#allocation5 + $0x10] sm:$0xff]
        %v735 = vld [vmem:[#allocation5 + $0x18] sm:$0xff]
        %v736 = vld [vmem:[#allocation5 + $0x20] sm:$0xff]
        %v737 = vld [vmem:[#allocation5 + $0x28] sm:$0xff]
        %v738 = vld [vmem:[#allocation5 + $0x30] sm:$0xff]
        %v739 = vld [vmem:[#allocation5 + $0x38] sm:$0xff]
        %v740 = vld [vmem:[#allocation5 + $0x40] sm:$0xff]
        %v741 = vld [vmem:[#allocation5 + $0x48] sm:$0xff]
        %v742 = vld [vmem:[#allocation5 + $0x50] sm:$0xff]
        %v743 = vld [vmem:[#allocation5 + $0x58] sm:$0xff]
        %v744 = vld [vmem:[#allocation5 + $0x60] sm:$0xff]
        %v745 = vld [vmem:[#allocation5 + $0x68] sm:$0xff]
        %v746 = vld [vmem:[#allocation5 + $0x70] sm:$0xff]
        %v747 = vld [vmem:[#allocation5 + $0x78] sm:$0xff]
        %v748 = vld [vmem:[%s2] sm:$0x1]
        %v750 = vlaneseq
        %v751 = vshrl.u32 %v750, 7
        %v752 = vsub.s32 0, %v751
        %v753 = vrot.slane %v748, %v752
        %755 = vmatprep.subr.mxu0 0.0
        %756 = vmatpush1.msra.mxu0 %v747
        %757 = vmatprep.subr.mxu0 0.0
        %758 = vmatpush1.msra.mxu0 %v746
        %759 = vmatprep.subr.mxu0 0.0
        %760 = vmatpush1.msra.mxu0 %v745
        %761 = vmatprep.subr.mxu0 0.0
        %762 = vmatpush1.msra.mxu0 %v744
        %763 = vmatprep.subr.mxu0 0.0
        %764 = vmatpush1.msra.mxu0 %v743
        %765 = vmatprep.subr.mxu0 0.0
        %766 = vmatpush1.msra.mxu0 %v742
        %767 = vmatprep.subr.mxu0 0.0
        %768 = vmatpush1.msra.mxu0 %v741
        %769 = vmatprep.subr.mxu0 0.0
        %770 = vmatpush1.msra.mxu0 %v740
        %771 = vmatprep.subr.mxu0 0.0
        %772 = vmatpush1.msra.mxu0 %v739
        %773 = vmatprep.subr.mxu0 0.0
        %774 = vmatpush1.msra.mxu0 %v738
        %775 = vmatprep.subr.mxu0 0.0
        %776 = vmatpush1.msra.mxu0 %v737
        %777 = vmatprep.subr.mxu0 0.0
        %778 = vmatpush1.msra.mxu0 %v736
        %779 = vmatprep.subr.mxu0 0.0
        %780 = vmatpush1.msra.mxu0 %v735
        %781 = vmatprep.subr.mxu0 0.0
        %782 = vmatpush1.msra.mxu0 %v734
        %783 = vmatprep.subr.mxu0 0.0
        %784 = vmatpush1.msra.mxu0 %v733
        %785 = vmatprep.subr.mxu0 0.0
        %786 = vmatpush1.msra.mxu0 %v732
        %787 = vmatprep.subr.mxu0 0.0
        %788 = vmatpush2.msra.mxu0 0.0
        %789 = vmatprep.subr.mxu0 0.0
        %790 = vmatpush2.msra.mxu0 0.0
        %791 = vmatprep.subr.mxu0 0.0
        %792 = vmatpush2.msra.mxu0 0.0
        %793 = vmatprep.subr.mxu0 0.0
        %794 = vmatpush2.msra.mxu0 0.0
        %795 = vmatprep.subr.mxu0 0.0
        %796 = vmatpush2.msra.mxu0 0.0
        %797 = vmatprep.subr.mxu0 0.0
        %798 = vmatpush2.msra.mxu0 0.0
        %799 = vmatprep.subr.mxu0 0.0
        %800 = vmatpush2.msra.mxu0 0.0
        %801 = vmatprep.subr.mxu0 0.0
        %802 = vmatpush2.msra.mxu0 0.0
        %803 = vmatprep.subr.mxu0 0.0
        %804 = vmatpush2.msra.mxu0 0.0
        %805 = vmatprep.subr.mxu0 0.0
        %806 = vmatpush2.msra.mxu0 0.0
        %807 = vmatprep.subr.mxu0 0.0
        %808 = vmatpush2.msra.mxu0 0.0
        %809 = vmatprep.subr.mxu0 0.0
        %810 = vmatpush2.msra.mxu0 0.0
        %811 = vmatprep.subr.mxu0 0.0
        %812 = vmatpush2.msra.mxu0 0.0
        %813 = vmatprep.subr.mxu0 0.0
        %814 = vmatpush2.msra.mxu0 0.0
        %815 = vmatprep.subr.mxu0 0.0
        %816 = vmatpush2.msra.mxu0 0.0
        %817 = vmatprep.subr.mxu0 0.0
        %818 = vmatpush2.msra.mxu0 0.0
        %819 = vmatprep.mubr.f32.mxu0 0.0
        %820 = vmatmul.mubr.f32.gmra.mxu0 %v724
        %v821 = vpop.f32.mrf.mxu0
        %v822 = vadd.f32 %v753, %v821
        %v823 = vpop.f32.mrf.mxu0
        %824 = vmatprep.mubr.f32.mxu0 0.0
        %825 = vmatmul.mubr.f32.gmra.mxu0 %v725
        %v826 = vpop.f32.mrf.mxu0
        %v827 = vadd.f32 %v753, %v826
        %v828 = vpop.f32.mrf.mxu0
        %829 = vmatprep.mubr.f32.mxu0 0.0
        %830 = vmatmul.mubr.f32.gmra.mxu0 %v726
        %v831 = vpop.f32.mrf.mxu0
        %v832 = vadd.f32 %v753, %v831
        %v833 = vpop.f32.mrf.mxu0
        %834 = vmatprep.mubr.f32.mxu0 0.0
        %835 = vmatmul.mubr.f32.gmra.mxu0 %v727
        %v836 = vpop.f32.mrf.mxu0
        %v837 = vadd.f32 %v753, %v836
        %v838 = vpop.f32.mrf.mxu0
        %839 = vmatprep.mubr.f32.mxu0 0.0
        %840 = vmatmul.mubr.f32.gmra.mxu0 %v728
        %v841 = vpop.f32.mrf.mxu0
        %v842 = vadd.f32 %v753, %v841
        %v843 = vpop.f32.mrf.mxu0
        %844 = vmatprep.mubr.f32.mxu0 0.0
        %845 = vmatmul.mubr.f32.gmra.mxu0 %v729
        %v846 = vpop.f32.mrf.mxu0
        %v847 = vadd.f32 %v753, %v846
        %v848 = vpop.f32.mrf.mxu0
        %849 = vmatprep.mubr.f32.mxu0 0.0
        %850 = vmatmul.mubr.f32.gmra.mxu0 %v730
        %v851 = vpop.f32.mrf.mxu0
        %v852 = vadd.f32 %v753, %v851
        %v853 = vpop.f32.mrf.mxu0
        %854 = vmatprep.mubr.f32.mxu0 0.0
        %855 = vmatmul.mubr.f32.gmra.mxu0 %v731
        %v856 = vpop.f32.mrf.mxu0
        %v857 = vadd.f32 %v753, %v856
        %v858 = vpop.f32.mrf.mxu0
        %859 = vdwg.mxu0
        %v860 = vmax.f32 %v822, 0.0
        %v861 = vmax.f32 %v827, 0.0
        %v862 = vmax.f32 %v832, 0.0
        %v863 = vmax.f32 %v837, 0.0
        %v864 = vmax.f32 %v842, 0.0
        %v865 = vmax.f32 %v847, 0.0
        %v866 = vmax.f32 %v852, 0.0
        %v867 = vmax.f32 %v857, 0.0
        %v868 = vld [vmem:[#allocation7] sm:$0xff]
        %v869 = vld [vmem:[#allocation7 + $0x8] sm:$0xff]
        %v870 = vld [vmem:[#allocation7 + $0x10] sm:$0xff]
        %v871 = vld [vmem:[#allocation7 + $0x18] sm:$0xff]
        %v872 = vld [vmem:[#allocation7 + $0x20] sm:$0xff]
        %v873 = vld [vmem:[#allocation7 + $0x28] sm:$0xff]
        %v874 = vld [vmem:[#allocation7 + $0x30] sm:$0xff]
        %v875 = vld [vmem:[#allocation7 + $0x38] sm:$0xff]
        %v876 = vld [vmem:[#allocation7 + $0x40] sm:$0xff]
        %v877 = vld [vmem:[#allocation7 + $0x48] sm:$0xff]
        %v878 = vld [vmem:[#allocation7 + $0x50] sm:$0xff]
        %v879 = vld [vmem:[#allocation7 + $0x58] sm:$0xff]
        %v880 = vld [vmem:[#allocation7 + $0x60] sm:$0xff]
        %v881 = vld [vmem:[#allocation7 + $0x68] sm:$0xff]
        %v882 = vld [vmem:[#allocation7 + $0x70] sm:$0xff]
        %v883 = vld [vmem:[#allocation7 + $0x78] sm:$0xff]
        %v884 = vld [vmem:[%s4] sm:$0x1]
        %v886 = vlaneseq
        %v887 = vshrl.u32 %v886, 7
        %v888 = vsub.s32 0, %v887
        %v889 = vrot.slane %v884, %v888
        %891 = vmatprep.subr.mxu0 0.0
        %892 = vmatpush1.msra.mxu0 %v883
        %893 = vmatprep.subr.mxu0 0.0
        %894 = vmatpush1.msra.mxu0 %v882
        %895 = vmatprep.subr.mxu0 0.0
        %896 = vmatpush1.msra.mxu0 %v881
        %897 = vmatprep.subr.mxu0 0.0
        %898 = vmatpush1.msra.mxu0 %v880
        %899 = vmatprep.subr.mxu0 0.0
        %900 = vmatpush1.msra.mxu0 %v879
        %901 = vmatprep.subr.mxu0 0.0
        %902 = vmatpush1.msra.mxu0 %v878
        %903 = vmatprep.subr.mxu0 0.0
        %904 = vmatpush1.msra.mxu0 %v877
        %905 = vmatprep.subr.mxu0 0.0
        %906 = vmatpush1.msra.mxu0 %v876
        %907 = vmatprep.subr.mxu0 0.0
        %908 = vmatpush1.msra.mxu0 %v875
        %909 = vmatprep.subr.mxu0 0.0
        %910 = vmatpush1.msra.mxu0 %v874
        %911 = vmatprep.subr.mxu0 0.0
        %912 = vmatpush1.msra.mxu0 %v873
        %913 = vmatprep.subr.mxu0 0.0
        %914 = vmatpush1.msra.mxu0 %v872
        %915 = vmatprep.subr.mxu0 0.0
        %916 = vmatpush1.msra.mxu0 %v871
        %917 = vmatprep.subr.mxu0 0.0
        %918 = vmatpush1.msra.mxu0 %v870
        %919 = vmatprep.subr.mxu0 0.0
        %920 = vmatpush1.msra.mxu0 %v869
        %921 = vmatprep.subr.mxu0 0.0
        %922 = vmatpush1.msra.mxu0 %v868
        %923 = vmatprep.subr.mxu0 0.0
        %924 = vmatpush2.msra.mxu0 0.0
        %925 = vmatprep.subr.mxu0 0.0
        %926 = vmatpush2.msra.mxu0 0.0
        %927 = vmatprep.subr.mxu0 0.0
        %928 = vmatpush2.msra.mxu0 0.0
        %929 = vmatprep.subr.mxu0 0.0
        %930 = vmatpush2.msra.mxu0 0.0
        %931 = vmatprep.subr.mxu0 0.0
        %932 = vmatpush2.msra.mxu0 0.0
        %933 = vmatprep.subr.mxu0 0.0
        %934 = vmatpush2.msra.mxu0 0.0
        %935 = vmatprep.subr.mxu0 0.0
        %936 = vmatpush2.msra.mxu0 0.0
        %937 = vmatprep.subr.mxu0 0.0
        %938 = vmatpush2.msra.mxu0 0.0
        %939 = vmatprep.subr.mxu0 0.0
        %940 = vmatpush2.msra.mxu0 0.0
        %941 = vmatprep.subr.mxu0 0.0
        %942 = vmatpush2.msra.mxu0 0.0
        %943 = vmatprep.subr.mxu0 0.0
        %944 = vmatpush2.msra.mxu0 0.0
        %945 = vmatprep.subr.mxu0 0.0
        %946 = vmatpush2.msra.mxu0 0.0
        %947 = vmatprep.subr.mxu0 0.0
        %948 = vmatpush2.msra.mxu0 0.0
        %949 = vmatprep.subr.mxu0 0.0
        %950 = vmatpush2.msra.mxu0 0.0
        %951 = vmatprep.subr.mxu0 0.0
        %952 = vmatpush2.msra.mxu0 0.0
        %953 = vmatprep.subr.mxu0 0.0
        %954 = vmatpush2.msra.mxu0 0.0
        %955 = vmatprep.mubr.f32.mxu0 0.0
        %956 = vmatmul.mubr.f32.gmra.mxu0 %v860
        %v957 = vpop.f32.mrf.mxu0
        %v958 = vadd.f32 %v889, %v957
        %v959 = vpop.f32.mrf.mxu0
        %960 = vmatprep.mubr.f32.mxu0 0.0
        %961 = vmatmul.mubr.f32.gmra.mxu0 %v861
        %v962 = vpop.f32.mrf.mxu0
        %v963 = vadd.f32 %v889, %v962
        %v964 = vpop.f32.mrf.mxu0
        %965 = vmatprep.mubr.f32.mxu0 0.0
        %966 = vmatmul.mubr.f32.gmra.mxu0 %v862
        %v967 = vpop.f32.mrf.mxu0
        %v968 = vadd.f32 %v889, %v967
        %v969 = vpop.f32.mrf.mxu0
        %970 = vmatprep.mubr.f32.mxu0 0.0
        %971 = vmatmul.mubr.f32.gmra.mxu0 %v863
        %v972 = vpop.f32.mrf.mxu0
        %v973 = vadd.f32 %v889, %v972
        %v974 = vpop.f32.mrf.mxu0
        %975 = vmatprep.mubr.f32.mxu0 0.0
        %976 = vmatmul.mubr.f32.gmra.mxu0 %v864
        %v977 = vpop.f32.mrf.mxu0
        %v978 = vadd.f32 %v889, %v977
        %v979 = vpop.f32.mrf.mxu0
        %980 = vmatprep.mubr.f32.mxu0 0.0
        %981 = vmatmul.mubr.f32.gmra.mxu0 %v865
        %v982 = vpop.f32.mrf.mxu0
        %v983 = vadd.f32 %v889, %v982
        %v984 = vpop.f32.mrf.mxu0
        %985 = vmatprep.mubr.f32.mxu0 0.0
        %986 = vmatmul.mubr.f32.gmra.mxu0 %v866
        %v987 = vpop.f32.mrf.mxu0
        %v988 = vadd.f32 %v889, %v987
        %v989 = vpop.f32.mrf.mxu0
        %990 = vmatprep.mubr.f32.mxu0 0.0
        %991 = vmatmul.mubr.f32.gmra.mxu0 %v867
        %v992 = vpop.f32.mrf.mxu0
        %v993 = vadd.f32 %v889, %v992
        %v994 = vpop.f32.mrf.mxu0
        %995 = vdwg.mxu0
        %v996 = vmax.f32 %v958, 0.0
        %v997 = vmax.f32 %v963, 0.0
        %v998 = vmax.f32 %v968, 0.0
        %v999 = vmax.f32 %v973, 0.0
        %v1000 = vmax.f32 %v978, 0.0
        %v1001 = vmax.f32 %v983, 0.0
        %v1002 = vmax.f32 %v988, 0.0
        %v1003 = vmax.f32 %v993, 0.0
        %v1004 = vld [vmem:[#allocation8] sm:$0xff]
        %v1005 = vld [vmem:[#allocation8 + $0x8] sm:$0xff]
        %v1006 = vld [vmem:[#allocation8 + $0x10] sm:$0xff]
        %v1007 = vld [vmem:[#allocation8 + $0x18] sm:$0xff]
        %v1008 = vld [vmem:[#allocation8 + $0x20] sm:$0xff]
        %v1009 = vld [vmem:[#allocation8 + $0x28] sm:$0xff]
        %v1010 = vld [vmem:[#allocation8 + $0x30] sm:$0xff]
        %v1011 = vld [vmem:[#allocation8 + $0x38] sm:$0xff]
        %v1012 = vld [vmem:[#allocation8 + $0x40] sm:$0xff]
        %v1013 = vld [vmem:[#allocation8 + $0x48] sm:$0xff]
        %v1014 = vld [vmem:[#allocation8 + $0x50] sm:$0xff]
        %v1015 = vld [vmem:[#allocation8 + $0x58] sm:$0xff]
        %v1016 = vld [vmem:[#allocation8 + $0x60] sm:$0xff]
        %v1017 = vld [vmem:[#allocation8 + $0x68] sm:$0xff]
        %v1018 = vld [vmem:[#allocation8 + $0x70] sm:$0xff]
        %v1019 = vld [vmem:[#allocation8 + $0x78] sm:$0xff]
        %v1020 = vld [vmem:[%s6] sm:$0x1]
        %v1022 = vlaneseq
        %v1023 = vshrl.u32 %v1022, 7
        %v1024 = vsub.s32 0, %v1023
        %v1025 = vrot.slane %v1020, %v1024
        %1027 = vmatprep.subr.mxu0 0.0
        %1028 = vmatpush1.msra.mxu0 %v1019
        %1029 = vmatprep.subr.mxu0 0.0
        %1030 = vmatpush1.msra.mxu0 %v1018
        %1031 = vmatprep.subr.mxu0 0.0
        %1032 = vmatpush1.msra.mxu0 %v1017
        %1033 = vmatprep.subr.mxu0 0.0
        %1034 = vmatpush1.msra.mxu0 %v1016
        %1035 = vmatprep.subr.mxu0 0.0
        %1036 = vmatpush1.msra.mxu0 %v1015
        %1037 = vmatprep.subr.mxu0 0.0
        %1038 = vmatpush1.msra.mxu0 %v1014
        %1039 = vmatprep.subr.mxu0 0.0
        %1040 = vmatpush1.msra.mxu0 %v1013
        %1041 = vmatprep.subr.mxu0 0.0
        %1042 = vmatpush1.msra.mxu0 %v1012
        %1043 = vmatprep.subr.mxu0 0.0
        %1044 = vmatpush1.msra.mxu0 %v1011
        %1045 = vmatprep.subr.mxu0 0.0
        %1046 = vmatpush1.msra.mxu0 %v1010
        %1047 = vmatprep.subr.mxu0 0.0
        %1048 = vmatpush1.msra.mxu0 %v1009
        %1049 = vmatprep.subr.mxu0 0.0
        %1050 = vmatpush1.msra.mxu0 %v1008
        %1051 = vmatprep.subr.mxu0 0.0
        %1052 = vmatpush1.msra.mxu0 %v1007
        %1053 = vmatprep.subr.mxu0 0.0
        %1054 = vmatpush1.msra.mxu0 %v1006
        %1055 = vmatprep.subr.mxu0 0.0
        %1056 = vmatpush1.msra.mxu0 %v1005
        %1057 = vmatprep.subr.mxu0 0.0
        %1058 = vmatpush1.msra.mxu0 %v1004
        %1059 = vmatprep.subr.mxu0 0.0
        %1060 = vmatpush2.msra.mxu0 0.0
        %1061 = vmatprep.subr.mxu0 0.0
        %1062 = vmatpush2.msra.mxu0 0.0
        %1063 = vmatprep.subr.mxu0 0.0
        %1064 = vmatpush2.msra.mxu0 0.0
        %1065 = vmatprep.subr.mxu0 0.0
        %1066 = vmatpush2.msra.mxu0 0.0
        %1067 = vmatprep.subr.mxu0 0.0
        %1068 = vmatpush2.msra.mxu0 0.0
        %1069 = vmatprep.subr.mxu0 0.0
        %1070 = vmatpush2.msra.mxu0 0.0
        %1071 = vmatprep.subr.mxu0 0.0
        %1072 = vmatpush2.msra.mxu0 0.0
        %1073 = vmatprep.subr.mxu0 0.0
        %1074 = vmatpush2.msra.mxu0 0.0
        %1075 = vmatprep.subr.mxu0 0.0
        %1076 = vmatpush2.msra.mxu0 0.0
        %1077 = vmatprep.subr.mxu0 0.0
        %1078 = vmatpush2.msra.mxu0 0.0
        %1079 = vmatprep.subr.mxu0 0.0
        %1080 = vmatpush2.msra.mxu0 0.0
        %1081 = vmatprep.subr.mxu0 0.0
        %1082 = vmatpush2.msra.mxu0 0.0
        %1083 = vmatprep.subr.mxu0 0.0
        %1084 = vmatpush2.msra.mxu0 0.0
        %1085 = vmatprep.subr.mxu0 0.0
        %1086 = vmatpush2.msra.mxu0 0.0
        %1087 = vmatprep.subr.mxu0 0.0
        %1088 = vmatpush2.msra.mxu0 0.0
        %1089 = vmatprep.subr.mxu0 0.0
        %1090 = vmatpush2.msra.mxu0 0.0
        %1091 = vmatprep.mubr.f32.mxu0 0.0
        %1092 = vmatmul.mubr.f32.gmra.mxu0 %v996
        %v1093 = vpop.f32.mrf.mxu0
        %v1094 = vadd.f32 %v1025, %v1093
        %v1095 = vpop.f32.mrf.mxu0
        %1096 = vmatprep.mubr.f32.mxu0 0.0
        %1097 = vmatmul.mubr.f32.gmra.mxu0 %v997
        %v1098 = vpop.f32.mrf.mxu0
        %v1099 = vadd.f32 %v1025, %v1098
        %v1100 = vpop.f32.mrf.mxu0
        %1101 = vmatprep.mubr.f32.mxu0 0.0
        %1102 = vmatmul.mubr.f32.gmra.mxu0 %v998
        %v1103 = vpop.f32.mrf.mxu0
        %v1104 = vadd.f32 %v1025, %v1103
        %v1105 = vpop.f32.mrf.mxu0
        %1106 = vmatprep.mubr.f32.mxu0 0.0
        %1107 = vmatmul.mubr.f32.gmra.mxu0 %v999
        %v1108 = vpop.f32.mrf.mxu0
        %v1109 = vadd.f32 %v1025, %v1108
        %v1110 = vpop.f32.mrf.mxu0
        %1111 = vmatprep.mubr.f32.mxu0 0.0
        %1112 = vmatmul.mubr.f32.gmra.mxu0 %v1000
        %v1113 = vpop.f32.mrf.mxu0
        %v1114 = vadd.f32 %v1025, %v1113
        %v1115 = vpop.f32.mrf.mxu0
        %1116 = vmatprep.mubr.f32.mxu0 0.0
        %1117 = vmatmul.mubr.f32.gmra.mxu0 %v1001
        %v1118 = vpop.f32.mrf.mxu0
        %v1119 = vadd.f32 %v1025, %v1118
        %v1120 = vpop.f32.mrf.mxu0
        %1121 = vmatprep.mubr.f32.mxu0 0.0
        %1122 = vmatmul.mubr.f32.gmra.mxu0 %v1002
        %v1123 = vpop.f32.mrf.mxu0
        %v1124 = vadd.f32 %v1025, %v1123
        %v1125 = vpop.f32.mrf.mxu0
        %1126 = vmatprep.mubr.f32.mxu0 0.0
        %1127 = vmatmul.mubr.f32.gmra.mxu0 %v1003
        %v1128 = vpop.f32.mrf.mxu0
        %v1129 = vadd.f32 %v1025, %v1128
        %v1130 = vpop.f32.mrf.mxu0
        %1131 = vdwg.mxu0
        %v1132 = vmax.f32 %v1094, 0.0
        %v1133 = vmax.f32 %v1099, 0.0
        %v1134 = vmax.f32 %v1104, 0.0
        %v1135 = vmax.f32 %v1109, 0.0
        %v1136 = vmax.f32 %v1114, 0.0
        %v1137 = vmax.f32 %v1119, 0.0
        %v1138 = vmax.f32 %v1124, 0.0
        %v1139 = vmax.f32 %v1129, 0.0
        %v1140 = vld [vmem:[#allocation10] sm:$0xff]
        %v1141 = vld [vmem:[#allocation10 + $0x8] sm:$0xff]
        %v1142 = vld [vmem:[#allocation10 + $0x10] sm:$0xff]
        %v1143 = vld [vmem:[#allocation10 + $0x18] sm:$0xff]
        %v1144 = vld [vmem:[#allocation10 + $0x20] sm:$0xff]
        %v1145 = vld [vmem:[#allocation10 + $0x28] sm:$0xff]
        %v1146 = vld [vmem:[#allocation10 + $0x30] sm:$0xff]
        %v1147 = vld [vmem:[#allocation10 + $0x38] sm:$0xff]
        %v1148 = vld [vmem:[#allocation10 + $0x40] sm:$0xff]
        %v1149 = vld [vmem:[#allocation10 + $0x48] sm:$0xff]
        %v1150 = vld [vmem:[#allocation10 + $0x50] sm:$0xff]
        %v1151 = vld [vmem:[#allocation10 + $0x58] sm:$0xff]
        %v1152 = vld [vmem:[#allocation10 + $0x60] sm:$0xff]
        %v1153 = vld [vmem:[#allocation10 + $0x68] sm:$0xff]
        %v1154 = vld [vmem:[#allocation10 + $0x70] sm:$0xff]
        %v1155 = vld [vmem:[#allocation10 + $0x78] sm:$0xff]
        %v1156 = vld [vmem:[%s8] sm:$0x1]
        %v1158 = vlaneseq
        %v1159 = vshrl.u32 %v1158, 7
        %v1160 = vsub.s32 0, %v1159
        %v1161 = vrot.slane %v1156, %v1160
        %1163 = vmatprep.subr.mxu0 0.0
        %1164 = vmatpush1.msra.mxu0 %v1155
        %1165 = vmatprep.subr.mxu0 0.0
        %1166 = vmatpush1.msra.mxu0 %v1154
        %1167 = vmatprep.subr.mxu0 0.0
        %1168 = vmatpush1.msra.mxu0 %v1153
        %1169 = vmatprep.subr.mxu0 0.0
        %1170 = vmatpush1.msra.mxu0 %v1152
        %1171 = vmatprep.subr.mxu0 0.0
        %1172 = vmatpush1.msra.mxu0 %v1151
        %1173 = vmatprep.subr.mxu0 0.0
        %1174 = vmatpush1.msra.mxu0 %v1150
        %1175 = vmatprep.subr.mxu0 0.0
        %1176 = vmatpush1.msra.mxu0 %v1149
        %1177 = vmatprep.subr.mxu0 0.0
        %1178 = vmatpush1.msra.mxu0 %v1148
        %1179 = vmatprep.subr.mxu0 0.0
        %1180 = vmatpush1.msra.mxu0 %v1147
        %1181 = vmatprep.subr.mxu0 0.0
        %1182 = vmatpush1.msra.mxu0 %v1146
        %1183 = vmatprep.subr.mxu0 0.0
        %1184 = vmatpush1.msra.mxu0 %v1145
        %1185 = vmatprep.subr.mxu0 0.0
        %1186 = vmatpush1.msra.mxu0 %v1144
        %1187 = vmatprep.subr.mxu0 0.0
        %1188 = vmatpush1.msra.mxu0 %v1143
        %1189 = vmatprep.subr.mxu0 0.0
        %1190 = vmatpush1.msra.mxu0 %v1142
        %1191 = vmatprep.subr.mxu0 0.0
        %1192 = vmatpush1.msra.mxu0 %v1141
        %1193 = vmatprep.subr.mxu0 0.0
        %1194 = vmatpush1.msra.mxu0 %v1140
        %1195 = vmatprep.subr.mxu0 0.0
        %1196 = vmatpush2.msra.mxu0 0.0
        %1197 = vmatprep.subr.mxu0 0.0
        %1198 = vmatpush2.msra.mxu0 0.0
        %1199 = vmatprep.subr.mxu0 0.0
        %1200 = vmatpush2.msra.mxu0 0.0
        %1201 = vmatprep.subr.mxu0 0.0
        %1202 = vmatpush2.msra.mxu0 0.0
        %1203 = vmatprep.subr.mxu0 0.0
        %1204 = vmatpush2.msra.mxu0 0.0
        %1205 = vmatprep.subr.mxu0 0.0
        %1206 = vmatpush2.msra.mxu0 0.0
        %1207 = vmatprep.subr.mxu0 0.0
        %1208 = vmatpush2.msra.mxu0 0.0
        %1209 = vmatprep.subr.mxu0 0.0
        %1210 = vmatpush2.msra.mxu0 0.0
        %1211 = vmatprep.subr.mxu0 0.0
        %1212 = vmatpush2.msra.mxu0 0.0
        %1213 = vmatprep.subr.mxu0 0.0
        %1214 = vmatpush2.msra.mxu0 0.0
        %1215 = vmatprep.subr.mxu0 0.0
        %1216 = vmatpush2.msra.mxu0 0.0
        %1217 = vmatprep.subr.mxu0 0.0
        %1218 = vmatpush2.msra.mxu0 0.0
        %1219 = vmatprep.subr.mxu0 0.0
        %1220 = vmatpush2.msra.mxu0 0.0
        %1221 = vmatprep.subr.mxu0 0.0
        %1222 = vmatpush2.msra.mxu0 0.0
        %1223 = vmatprep.subr.mxu0 0.0
        %1224 = vmatpush2.msra.mxu0 0.0
        %1225 = vmatprep.subr.mxu0 0.0
        %1226 = vmatpush2.msra.mxu0 0.0
        %1227 = vmatprep.mubr.f32.mxu0 0.0
        %1228 = vmatmul.mubr.f32.gmra.mxu0 %v1132
        %v1229 = vpop.f32.mrf.mxu0
        %v1230 = vadd.f32 %v1161, %v1229
        %v1231 = vpop.f32.mrf.mxu0
        %1232 = vmatprep.mubr.f32.mxu0 0.0
        %1233 = vmatmul.mubr.f32.gmra.mxu0 %v1133
        %v1234 = vpop.f32.mrf.mxu0
        %v1235 = vadd.f32 %v1161, %v1234
        %v1236 = vpop.f32.mrf.mxu0
        %1237 = vmatprep.mubr.f32.mxu0 0.0
        %1238 = vmatmul.mubr.f32.gmra.mxu0 %v1134
        %v1239 = vpop.f32.mrf.mxu0
        %v1240 = vadd.f32 %v1161, %v1239
        %v1241 = vpop.f32.mrf.mxu0
        %1242 = vmatprep.mubr.f32.mxu0 0.0
        %1243 = vmatmul.mubr.f32.gmra.mxu0 %v1135
        %v1244 = vpop.f32.mrf.mxu0
        %v1245 = vadd.f32 %v1161, %v1244
        %v1246 = vpop.f32.mrf.mxu0
        %1247 = vmatprep.mubr.f32.mxu0 0.0
        %1248 = vmatmul.mubr.f32.gmra.mxu0 %v1136
        %v1249 = vpop.f32.mrf.mxu0
        %v1250 = vadd.f32 %v1161, %v1249
        %v1251 = vpop.f32.mrf.mxu0
        %1252 = vmatprep.mubr.f32.mxu0 0.0
        %1253 = vmatmul.mubr.f32.gmra.mxu0 %v1137
        %v1254 = vpop.f32.mrf.mxu0
        %v1255 = vadd.f32 %v1161, %v1254
        %v1256 = vpop.f32.mrf.mxu0
        %1257 = vmatprep.mubr.f32.mxu0 0.0
        %1258 = vmatmul.mubr.f32.gmra.mxu0 %v1138
        %v1259 = vpop.f32.mrf.mxu0
        %v1260 = vadd.f32 %v1161, %v1259
        %v1261 = vpop.f32.mrf.mxu0
        %1262 = vmatprep.mubr.f32.mxu0 0.0
        %1263 = vmatmul.mubr.f32.gmra.mxu0 %v1139
        %v1264 = vpop.f32.mrf.mxu0
        %v1265 = vadd.f32 %v1161, %v1264
        %v1266 = vpop.f32.mrf.mxu0
        %1267 = vdwg.mxu0
        %1268 = vst [vmem:[%s713] sm:$0xff] %v1230
        %1269 = vst [vmem:[%s713 + $0x8] sm:$0xff] %v1235
        %1270 = vst [vmem:[%s713 + $0x10] sm:$0xff] %v1240
        %1271 = vst [vmem:[%s713 + $0x18] sm:$0xff] %v1245
        %1272 = vst [vmem:[%s713 + $0x20] sm:$0xff] %v1250
        %1273 = vst [vmem:[%s713 + $0x28] sm:$0xff] %v1255
        %1274 = vst [vmem:[%s713 + $0x30] sm:$0xff] %v1260
        %1275 = vst [vmem:[%s713 + $0x38] sm:$0xff] %v1265
        %v1276 = vld [vmem:[#allocation11] sm:$0xff]
        %v1277 = vld [vmem:[#allocation11 + $0x8] sm:$0xff]
        %v1278 = vld [vmem:[#allocation11 + $0x10] sm:$0xff]
        %v1279 = vld [vmem:[#allocation11 + $0x18] sm:$0xff]
        %v1280 = vld [vmem:[#allocation11 + $0x20] sm:$0xff]
        %v1281 = vld [vmem:[#allocation11 + $0x28] sm:$0xff]
        %v1282 = vld [vmem:[#allocation11 + $0x30] sm:$0xff]
        %v1283 = vld [vmem:[#allocation11 + $0x38] sm:$0xff]
        %v1284 = vld [vmem:[#allocation11 + $0x40] sm:$0xff]
        %v1285 = vld [vmem:[#allocation11 + $0x48] sm:$0xff]
        %v1286 = vld [vmem:[#allocation11 + $0x50] sm:$0xff]
        %v1287 = vld [vmem:[#allocation11 + $0x58] sm:$0xff]
        %v1288 = vld [vmem:[#allocation11 + $0x60] sm:$0xff]
        %v1289 = vld [vmem:[#allocation11 + $0x68] sm:$0xff]
        %v1290 = vld [vmem:[#allocation11 + $0x70] sm:$0xff]
        %v1291 = vld [vmem:[#allocation11 + $0x78] sm:$0xff]
        %v1292 = vld [vmem:[%s10] sm:$0x1]
        %v1294 = vlaneseq
        %v1295 = vshrl.u32 %v1294, 7
        %v1296 = vsub.s32 0, %v1295
        %v1297 = vrot.slane %v1292, %v1296
        %1299 = vmatprep.subr.mxu0 0.0
        %1300 = vmatpush1.msra.mxu0 %v1291
        %1301 = vmatprep.subr.mxu0 0.0
        %1302 = vmatpush1.msra.mxu0 %v1290
        %1303 = vmatprep.subr.mxu0 0.0
        %1304 = vmatpush1.msra.mxu0 %v1289
        %1305 = vmatprep.subr.mxu0 0.0
        %1306 = vmatpush1.msra.mxu0 %v1288
        %1307 = vmatprep.subr.mxu0 0.0
        %1308 = vmatpush1.msra.mxu0 %v1287
        %1309 = vmatprep.subr.mxu0 0.0
        %1310 = vmatpush1.msra.mxu0 %v1286
        %1311 = vmatprep.subr.mxu0 0.0
        %1312 = vmatpush1.msra.mxu0 %v1285
        %1313 = vmatprep.subr.mxu0 0.0
        %1314 = vmatpush1.msra.mxu0 %v1284
        %1315 = vmatprep.subr.mxu0 0.0
        %1316 = vmatpush1.msra.mxu0 %v1283
        %1317 = vmatprep.subr.mxu0 0.0
        %1318 = vmatpush1.msra.mxu0 %v1282
        %1319 = vmatprep.subr.mxu0 0.0
        %1320 = vmatpush1.msra.mxu0 %v1281
        %1321 = vmatprep.subr.mxu0 0.0
        %1322 = vmatpush1.msra.mxu0 %v1280
        %1323 = vmatprep.subr.mxu0 0.0
        %1324 = vmatpush1.msra.mxu0 %v1279
        %1325 = vmatprep.subr.mxu0 0.0
        %1326 = vmatpush1.msra.mxu0 %v1278
        %1327 = vmatprep.subr.mxu0 0.0
        %1328 = vmatpush1.msra.mxu0 %v1277
        %1329 = vmatprep.subr.mxu0 0.0
        %1330 = vmatpush1.msra.mxu0 %v1276
        %1331 = vmatprep.subr.mxu0 0.0
        %1332 = vmatpush2.msra.mxu0 0.0
        %1333 = vmatprep.subr.mxu0 0.0
        %1334 = vmatpush2.msra.mxu0 0.0
        %1335 = vmatprep.subr.mxu0 0.0
        %1336 = vmatpush2.msra.mxu0 0.0
        %1337 = vmatprep.subr.mxu0 0.0
        %1338 = vmatpush2.msra.mxu0 0.0
        %1339 = vmatprep.subr.mxu0 0.0
        %1340 = vmatpush2.msra.mxu0 0.0
        %1341 = vmatprep.subr.mxu0 0.0
        %1342 = vmatpush2.msra.mxu0 0.0
        %1343 = vmatprep.subr.mxu0 0.0
        %1344 = vmatpush2.msra.mxu0 0.0
        %1345 = vmatprep.subr.mxu0 0.0
        %1346 = vmatpush2.msra.mxu0 0.0
        %1347 = vmatprep.subr.mxu0 0.0
        %1348 = vmatpush2.msra.mxu0 0.0
        %1349 = vmatprep.subr.mxu0 0.0
        %1350 = vmatpush2.msra.mxu0 0.0
        %1351 = vmatprep.subr.mxu0 0.0
        %1352 = vmatpush2.msra.mxu0 0.0
        %1353 = vmatprep.subr.mxu0 0.0
        %1354 = vmatpush2.msra.mxu0 0.0
        %1355 = vmatprep.subr.mxu0 0.0
        %1356 = vmatpush2.msra.mxu0 0.0
        %1357 = vmatprep.subr.mxu0 0.0
        %1358 = vmatpush2.msra.mxu0 0.0
        %1359 = vmatprep.subr.mxu0 0.0
        %1360 = vmatpush2.msra.mxu0 0.0
        %1361 = vmatprep.subr.mxu0 0.0
        %1362 = vmatpush2.msra.mxu0 0.0
        %1363 = vmatprep.mubr.f32.mxu0 0.0
        %1364 = vmatmul.mubr.f32.gmra.mxu0 %v1230
        %v1365 = vpop.f32.mrf.mxu0
        %v1366 = vadd.f32 %v1297, %v1365
        %v1367 = vpop.f32.mrf.mxu0
        %1368 = vmatprep.mubr.f32.mxu0 0.0
        %1369 = vmatmul.mubr.f32.gmra.mxu0 %v1235
        %v1370 = vpop.f32.mrf.mxu0
        %v1371 = vadd.f32 %v1297, %v1370
        %v1372 = vpop.f32.mrf.mxu0
        %1373 = vmatprep.mubr.f32.mxu0 0.0
        %1374 = vmatmul.mubr.f32.gmra.mxu0 %v1240
        %v1375 = vpop.f32.mrf.mxu0
        %v1376 = vadd.f32 %v1297, %v1375
        %v1377 = vpop.f32.mrf.mxu0
        %1378 = vmatprep.mubr.f32.mxu0 0.0
        %1379 = vmatmul.mubr.f32.gmra.mxu0 %v1245
        %v1380 = vpop.f32.mrf.mxu0
        %v1381 = vadd.f32 %v1297, %v1380
        %v1382 = vpop.f32.mrf.mxu0
        %1383 = vmatprep.mubr.f32.mxu0 0.0
        %1384 = vmatmul.mubr.f32.gmra.mxu0 %v1250
        %v1385 = vpop.f32.mrf.mxu0
        %v1386 = vadd.f32 %v1297, %v1385
        %v1387 = vpop.f32.mrf.mxu0
        %1388 = vmatprep.mubr.f32.mxu0 0.0
        %1389 = vmatmul.mubr.f32.gmra.mxu0 %v1255
        %v1390 = vpop.f32.mrf.mxu0
        %v1391 = vadd.f32 %v1297, %v1390
        %v1392 = vpop.f32.mrf.mxu0
        %1393 = vmatprep.mubr.f32.mxu0 0.0
        %1394 = vmatmul.mubr.f32.gmra.mxu0 %v1260
        %v1395 = vpop.f32.mrf.mxu0
        %v1396 = vadd.f32 %v1297, %v1395
        %v1397 = vpop.f32.mrf.mxu0
        %1398 = vmatprep.mubr.f32.mxu0 0.0
        %1399 = vmatmul.mubr.f32.gmra.mxu0 %v1265
        %v1400 = vpop.f32.mrf.mxu0
        %v1401 = vadd.f32 %v1297, %v1400
        %v1402 = vpop.f32.mrf.mxu0
        %1403 = vdwg.mxu0
        %v1404 = vmax.f32 %v1366, 0.0
        %v1405 = vmax.f32 %v1371, 0.0
        %v1406 = vmax.f32 %v1376, 0.0
        %v1407 = vmax.f32 %v1381, 0.0
        %v1408 = vmax.f32 %v1386, 0.0
        %v1409 = vmax.f32 %v1391, 0.0
        %v1410 = vmax.f32 %v1396, 0.0
        %v1411 = vmax.f32 %v1401, 0.0
        %v1412 = vld [vmem:[#allocation13] sm:$0xff]
        %v1413 = vld [vmem:[#allocation13 + $0x8] sm:$0xff]
        %v1414 = vld [vmem:[#allocation13 + $0x10] sm:$0xff]
        %v1415 = vld [vmem:[#allocation13 + $0x18] sm:$0xff]
        %v1416 = vld [vmem:[#allocation13 + $0x20] sm:$0xff]
        %v1417 = vld [vmem:[#allocation13 + $0x28] sm:$0xff]
        %v1418 = vld [vmem:[#allocation13 + $0x30] sm:$0xff]
        %v1419 = vld [vmem:[#allocation13 + $0x38] sm:$0xff]
        %v1420 = vld [vmem:[#allocation13 + $0x40] sm:$0xff]
        %v1421 = vld [vmem:[#allocation13 + $0x48] sm:$0xff]
        %v1422 = vld [vmem:[#allocation13 + $0x50] sm:$0xff]
        %v1423 = vld [vmem:[#allocation13 + $0x58] sm:$0xff]
        %v1424 = vld [vmem:[#allocation13 + $0x60] sm:$0xff]
        %v1425 = vld [vmem:[#allocation13 + $0x68] sm:$0xff]
        %v1426 = vld [vmem:[#allocation13 + $0x70] sm:$0xff]
        %v1427 = vld [vmem:[#allocation13 + $0x78] sm:$0xff]
        %v1428 = vld [vmem:[%s12] sm:$0x1]
        %v1430 = vlaneseq
        %v1431 = vshrl.u32 %v1430, 7
        %v1432 = vsub.s32 0, %v1431
        %v1433 = vrot.slane %v1428, %v1432
        %1435 = vmatprep.subr.mxu0 0.0
        %1436 = vmatpush1.msra.mxu0 %v1427
        %1437 = vmatprep.subr.mxu0 0.0
        %1438 = vmatpush1.msra.mxu0 %v1426
        %1439 = vmatprep.subr.mxu0 0.0
        %1440 = vmatpush1.msra.mxu0 %v1425
        %1441 = vmatprep.subr.mxu0 0.0
        %1442 = vmatpush1.msra.mxu0 %v1424
        %1443 = vmatprep.subr.mxu0 0.0
        %1444 = vmatpush1.msra.mxu0 %v1423
        %1445 = vmatprep.subr.mxu0 0.0
        %1446 = vmatpush1.msra.mxu0 %v1422
        %1447 = vmatprep.subr.mxu0 0.0
        %1448 = vmatpush1.msra.mxu0 %v1421
        %1449 = vmatprep.subr.mxu0 0.0
        %1450 = vmatpush1.msra.mxu0 %v1420
        %1451 = vmatprep.subr.mxu0 0.0
        %1452 = vmatpush1.msra.mxu0 %v1419
        %1453 = vmatprep.subr.mxu0 0.0
        %1454 = vmatpush1.msra.mxu0 %v1418
        %1455 = vmatprep.subr.mxu0 0.0
        %1456 = vmatpush1.msra.mxu0 %v1417
        %1457 = vmatprep.subr.mxu0 0.0
        %1458 = vmatpush1.msra.mxu0 %v1416
        %1459 = vmatprep.subr.mxu0 0.0
        %1460 = vmatpush1.msra.mxu0 %v1415
        %1461 = vmatprep.subr.mxu0 0.0
        %1462 = vmatpush1.msra.mxu0 %v1414
        %1463 = vmatprep.subr.mxu0 0.0
        %1464 = vmatpush1.msra.mxu0 %v1413
        %1465 = vmatprep.subr.mxu0 0.0
        %1466 = vmatpush1.msra.mxu0 %v1412
        %1467 = vmatprep.subr.mxu0 0.0
        %1468 = vmatpush2.msra.mxu0 0.0
        %1469 = vmatprep.subr.mxu0 0.0
        %1470 = vmatpush2.msra.mxu0 0.0
        %1471 = vmatprep.subr.mxu0 0.0
        %1472 = vmatpush2.msra.mxu0 0.0
        %1473 = vmatprep.subr.mxu0 0.0
        %1474 = vmatpush2.msra.mxu0 0.0
        %1475 = vmatprep.subr.mxu0 0.0
        %1476 = vmatpush2.msra.mxu0 0.0
        %1477 = vmatprep.subr.mxu0 0.0
        %1478 = vmatpush2.msra.mxu0 0.0
        %1479 = vmatprep.subr.mxu0 0.0
        %1480 = vmatpush2.msra.mxu0 0.0
        %1481 = vmatprep.subr.mxu0 0.0
        %1482 = vmatpush2.msra.mxu0 0.0
        %1483 = vmatprep.subr.mxu0 0.0
        %1484 = vmatpush2.msra.mxu0 0.0
        %1485 = vmatprep.subr.mxu0 0.0
        %1486 = vmatpush2.msra.mxu0 0.0
        %1487 = vmatprep.subr.mxu0 0.0
        %1488 = vmatpush2.msra.mxu0 0.0
        %1489 = vmatprep.subr.mxu0 0.0
        %1490 = vmatpush2.msra.mxu0 0.0
        %1491 = vmatprep.subr.mxu0 0.0
        %1492 = vmatpush2.msra.mxu0 0.0
        %1493 = vmatprep.subr.mxu0 0.0
        %1494 = vmatpush2.msra.mxu0 0.0
        %1495 = vmatprep.subr.mxu0 0.0
        %1496 = vmatpush2.msra.mxu0 0.0
        %1497 = vmatprep.subr.mxu0 0.0
        %1498 = vmatpush2.msra.mxu0 0.0
        %1499 = vmatprep.mubr.f32.mxu0 0.0
        %1500 = vmatmul.mubr.f32.gmra.mxu0 %v1404
        %v1501 = vpop.f32.mrf.mxu0
        %v1502 = vadd.f32 %v1433, %v1501
        %v1503 = vpop.f32.mrf.mxu0
        %1504 = vmatprep.mubr.f32.mxu0 0.0
        %1505 = vmatmul.mubr.f32.gmra.mxu0 %v1405
        %v1506 = vpop.f32.mrf.mxu0
        %v1507 = vadd.f32 %v1433, %v1506
        %v1508 = vpop.f32.mrf.mxu0
        %1509 = vmatprep.mubr.f32.mxu0 0.0
        %1510 = vmatmul.mubr.f32.gmra.mxu0 %v1406
        %v1511 = vpop.f32.mrf.mxu0
        %v1512 = vadd.f32 %v1433, %v1511
        %v1513 = vpop.f32.mrf.mxu0
        %1514 = vmatprep.mubr.f32.mxu0 0.0
        %1515 = vmatmul.mubr.f32.gmra.mxu0 %v1407
        %v1516 = vpop.f32.mrf.mxu0
        %v1517 = vadd.f32 %v1433, %v1516
        %v1518 = vpop.f32.mrf.mxu0
        %1519 = vmatprep.mubr.f32.mxu0 0.0
        %1520 = vmatmul.mubr.f32.gmra.mxu0 %v1408
        %v1521 = vpop.f32.mrf.mxu0
        %v1522 = vadd.f32 %v1433, %v1521
        %v1523 = vpop.f32.mrf.mxu0
        %1524 = vmatprep.mubr.f32.mxu0 0.0
        %1525 = vmatmul.mubr.f32.gmra.mxu0 %v1409
        %v1526 = vpop.f32.mrf.mxu0
        %v1527 = vadd.f32 %v1433, %v1526
        %v1528 = vpop.f32.mrf.mxu0
        %1529 = vmatprep.mubr.f32.mxu0 0.0
        %1530 = vmatmul.mubr.f32.gmra.mxu0 %v1410
        %v1531 = vpop.f32.mrf.mxu0
        %v1532 = vadd.f32 %v1433, %v1531
        %v1533 = vpop.f32.mrf.mxu0
        %1534 = vmatprep.mubr.f32.mxu0 0.0
        %1535 = vmatmul.mubr.f32.gmra.mxu0 %v1411
        %v1536 = vpop.f32.mrf.mxu0
        %v1537 = vadd.f32 %v1433, %v1536
        %v1538 = vpop.f32.mrf.mxu0
        %1539 = vdwg.mxu0
        %v1540 = vmax.f32 %v1502, 0.0
        %v1541 = vmax.f32 %v1507, 0.0
        %v1542 = vmax.f32 %v1512, 0.0
        %v1543 = vmax.f32 %v1517, 0.0
        %v1544 = vmax.f32 %v1522, 0.0
        %v1545 = vmax.f32 %v1527, 0.0
        %v1546 = vmax.f32 %v1532, 0.0
        %v1547 = vmax.f32 %v1537, 0.0
        %v1548 = vld [vmem:[#allocation14] sm:$0xff]
        %v1549 = vld [vmem:[#allocation14 + $0x8] sm:$0xff]
        %v1550 = vld [vmem:[#allocation14 + $0x10] sm:$0xff]
        %v1551 = vld [vmem:[#allocation14 + $0x18] sm:$0xff]
        %v1552 = vld [vmem:[#allocation14 + $0x20] sm:$0xff]
        %v1553 = vld [vmem:[#allocation14 + $0x28] sm:$0xff]
        %v1554 = vld [vmem:[#allocation14 + $0x30] sm:$0xff]
        %v1555 = vld [vmem:[#allocation14 + $0x38] sm:$0xff]
        %v1556 = vld [vmem:[#allocation14 + $0x40] sm:$0xff]
        %v1557 = vld [vmem:[#allocation14 + $0x48] sm:$0xff]
        %v1558 = vld [vmem:[#allocation14 + $0x50] sm:$0xff]
        %v1559 = vld [vmem:[#allocation14 + $0x58] sm:$0xff]
        %v1560 = vld [vmem:[#allocation14 + $0x60] sm:$0xff]
        %v1561 = vld [vmem:[#allocation14 + $0x68] sm:$0xff]
        %v1562 = vld [vmem:[#allocation14 + $0x70] sm:$0xff]
        %v1563 = vld [vmem:[#allocation14 + $0x78] sm:$0xff]
        %v1564 = vld [vmem:[%s14] sm:$0x1]
        %v1566 = vlaneseq
        %v1567 = vshrl.u32 %v1566, 7
        %v1568 = vsub.s32 0, %v1567
        %v1569 = vrot.slane %v1564, %v1568
        %1571 = vmatprep.subr.mxu0 0.0
        %1572 = vmatpush1.msra.mxu0 %v1563
        %1573 = vmatprep.subr.mxu0 0.0
        %1574 = vmatpush1.msra.mxu0 %v1562
        %1575 = vmatprep.subr.mxu0 0.0
        %1576 = vmatpush1.msra.mxu0 %v1561
        %1577 = vmatprep.subr.mxu0 0.0
        %1578 = vmatpush1.msra.mxu0 %v1560
        %1579 = vmatprep.subr.mxu0 0.0
        %1580 = vmatpush1.msra.mxu0 %v1559
        %1581 = vmatprep.subr.mxu0 0.0
        %1582 = vmatpush1.msra.mxu0 %v1558
        %1583 = vmatprep.subr.mxu0 0.0
        %1584 = vmatpush1.msra.mxu0 %v1557
        %1585 = vmatprep.subr.mxu0 0.0
        %1586 = vmatpush1.msra.mxu0 %v1556
        %1587 = vmatprep.subr.mxu0 0.0
        %1588 = vmatpush1.msra.mxu0 %v1555
        %1589 = vmatprep.subr.mxu0 0.0
        %1590 = vmatpush1.msra.mxu0 %v1554
        %1591 = vmatprep.subr.mxu0 0.0
        %1592 = vmatpush1.msra.mxu0 %v1553
        %1593 = vmatprep.subr.mxu0 0.0
        %1594 = vmatpush1.msra.mxu0 %v1552
        %1595 = vmatprep.subr.mxu0 0.0
        %1596 = vmatpush1.msra.mxu0 %v1551
        %1597 = vmatprep.subr.mxu0 0.0
        %1598 = vmatpush1.msra.mxu0 %v1550
        %1599 = vmatprep.subr.mxu0 0.0
        %1600 = vmatpush1.msra.mxu0 %v1549
        %1601 = vmatprep.subr.mxu0 0.0
        %1602 = vmatpush1.msra.mxu0 %v1548
        %1603 = vmatprep.subr.mxu0 0.0
        %1604 = vmatpush2.msra.mxu0 0.0
        %1605 = vmatprep.subr.mxu0 0.0
        %1606 = vmatpush2.msra.mxu0 0.0
        %1607 = vmatprep.subr.mxu0 0.0
        %1608 = vmatpush2.msra.mxu0 0.0
        %1609 = vmatprep.subr.mxu0 0.0
        %1610 = vmatpush2.msra.mxu0 0.0
        %1611 = vmatprep.subr.mxu0 0.0
        %1612 = vmatpush2.msra.mxu0 0.0
        %1613 = vmatprep.subr.mxu0 0.0
        %1614 = vmatpush2.msra.mxu0 0.0
        %1615 = vmatprep.subr.mxu0 0.0
        %1616 = vmatpush2.msra.mxu0 0.0
        %1617 = vmatprep.subr.mxu0 0.0
        %1618 = vmatpush2.msra.mxu0 0.0
        %1619 = vmatprep.subr.mxu0 0.0
        %1620 = vmatpush2.msra.mxu0 0.0
        %1621 = vmatprep.subr.mxu0 0.0
        %1622 = vmatpush2.msra.mxu0 0.0
        %1623 = vmatprep.subr.mxu0 0.0
        %1624 = vmatpush2.msra.mxu0 0.0
        %1625 = vmatprep.subr.mxu0 0.0
        %1626 = vmatpush2.msra.mxu0 0.0
        %1627 = vmatprep.subr.mxu0 0.0
        %1628 = vmatpush2.msra.mxu0 0.0
        %1629 = vmatprep.subr.mxu0 0.0
        %1630 = vmatpush2.msra.mxu0 0.0
        %1631 = vmatprep.subr.mxu0 0.0
        %1632 = vmatpush2.msra.mxu0 0.0
        %1633 = vmatprep.subr.mxu0 0.0
        %1634 = vmatpush2.msra.mxu0 0.0
        %1635 = vmatprep.mubr.f32.mxu0 0.0
        %1636 = vmatmul.mubr.f32.gmra.mxu0 %v1540
        %v1637 = vpop.f32.mrf.mxu0
        %v1638 = vadd.f32 %v1569, %v1637
        %v1639 = vpop.f32.mrf.mxu0
        %1640 = vmatprep.mubr.f32.mxu0 0.0
        %1641 = vmatmul.mubr.f32.gmra.mxu0 %v1541
        %v1642 = vpop.f32.mrf.mxu0
        %v1643 = vadd.f32 %v1569, %v1642
        %v1644 = vpop.f32.mrf.mxu0
        %1645 = vmatprep.mubr.f32.mxu0 0.0
        %1646 = vmatmul.mubr.f32.gmra.mxu0 %v1542
        %v1647 = vpop.f32.mrf.mxu0
        %v1648 = vadd.f32 %v1569, %v1647
        %v1649 = vpop.f32.mrf.mxu0
        %1650 = vmatprep.mubr.f32.mxu0 0.0
        %1651 = vmatmul.mubr.f32.gmra.mxu0 %v1543
        %v1652 = vpop.f32.mrf.mxu0
        %v1653 = vadd.f32 %v1569, %v1652
        %v1654 = vpop.f32.mrf.mxu0
        %1655 = vmatprep.mubr.f32.mxu0 0.0
        %1656 = vmatmul.mubr.f32.gmra.mxu0 %v1544
        %v1657 = vpop.f32.mrf.mxu0
        %v1658 = vadd.f32 %v1569, %v1657
        %v1659 = vpop.f32.mrf.mxu0
        %1660 = vmatprep.mubr.f32.mxu0 0.0
        %1661 = vmatmul.mubr.f32.gmra.mxu0 %v1545
        %v1662 = vpop.f32.mrf.mxu0
        %v1663 = vadd.f32 %v1569, %v1662
        %v1664 = vpop.f32.mrf.mxu0
        %1665 = vmatprep.mubr.f32.mxu0 0.0
        %1666 = vmatmul.mubr.f32.gmra.mxu0 %v1546
        %v1667 = vpop.f32.mrf.mxu0
        %v1668 = vadd.f32 %v1569, %v1667
        %v1669 = vpop.f32.mrf.mxu0
        %1670 = vmatprep.mubr.f32.mxu0 0.0
        %1671 = vmatmul.mubr.f32.gmra.mxu0 %v1547
        %v1672 = vpop.f32.mrf.mxu0
        %v1673 = vadd.f32 %v1569, %v1672
        %v1674 = vpop.f32.mrf.mxu0
        %1675 = vdwg.mxu0
        %v1676 = vmax.f32 %v1638, 0.0
        %v1677 = vmax.f32 %v1643, 0.0
        %v1678 = vmax.f32 %v1648, 0.0
        %v1679 = vmax.f32 %v1653, 0.0
        %v1680 = vmax.f32 %v1658, 0.0
        %v1681 = vmax.f32 %v1663, 0.0
        %v1682 = vmax.f32 %v1668, 0.0
        %v1683 = vmax.f32 %v1673, 0.0
        %v1684 = vld [vmem:[#allocation16] sm:$0xff]
        %v1685 = vld [vmem:[#allocation16 + $0x8] sm:$0xff]
        %v1686 = vld [vmem:[#allocation16 + $0x10] sm:$0xff]
        %v1687 = vld [vmem:[#allocation16 + $0x18] sm:$0xff]
        %v1688 = vld [vmem:[#allocation16 + $0x20] sm:$0xff]
        %v1689 = vld [vmem:[#allocation16 + $0x28] sm:$0xff]
        %v1690 = vld [vmem:[#allocation16 + $0x30] sm:$0xff]
        %v1691 = vld [vmem:[#allocation16 + $0x38] sm:$0xff]
        %v1692 = vld [vmem:[#allocation16 + $0x40] sm:$0xff]
        %v1693 = vld [vmem:[#allocation16 + $0x48] sm:$0xff]
        %v1694 = vld [vmem:[#allocation16 + $0x50] sm:$0xff]
        %v1695 = vld [vmem:[#allocation16 + $0x58] sm:$0xff]
        %v1696 = vld [vmem:[#allocation16 + $0x60] sm:$0xff]
        %v1697 = vld [vmem:[#allocation16 + $0x68] sm:$0xff]
        %v1698 = vld [vmem:[#allocation16 + $0x70] sm:$0xff]
        %v1699 = vld [vmem:[#allocation16 + $0x78] sm:$0xff]
        %v1700 = vld [vmem:[%s16] sm:$0x1]
        %v1702 = vlaneseq
        %v1703 = vshrl.u32 %v1702, 7
        %v1704 = vsub.s32 0, %v1703
        %v1705 = vrot.slane %v1700, %v1704
        %1707 = vmatprep.subr.mxu0 0.0
        %1708 = vmatpush1.msra.mxu0 %v1699
        %1709 = vmatprep.subr.mxu0 0.0
        %1710 = vmatpush1.msra.mxu0 %v1698
        %1711 = vmatprep.subr.mxu0 0.0
        %1712 = vmatpush1.msra.mxu0 %v1697
        %1713 = vmatprep.subr.mxu0 0.0
        %1714 = vmatpush1.msra.mxu0 %v1696
        %1715 = vmatprep.subr.mxu0 0.0
        %1716 = vmatpush1.msra.mxu0 %v1695
        %1717 = vmatprep.subr.mxu0 0.0
        %1718 = vmatpush1.msra.mxu0 %v1694
        %1719 = vmatprep.subr.mxu0 0.0
        %1720 = vmatpush1.msra.mxu0 %v1693
        %1721 = vmatprep.subr.mxu0 0.0
        %1722 = vmatpush1.msra.mxu0 %v1692
        %1723 = vmatprep.subr.mxu0 0.0
        %1724 = vmatpush1.msra.mxu0 %v1691
        %1725 = vmatprep.subr.mxu0 0.0
        %1726 = vmatpush1.msra.mxu0 %v1690
        %1727 = vmatprep.subr.mxu0 0.0
        %1728 = vmatpush1.msra.mxu0 %v1689
        %1729 = vmatprep.subr.mxu0 0.0
        %1730 = vmatpush1.msra.mxu0 %v1688
        %1731 = vmatprep.subr.mxu0 0.0
        %1732 = vmatpush1.msra.mxu0 %v1687
        %1733 = vmatprep.subr.mxu0 0.0
        %1734 = vmatpush1.msra.mxu0 %v1686
        %1735 = vmatprep.subr.mxu0 0.0
        %1736 = vmatpush1.msra.mxu0 %v1685
        %1737 = vmatprep.subr.mxu0 0.0
        %1738 = vmatpush1.msra.mxu0 %v1684
        %1739 = vmatprep.subr.mxu0 0.0
        %1740 = vmatpush2.msra.mxu0 0.0
        %1741 = vmatprep.subr.mxu0 0.0
        %1742 = vmatpush2.msra.mxu0 0.0
        %1743 = vmatprep.subr.mxu0 0.0
        %1744 = vmatpush2.msra.mxu0 0.0
        %1745 = vmatprep.subr.mxu0 0.0
        %1746 = vmatpush2.msra.mxu0 0.0
        %1747 = vmatprep.subr.mxu0 0.0
        %1748 = vmatpush2.msra.mxu0 0.0
        %1749 = vmatprep.subr.mxu0 0.0
        %1750 = vmatpush2.msra.mxu0 0.0
        %1751 = vmatprep.subr.mxu0 0.0
        %1752 = vmatpush2.msra.mxu0 0.0
        %1753 = vmatprep.subr.mxu0 0.0
        %1754 = vmatpush2.msra.mxu0 0.0
        %1755 = vmatprep.subr.mxu0 0.0
        %1756 = vmatpush2.msra.mxu0 0.0
        %1757 = vmatprep.subr.mxu0 0.0
        %1758 = vmatpush2.msra.mxu0 0.0
        %1759 = vmatprep.subr.mxu0 0.0
        %1760 = vmatpush2.msra.mxu0 0.0
        %1761 = vmatprep.subr.mxu0 0.0
        %1762 = vmatpush2.msra.mxu0 0.0
        %1763 = vmatprep.subr.mxu0 0.0
        %1764 = vmatpush2.msra.mxu0 0.0
        %1765 = vmatprep.subr.mxu0 0.0
        %1766 = vmatpush2.msra.mxu0 0.0
        %1767 = vmatprep.subr.mxu0 0.0
        %1768 = vmatpush2.msra.mxu0 0.0
        %1769 = vmatprep.subr.mxu0 0.0
        %1770 = vmatpush2.msra.mxu0 0.0
        %1771 = vmatprep.mubr.f32.mxu0 0.0
        %1772 = vmatmul.mubr.f32.gmra.mxu0 %v1676
        %v1773 = vpop.f32.mrf.mxu0
        %v1774 = vadd.f32 %v1705, %v1773
        %v1775 = vpop.f32.mrf.mxu0
        %1776 = vmatprep.mubr.f32.mxu0 0.0
        %1777 = vmatmul.mubr.f32.gmra.mxu0 %v1677
        %v1778 = vpop.f32.mrf.mxu0
        %v1779 = vadd.f32 %v1705, %v1778
        %v1780 = vpop.f32.mrf.mxu0
        %1781 = vmatprep.mubr.f32.mxu0 0.0
        %1782 = vmatmul.mubr.f32.gmra.mxu0 %v1678
        %v1783 = vpop.f32.mrf.mxu0
        %v1784 = vadd.f32 %v1705, %v1783
        %v1785 = vpop.f32.mrf.mxu0
        %1786 = vmatprep.mubr.f32.mxu0 0.0
        %1787 = vmatmul.mubr.f32.gmra.mxu0 %v1679
        %v1788 = vpop.f32.mrf.mxu0
        %v1789 = vadd.f32 %v1705, %v1788
        %v1790 = vpop.f32.mrf.mxu0
        %1791 = vmatprep.mubr.f32.mxu0 0.0
        %1792 = vmatmul.mubr.f32.gmra.mxu0 %v1680
        %v1793 = vpop.f32.mrf.mxu0
        %v1794 = vadd.f32 %v1705, %v1793
        %v1795 = vpop.f32.mrf.mxu0
        %1796 = vmatprep.mubr.f32.mxu0 0.0
        %1797 = vmatmul.mubr.f32.gmra.mxu0 %v1681
        %v1798 = vpop.f32.mrf.mxu0
        %v1799 = vadd.f32 %v1705, %v1798
        %v1800 = vpop.f32.mrf.mxu0
        %1801 = vmatprep.mubr.f32.mxu0 0.0
        %1802 = vmatmul.mubr.f32.gmra.mxu0 %v1682
        %v1803 = vpop.f32.mrf.mxu0
        %v1804 = vadd.f32 %v1705, %v1803
        %v1805 = vpop.f32.mrf.mxu0
        %1806 = vmatprep.mubr.f32.mxu0 0.0
        %1807 = vmatmul.mubr.f32.gmra.mxu0 %v1683
        %v1808 = vpop.f32.mrf.mxu0
        %v1809 = vadd.f32 %v1705, %v1808
        %v1810 = vpop.f32.mrf.mxu0
        %1811 = vdwg.mxu0
        %1812 = vst [vmem:[%s720] sm:$0xff] %v1774
        %1813 = vst [vmem:[%s720 + $0x8] sm:$0xff] %v1779
        %1814 = vst [vmem:[%s720 + $0x10] sm:$0xff] %v1784
        %1815 = vst [vmem:[%s720 + $0x18] sm:$0xff] %v1789
        %1816 = vst [vmem:[%s720 + $0x20] sm:$0xff] %v1794
        %1817 = vst [vmem:[%s720 + $0x28] sm:$0xff] %v1799
        %1818 = vst [vmem:[%s720 + $0x30] sm:$0xff] %v1804
        %1819 = vst [vmem:[%s720 + $0x38] sm:$0xff] %v1809
        %s1820 = sand.u32 %s413, 1
        %s1821 = scalar_lea.sflag [#allocation4], %s1820
        %s1822 = sand.u32 %s413, 1
        %s1823 = smul.addr %s1822, 64
        %s1824 = scalar_lea.vmem [#allocation17], %s1823
        %s1825 = sand.u32 %s439, 1
        %s1826 = scalar_lea.sflag [#allocation19], %s1825
        %s1827 = sand.u32 %s439, 1
        %s1828 = smul.addr %s1827, 64
        %s1829 = scalar_lea.vmem [#allocation18], %s1828
        // Predicated region
        $region125: #{tpu_custom_call.1} parent=87 // pred_check
          %p1830 = pneg %p423
        $region126: #{tpu_custom_call.1} parent=87 // pred_check_branch
          %1832 = sbr.rel (%p1830) target = $region128
        $region127: #{tpu_custom_call.1} parent=87 // pred_region
          %s1833 = smul.u32 8, %s43
          %s1835 = ssub.s32 1024, 1024
          %1836 = vsyncadd %s1821, %s1835
          %s1837 = smul.addr %s1833, 128
          %s1838 = scalar_lea.hbm %s17, %s1837
          %s1839 = sshll.u32 %s1824, 4
          %s1840 = int_to_ptr.vmem [resolvable:$true] %s1839
          %1845 = dma.vmem_to_hbm [thread:$0]  %s1840, 1024, %s1838, %s1821, 128, 128, 8
        $region128: #{tpu_custom_call.1} parent=87 // pred_fallthru
          _
        // Predicated region
        $region129: #{tpu_custom_call.1} parent=87 // pred_check
          %p1846 = pneg %p449
        $region130: #{tpu_custom_call.1} parent=87 // pred_check_branch
          %1848 = sbr.rel (%p1846) target = $region132
        $region131: #{tpu_custom_call.1} parent=87 // pred_region
          %s1849 = smul.u32 8, %s43
          %s1851 = ssub.s32 1024, 1024
          %1852 = vsyncadd %s1826, %s1851
          %s1853 = smul.addr %s1849, 128
          %s1854 = scalar_lea.hbm %s18, %s1853
          %s1855 = sshll.u32 %s1829, 4
          %s1856 = int_to_ptr.vmem [resolvable:$true] %s1855
          %1861 = dma.vmem_to_hbm [thread:$0]  %s1856, 1024, %s1854, %s1826, 128, 128, 8
        $region132: #{tpu_custom_call.1} parent=87 // pred_fallthru
          _
      $region88: #{tpu_custom_call.1} parent=5 // pred_fallthru
        _
      %p1862 = scmp.le.s32.totalorder 2, %s38
      // Predicated region
      $region133: #{tpu_custom_call.1} parent=5 // pred_check
        %p1863 = pneg %p1862
      $region134: #{tpu_custom_call.1} parent=5 // pred_check_branch
        %1865 = sbr.rel (%p1863) target = $region136
      $region135: #{tpu_custom_call.1} parent=5 // pred_region
        %s1866 = ssub.s32 %s38, 2
        // Predicated region
        $region137: #{tpu_custom_call.1} parent=135 // pred_check
          %p1867 = pneg %p429
        $region138: #{tpu_custom_call.1} parent=135 // pred_check_branch
          %1869 = sbr.rel (%p1867) target = $region140
        $region139: #{tpu_custom_call.1} parent=135 // pred_region
          %s1870 = sand.u32 %s414, 1
          %s1871 = scalar_lea.sflag [#allocation4], %s1870
          %s1872 = sand.u32 %s414, 1
          %s1873 = smul.addr %s1872, 64
          %s1874 = scalar_lea.vmem [#allocation17], %s1873
          %1875 = dma.done %s1871, 1024
        $region140: #{tpu_custom_call.1} parent=135 // pred_fallthru
          _
        // Predicated region
        $region141: #{tpu_custom_call.1} parent=135 // pred_check
          %p1876 = pneg %p455
        $region142: #{tpu_custom_call.1} parent=135 // pred_check_branch
          %1878 = sbr.rel (%p1876) target = $region144
        $region143: #{tpu_custom_call.1} parent=135 // pred_region
          %s1879 = sand.u32 %s440, 1
          %s1880 = scalar_lea.sflag [#allocation19], %s1879
          %s1881 = sand.u32 %s440, 1
          %s1882 = smul.addr %s1881, 64
          %s1883 = scalar_lea.vmem [#allocation18], %s1882
          %1884 = dma.done %s1880, 1024
        $region144: #{tpu_custom_call.1} parent=135 // pred_fallthru
          _
      $region136: #{tpu_custom_call.1} parent=5 // pred_fallthru
        _
    $region6: #{tpu_custom_call.1} parent=1 // loop_footer
      %s42 = sadd.s32 1, %s38
    $region7: #{tpu_custom_call.1} parent=1 // loop_footer_branch
      %37 = sbr.rel target = $region3
    $region8: #{tpu_custom_call.1} parent=1 // loop_exit
      _
    %1885 = vsyncpa [#allocation3], 1
    %s1886 = scalar_lea.sflag [#allocation3], 1
    %1887 = vsyncpa %s1886, 1
    %1888 = vsyncpa [#allocation6], 1
    %1889 = vsyncpa [#allocation9], 1
    %1890 = vsyncpa [#allocation12], 1
    %1891 = vsyncpa [#allocation15], 1
    %1892 = vsyncpa [#allocation4], 1
    %s1893 = scalar_lea.sflag [#allocation4], 1
    %1894 = vsyncpa %s1893, 1
    %1895 = vsyncpa [#allocation19], 1
    %s1896 = scalar_lea.sflag [#allocation19], 1
    %1897 = vsyncpa %s1896, 1

</llo_original>
